<compile_context>
chip_gen: v5e
topology: v5e:2x2
jax: 0.10.0
libtpu: 0.0.40
codegen_flags: <defaults>
</compile_context>

<pallas_src>
import jax
import jax.numpy as jnp
from jax.experimental import pallas as pl
from jax.experimental.pallas import tpu as pltpu


# --------------------------- in-kernel building blocks --------------------- #

def _conv_rows(src_ref, dst_ref, w_ref, b_ref, *, kh, kw, ho, wo,
               relu, pad_dst=False, res_ref=None):
    """Stride-1 'valid' conv over src_ref (Hs, Ws, Cin), one output row at a time.

    w_ref: (kh*kw, Cin, Cout) per-tap matrices, b_ref: (1, Cout).
    If pad_dst:  rows are written to dst_ref[1+r, 1:wo+1, :] (zero border kept,
                 i.e. dst_ref becomes the padding=1 input of the next conv).
    If res_ref:  res_ref is a padded buffer; res_ref[1+r, 1:wo+1, :] is added
                 before the final ReLU (residual connection).
    """
    cin = w_ref.shape[1]
    cout = w_ref.shape[2]
    bias = b_ref[...]                                        # (1, cout)

    def row_body(r, carry):
        acc = jnp.zeros((wo, cout), jnp.float32) + bias      # fused bias
        for i in range(kh):
            row = src_ref[r + i]                             # (Ws, cin)
            for j in range(kw):
                tap = row[j:j + wo, :]                       # (wo, cin)
                w_tap = w_ref[i * kw + j]                    # (cin, cout)
                if cin == 1:
                    acc = acc + tap * w_tap                  # VPU outer product
                else:
                    acc = acc + jnp.dot(tap, w_tap,
                                        preferred_element_type=jnp.float32)
        if res_ref is not None:
            acc = acc + res_ref[r + 1, 1:wo + 1, :]          # residual add
        if relu:
            acc = jnp.maximum(acc, 0.0)
        if pad_dst:
            dst_ref[r + 1, 1:wo + 1, :] = acc
        else:
            dst_ref[r] = acc
        return carry

    jax.lax.fori_loop(0, ho, row_body, 0)


def _maxpool2x2_relu_rows(src_ref, dst_ref, *, h, w):
    """2x2/2 max-pool + ReLU of src_ref (h, w, C), written into the interior
    dst_ref[1+r, 1:w//2+1, :] of a (pre-zeroed) padded buffer."""
    half = w // 2
    pooled_idx = jax.lax.broadcasted_iota(jnp.int32, (half, w), 0)
    col_idx = jax.lax.broadcasted_iota(jnp.int32, (half, w), 1)
    sel_even = (col_idx == 2 * pooled_idx).astype(jnp.float32)       # (half, w)
    sel_odd = (col_idx == 2 * pooled_idx + 1).astype(jnp.float32)    # (half, w)

    def row_body(r, carry):
        v = jnp.maximum(src_ref[2 * r], src_ref[2 * r + 1])          # (w, C)
        pooled = jnp.maximum(
            jnp.dot(sel_even, v, preferred_element_type=jnp.float32),
            jnp.dot(sel_odd, v, preferred_element_type=jnp.float32))  # (half, C)
        dst_ref[r + 1, 1:half + 1, :] = jnp.maximum(pooled, 0.0)
        return carry

    jax.lax.fori_loop(0, h // 2, row_body, 0)


# --------------------------------- the kernel ------------------------------ #

def _net_kernel(x_ref,
                c1w_ref, c1b_ref,
                r1aw_ref, r1ab_ref, r1bw_ref, r1bb_ref,
                c2w_ref, c2b_ref,
                r2aw_ref, r2ab_ref, r2bw_ref, r2bb_ref,
                fcw_ref, fcb_ref,
                out_ref,
                c1_s, p1_s, r1_s, r1o_s, c2_s, p2_s, r2_s, r2o_s):
    # Zero the padded scratch buffers (their borders implement padding=1).
    p1_s[...] = jnp.zeros(p1_s.shape, jnp.float32)
    r1_s[...] = jnp.zeros(r1_s.shape, jnp.float32)
    p2_s[...] = jnp.zeros(p2_s.shape, jnp.float32)
    r2_s[...] = jnp.zeros(r2_s.shape, jnp.float32)

    # Conv1 (1->16, 5x5, valid): 28x28 -> 24x24
    _conv_rows(x_ref, c1_s, c1w_ref, c1b_ref, kh=5, kw=5, ho=24, wo=24,
               relu=False)
    # MaxPool 2x2 + ReLU: 24 -> 12 (written into padded 14x14 buffer)
    _maxpool2x2_relu_rows(c1_s, p1_s, h=24, w=24)

    # ResidualBlock(16) @ 12x12: relu(conv1), conv2 + x, relu
    _conv_rows(p1_s, r1_s, r1aw_ref, r1ab_ref, kh=3, kw=3, ho=12, wo=12,
               relu=True, pad_dst=True)
    _conv_rows(r1_s, r1o_s, r1bw_ref, r1bb_ref, kh=3, kw=3, ho=12, wo=12,
               relu=True, res_ref=p1_s)

    # Conv2 (16->32, 5x5, valid): 12x12 -> 8x8
    _conv_rows(r1o_s, c2_s, c2w_ref, c2b_ref, kh=5, kw=5, ho=8, wo=8,
               relu=False)
    # MaxPool 2x2 + ReLU: 8 -> 4 (written into padded 6x6 buffer)
    _maxpool2x2_relu_rows(c2_s, p2_s, h=8, w=8)

    # ResidualBlock(32) @ 4x4
    _conv_rows(p2_s, r2_s, r2aw_ref, r2ab_ref, kh=3, kw=3, ho=4, wo=4,
               relu=True, pad_dst=True)
    _conv_rows(r2_s, r2o_s, r2bw_ref, r2bb_ref, kh=3, kw=3, ho=4, wo=4,
               relu=True, res_ref=p2_s)

    # Flatten (PyTorch NCHW order is folded into the pre-permuted FC weight)
    # + Linear(512 -> 10).
    acc = jnp.zeros((1, 10), jnp.float32) + fcb_ref[...]
    for h in range(4):
        row = r2o_s[h]                                       # (4, 32)
        for w in range(4):
            acc = acc + jnp.dot(row[w:w + 1, :], fcw_ref[h * 4 + w],
                                preferred_element_type=jnp.float32)
    out_ref[...] = acc


# ------------------------------ host-side wrapper --------------------------- #

def _conv_w_to_kernel(w):
    """PyTorch (Cout, Cin, KH, KW) -> per-tap (KH*KW, Cin, Cout)."""
    cout, cin, kh, kw = w.shape
    return jnp.transpose(w, (2, 3, 1, 0)).reshape(kh * kw, cin, cout)


def prepare_params(params):
    """Convert PyTorch-layout parameters to the layouts the kernel consumes
    (done once; removes all per-forward weight transposes)."""
    # fc_w: (10, 512) with input index k = c*16 + h*4 + w  (NCHW flatten).
    # Kernel consumes fcw[h*4 + w, c, o] so the NHWC activation needs no transpose.
    fc_k = jnp.transpose(params["fc_w"].reshape(10, 32, 4, 4),
                         (2, 3, 1, 0)).reshape(16, 32, 10)
    return {
        "c1w": _conv_w_to_kernel(params["conv1_w"]),
        "c1b": params["conv1_b"].reshape(1, -1),
        "r1aw": _conv_w_to_kernel(params["rb1_c1_w"]),
        "r1ab": params["rb1_c1_b"].reshape(1, -1),
        "r1bw": _conv_w_to_kernel(params["rb1_c2_w"]),
        "r1bb": params["rb1_c2_b"].reshape(1, -1),
        "c2w": _conv_w_to_kernel(params["conv2_w"]),
        "c2b": params["conv2_b"].reshape(1, -1),
        "r2aw": _conv_w_to_kernel(params["rb2_c1_w"]),
        "r2ab": params["rb2_c1_b"].reshape(1, -1),
        "r2bw": _conv_w_to_kernel(params["rb2_c2_w"]),
        "r2bb": params["rb2_c2_b"].reshape(1, -1),
        "fcw": fc_k,
        "fcb": params["fc_b"].reshape(1, -1),
    }


_WEIGHT_ORDER = ("c1w", "c1b", "r1aw", "r1ab", "r1bw", "r1bb",
                 "c2w", "c2b", "r2aw", "r2ab", "r2bw", "r2bb", "fcw", "fcb")


def _const_index_map(ndim):
    return lambda b: (0,) * ndim


@jax.jit
def net_forward(kparams, x_nchw):
    n = x_nchw.shape[0]
    # NCHW -> NHWC; with C=1 this is a pure reshape (no data movement).
    x = jnp.transpose(x_nchw.astype(jnp.float32), (0, 2, 3, 1))

    weights = [kparams[k] for k in _WEIGHT_ORDER]
    in_specs = [pl.BlockSpec((None, 28, 28, 1), lambda b: (b, 0, 0, 0))]
    in_specs += [pl.BlockSpec(w.shape, _const_index_map(w.ndim)) for w in weights]

    out = pl.pallas_call(
        _net_kernel,
        grid=(n,),
        in_specs=in_specs,
        out_specs=pl.BlockSpec((None, 1, 10), lambda b: (b, 0, 0)),
        out_shape=jax.ShapeDtypeStruct((n, 1, 10), jnp.float32),
        scratch_shapes=[
            pltpu.VMEM((24, 24, 16), jnp.float32),   # conv1 output
            pltpu.VMEM((14, 14, 16), jnp.float32),   # pool1 output (padded)
            pltpu.VMEM((14, 14, 16), jnp.float32),   # rb1 conv1 output (padded)
            pltpu.VMEM((12, 12, 16), jnp.float32),   # rb1 output
            pltpu.VMEM((8, 8, 32), jnp.float32),     # conv2 output
            pltpu.VMEM((6, 6, 32), jnp.float32),     # pool2 output (padded)
            pltpu.VMEM((6, 6, 32), jnp.float32),     # rb2 conv1 output (padded)
            pltpu.VMEM((4, 4, 32), jnp.float32),     # rb2 output
        ],
        compiler_params=pltpu.CompilerParams(
            dimension_semantics=("parallel",),
            vmem_limit_bytes=32 * 1024 * 1024,
        ),
    )(x, *weights)
    return out.reshape(n, 10)


# ------------------------------ parameter init ------------------------------ #

def init_params(key):
    keys = jax.random.split(key, 14)

    def uniform(k, shape, fan_in):
        bound = 1.0 / (fan_in ** 0.5)
        return jax.random.uniform(k, shape, jnp.float32, -bound, bound)

    def conv(kw_, kb_, cout, cin, ksz):
        fan_in = cin * ksz * ksz
        return (uniform(kw_, (cout, cin, ksz, ksz), fan_in),
                uniform(kb_, (cout,), fan_in))

    p = {}
    p["conv1_w"], p["conv1_b"] = conv(keys[0], keys[1], 16, 1, 5)
    p["conv2_w"], p["conv2_b"] = conv(keys[2], keys[3], 32, 16, 5)
    p["rb1_c1_w"], p["rb1_c1_b"] = conv(keys[4], keys[5], 16, 16, 3)
    p["rb1_c2_w"], p["rb1_c2_b"] = conv(keys[6], keys[7], 16, 16, 3)
    p["rb2_c1_w"], p["rb2_c1_b"] = conv(keys[8], keys[9], 32, 32, 3)
    p["rb2_c2_w"], p["rb2_c2_b"] = conv(keys[10], keys[11], 32, 32, 3)
    p["fc_w"] = uniform(keys[12], (10, 512), 512)   # PyTorch Linear: (out, in)
    p["fc_b"] = uniform(keys[13], (10,), 512)
    return p


if __name__ == "__main__":
    key = jax.random.PRNGKey(0)
    pkey, xkey = jax.random.split(key)
    params = init_params(pkey)
    kparams = prepare_params(params)        # one-time layout conversion
    # The Linear(512, 10) layer fixes the spatial size: input must be 1x28x28.
    x = jax.random.normal(xkey, (2, 1, 28, 28), dtype=jnp.float32)
    out = net_forward(kparams, x)
    out = jax.block_until_ready(out)
    assert out.shape == (2, 10), out.shape
    print("KERNEL_OK")
</pallas_src>

<mosaic_0001>
module attributes {stable_mosaic.version = 11 : i64} {
  func.func @_net_kernel(%arg0: i32, %arg1: memref<1x28x28x1xf32, #tpu.memory_space<vmem>>, %arg2: memref<25x1x16xf32, #tpu.memory_space<vmem>>, %arg3: memref<1x16xf32, #tpu.memory_space<vmem>>, %arg4: memref<9x16x16xf32, #tpu.memory_space<vmem>>, %arg5: memref<1x16xf32, #tpu.memory_space<vmem>>, %arg6: memref<9x16x16xf32, #tpu.memory_space<vmem>>, %arg7: memref<1x16xf32, #tpu.memory_space<vmem>>, %arg8: memref<25x16x32xf32, #tpu.memory_space<vmem>>, %arg9: memref<1x32xf32, #tpu.memory_space<vmem>>, %arg10: memref<9x32x32xf32, #tpu.memory_space<vmem>>, %arg11: memref<1x32xf32, #tpu.memory_space<vmem>>, %arg12: memref<9x32x32xf32, #tpu.memory_space<vmem>>, %arg13: memref<1x32xf32, #tpu.memory_space<vmem>>, %arg14: memref<16x32x10xf32, #tpu.memory_space<vmem>>, %arg15: memref<1x10xf32, #tpu.memory_space<vmem>>, %arg16: memref<1x1x10xf32, #tpu.memory_space<vmem>>, %arg17: memref<24x24x16xf32, #tpu.memory_space<vmem>>, %arg18: memref<14x14x16xf32, #tpu.memory_space<vmem>>, %arg19: memref<14x14x16xf32, #tpu.memory_space<vmem>>, %arg20: memref<12x12x16xf32, #tpu.memory_space<vmem>>, %arg21: memref<8x8x32xf32, #tpu.memory_space<vmem>>, %arg22: memref<6x6x32xf32, #tpu.memory_space<vmem>>, %arg23: memref<6x6x32xf32, #tpu.memory_space<vmem>>, %arg24: memref<4x4x32xf32, #tpu.memory_space<vmem>>) attributes {dimension_semantics = [#tpu.dimension_semantics<parallel>], iteration_bounds = array<i64: 2>, scalar_prefetch = 0 : i64, scratch_operands = 8 : i64, tpu.core_type = #tpu.core_type<tc>, window_params = [{transform_indices = @transform_0, window_bounds = array<i64: 1, 28, 28, 1>}, {pipeline_mode = #tpu.pipeline_mode<synchronous>, transform_indices = @transform_1, window_bounds = array<i64: 25, 1, 16>}, {pipeline_mode = #tpu.pipeline_mode<synchronous>, transform_indices = @transform_2, window_bounds = array<i64: 1, 16>}, {pipeline_mode = #tpu.pipeline_mode<synchronous>, transform_indices = @transform_3, window_bounds = array<i64: 9, 16, 16>}, {pipeline_mode = #tpu.pipeline_mode<synchronous>, transform_indices = @transform_4, window_bounds = array<i64: 1, 16>}, {pipeline_mode = #tpu.pipeline_mode<synchronous>, transform_indices = @transform_5, window_bounds = array<i64: 9, 16, 16>}, {pipeline_mode = #tpu.pipeline_mode<synchronous>, transform_indices = @transform_6, window_bounds = array<i64: 1, 16>}, {pipeline_mode = #tpu.pipeline_mode<synchronous>, transform_indices = @transform_7, window_bounds = array<i64: 25, 16, 32>}, {pipeline_mode = #tpu.pipeline_mode<synchronous>, transform_indices = @transform_8, window_bounds = array<i64: 1, 32>}, {pipeline_mode = #tpu.pipeline_mode<synchronous>, transform_indices = @transform_9, window_bounds = array<i64: 9, 32, 32>}, {pipeline_mode = #tpu.pipeline_mode<synchronous>, transform_indices = @transform_10, window_bounds = array<i64: 1, 32>}, {pipeline_mode = #tpu.pipeline_mode<synchronous>, transform_indices = @transform_11, window_bounds = array<i64: 9, 32, 32>}, {pipeline_mode = #tpu.pipeline_mode<synchronous>, transform_indices = @transform_12, window_bounds = array<i64: 1, 32>}, {pipeline_mode = #tpu.pipeline_mode<synchronous>, transform_indices = @transform_13, window_bounds = array<i64: 16, 32, 10>}, {pipeline_mode = #tpu.pipeline_mode<synchronous>, transform_indices = @transform_14, window_bounds = array<i64: 1, 10>}, {transform_indices = @transform_15, window_bounds = array<i64: 1, 1, 10>}]} {
    %cst = arith.constant 0.000000e+00 : f32
    %0 = vector.broadcast %cst : f32 to vector<14x14x16xf32>
    %c0 = arith.constant 0 : index
    %c0_0 = arith.constant 0 : index
    %c0_1 = arith.constant 0 : index
    %1 = vector.load %arg18[%c0, %c0_0, %c0_1] : memref<14x14x16xf32, #tpu.memory_space<vmem>>, vector<14x14x16xf32>
    tpu.vector_store %arg18[%c0, %c0_0, %c0_1], %0 {strides = array<i32>} : memref<14x14x16xf32, #tpu.memory_space<vmem>>, vector<14x14x16xf32>,
    %cst_2 = arith.constant 0.000000e+00 : f32
    %2 = vector.broadcast %cst_2 : f32 to vector<14x14x16xf32>
    %c0_3 = arith.constant 0 : index
    %c0_4 = arith.constant 0 : index
    %c0_5 = arith.constant 0 : index
    %3 = vector.load %arg19[%c0_3, %c0_4, %c0_5] : memref<14x14x16xf32, #tpu.memory_space<vmem>>, vector<14x14x16xf32>
    tpu.vector_store %arg19[%c0_3, %c0_4, %c0_5], %2 {strides = array<i32>} : memref<14x14x16xf32, #tpu.memory_space<vmem>>, vector<14x14x16xf32>,
    %cst_6 = arith.constant 0.000000e+00 : f32
    %4 = vector.broadcast %cst_6 : f32 to vector<6x6x32xf32>
    %c0_7 = arith.constant 0 : index
    %c0_8 = arith.constant 0 : index
    %c0_9 = arith.constant 0 : index
    %5 = vector.load %arg22[%c0_7, %c0_8, %c0_9] : memref<6x6x32xf32, #tpu.memory_space<vmem>>, vector<6x6x32xf32>
    tpu.vector_store %arg22[%c0_7, %c0_8, %c0_9], %4 {strides = array<i32>} : memref<6x6x32xf32, #tpu.memory_space<vmem>>, vector<6x6x32xf32>,
    %cst_10 = arith.constant 0.000000e+00 : f32
    %6 = vector.broadcast %cst_10 : f32 to vector<6x6x32xf32>
    %c0_11 = arith.constant 0 : index
    %c0_12 = arith.constant 0 : index
    %c0_13 = arith.constant 0 : index
    %7 = vector.load %arg23[%c0_11, %c0_12, %c0_13] : memref<6x6x32xf32, #tpu.memory_space<vmem>>, vector<6x6x32xf32>
    tpu.vector_store %arg23[%c0_11, %c0_12, %c0_13], %6 {strides = array<i32>} : memref<6x6x32xf32, #tpu.memory_space<vmem>>, vector<6x6x32xf32>,
    %c0_14 = arith.constant 0 : index
    %c0_15 = arith.constant 0 : index
    %8 = vector.load %arg3[%c0_14, %c0_15] : memref<1x16xf32, #tpu.memory_space<vmem>>, vector<1x16xf32>
    %c0_i32 = arith.constant 0 : i32
    %c24_i32 = arith.constant 24 : i32
    %9 = arith.addi %c0_i32, %c24_i32 : i32
    %c1_i32 = arith.constant 1 : i32
    scf.for %arg25 = %c0_i32 to %9 step %c1_i32  : i32 {
      %cst_124 = arith.constant 0.000000e+00 : f32
      %144 = vector.broadcast %cst_124 : f32 to vector<24x16xf32>
      %145 = vector.broadcast %8 : vector<1x16xf32> to vector<24x16xf32>
      %146 = arith.addf %144, %145 : vector<24x16xf32>
      %c0_i32_125 = arith.constant 0 : i32
      %147 = arith.addi %arg25, %c0_i32_125 : i32
      %c0_126 = arith.constant 0 : index
      %148 = arith.index_cast %147 : i32 to index
      %c0_127 = arith.constant 0 : index
      %c0_128 = arith.constant 0 : index
      %149 = vector.load %arg1[%c0_126, %148, %c0_127, %c0_128] : memref<1x28x28x1xf32, #tpu.memory_space<vmem>>, vector<1x1x28x1xf32>
      %150 = vector.shape_cast %149 : vector<1x1x28x1xf32> to vector<28x1xf32>
      %151 = vector.extract_strided_slice %150 {offsets = [0, 0], sizes = [24, 1], strides = [1, 1]} : vector<28x1xf32> to vector<24x1xf32>
      %c0_129 = arith.constant 0 : index
      %c0_130 = arith.constant 0 : index
      %c0_131 = arith.constant 0 : index
      %152 = vector.load %arg2[%c0_129, %c0_130, %c0_131] : memref<25x1x16xf32, #tpu.memory_space<vmem>>, vector<1x1x16xf32>
      %153 = vector.shape_cast %152 : vector<1x1x16xf32> to vector<1x16xf32>
      %154 = vector.broadcast %151 : vector<24x1xf32> to vector<24x16xf32>
      %155 = vector.broadcast %153 : vector<1x16xf32> to vector<24x16xf32>
      %156 = arith.mulf %154, %155 : vector<24x16xf32>
      %157 = arith.addf %146, %156 : vector<24x16xf32>
      %158 = vector.extract_strided_slice %150 {offsets = [1, 0], sizes = [24, 1], strides = [1, 1]} : vector<28x1xf32> to vector<24x1xf32>
      %c1_132 = arith.constant 1 : index
      %c0_133 = arith.constant 0 : index
      %c0_134 = arith.constant 0 : index
      %159 = vector.load %arg2[%c1_132, %c0_133, %c0_134] : memref<25x1x16xf32, #tpu.memory_space<vmem>>, vector<1x1x16xf32>
      %160 = vector.shape_cast %159 : vector<1x1x16xf32> to vector<1x16xf32>
      %161 = vector.broadcast %158 : vector<24x1xf32> to vector<24x16xf32>
      %162 = vector.broadcast %160 : vector<1x16xf32> to vector<24x16xf32>
      %163 = arith.mulf %161, %162 : vector<24x16xf32>
      %164 = arith.addf %157, %163 : vector<24x16xf32>
      %165 = vector.extract_strided_slice %150 {offsets = [2, 0], sizes = [24, 1], strides = [1, 1]} : vector<28x1xf32> to vector<24x1xf32>
      %c2_135 = arith.constant 2 : index
      %c0_136 = arith.constant 0 : index
      %c0_137 = arith.constant 0 : index
      %166 = vector.load %arg2[%c2_135, %c0_136, %c0_137] : memref<25x1x16xf32, #tpu.memory_space<vmem>>, vector<1x1x16xf32>
      %167 = vector.shape_cast %166 : vector<1x1x16xf32> to vector<1x16xf32>
      %168 = vector.broadcast %165 : vector<24x1xf32> to vector<24x16xf32>
      %169 = vector.broadcast %167 : vector<1x16xf32> to vector<24x16xf32>
      %170 = arith.mulf %168, %169 : vector<24x16xf32>
      %171 = arith.addf %164, %170 : vector<24x16xf32>
      %172 = vector.extract_strided_slice %150 {offsets = [3, 0], sizes = [24, 1], strides = [1, 1]} : vector<28x1xf32> to vector<24x1xf32>
      %c3_138 = arith.constant 3 : index
      %c0_139 = arith.constant 0 : index
      %c0_140 = arith.constant 0 : index
      %173 = vector.load %arg2[%c3_138, %c0_139, %c0_140] : memref<25x1x16xf32, #tpu.memory_space<vmem>>, vector<1x1x16xf32>
      %174 = vector.shape_cast %173 : vector<1x1x16xf32> to vector<1x16xf32>
      %175 = vector.broadcast %172 : vector<24x1xf32> to vector<24x16xf32>
      %176 = vector.broadcast %174 : vector<1x16xf32> to vector<24x16xf32>
      %177 = arith.mulf %175, %176 : vector<24x16xf32>
      %178 = arith.addf %171, %177 : vector<24x16xf32>
      %179 = vector.extract_strided_slice %150 {offsets = [4, 0], sizes = [24, 1], strides = [1, 1]} : vector<28x1xf32> to vector<24x1xf32>
      %c4_141 = arith.constant 4 : index
      %c0_142 = arith.constant 0 : index
      %c0_143 = arith.constant 0 : index
      %180 = vector.load %arg2[%c4_141, %c0_142, %c0_143] : memref<25x1x16xf32, #tpu.memory_space<vmem>>, vector<1x1x16xf32>
      %181 = vector.shape_cast %180 : vector<1x1x16xf32> to vector<1x16xf32>
      %182 = vector.broadcast %179 : vector<24x1xf32> to vector<24x16xf32>
      %183 = vector.broadcast %181 : vector<1x16xf32> to vector<24x16xf32>
      %184 = arith.mulf %182, %183 : vector<24x16xf32>
      %185 = arith.addf %178, %184 : vector<24x16xf32>
      %c1_i32_144 = arith.constant 1 : i32
      %186 = arith.addi %arg25, %c1_i32_144 : i32
      %c0_145 = arith.constant 0 : index
      %187 = arith.index_cast %186 : i32 to index
      %c0_146 = arith.constant 0 : index
      %c0_147 = arith.constant 0 : index
      %188 = vector.load %arg1[%c0_145, %187, %c0_146, %c0_147] : memref<1x28x28x1xf32, #tpu.memory_space<vmem>>, vector<1x1x28x1xf32>
      %189 = vector.shape_cast %188 : vector<1x1x28x1xf32> to vector<28x1xf32>
      %190 = vector.extract_strided_slice %189 {offsets = [0, 0], sizes = [24, 1], strides = [1, 1]} : vector<28x1xf32> to vector<24x1xf32>
      %c5_148 = arith.constant 5 : index
      %c0_149 = arith.constant 0 : index
      %c0_150 = arith.constant 0 : index
      %191 = vector.load %arg2[%c5_148, %c0_149, %c0_150] : memref<25x1x16xf32, #tpu.memory_space<vmem>>, vector<1x1x16xf32>
      %192 = vector.shape_cast %191 : vector<1x1x16xf32> to vector<1x16xf32>
      %193 = vector.broadcast %190 : vector<24x1xf32> to vector<24x16xf32>
      %194 = vector.broadcast %192 : vector<1x16xf32> to vector<24x16xf32>
      %195 = arith.mulf %193, %194 : vector<24x16xf32>
      %196 = arith.addf %185, %195 : vector<24x16xf32>
      %197 = vector.extract_strided_slice %189 {offsets = [1, 0], sizes = [24, 1], strides = [1, 1]} : vector<28x1xf32> to vector<24x1xf32>
      %c6_151 = arith.constant 6 : index
      %c0_152 = arith.constant 0 : index
      %c0_153 = arith.constant 0 : index
      %198 = vector.load %arg2[%c6_151, %c0_152, %c0_153] : memref<25x1x16xf32, #tpu.memory_space<vmem>>, vector<1x1x16xf32>
      %199 = vector.shape_cast %198 : vector<1x1x16xf32> to vector<1x16xf32>
      %200 = vector.broadcast %197 : vector<24x1xf32> to vector<24x16xf32>
      %201 = vector.broadcast %199 : vector<1x16xf32> to vector<24x16xf32>
      %202 = arith.mulf %200, %201 : vector<24x16xf32>
      %203 = arith.addf %196, %202 : vector<24x16xf32>
      %204 = vector.extract_strided_slice %189 {offsets = [2, 0], sizes = [24, 1], strides = [1, 1]} : vector<28x1xf32> to vector<24x1xf32>
      %c7_154 = arith.constant 7 : index
      %c0_155 = arith.constant 0 : index
      %c0_156 = arith.constant 0 : index
      %205 = vector.load %arg2[%c7_154, %c0_155, %c0_156] : memref<25x1x16xf32, #tpu.memory_space<vmem>>, vector<1x1x16xf32>
      %206 = vector.shape_cast %205 : vector<1x1x16xf32> to vector<1x16xf32>
      %207 = vector.broadcast %204 : vector<24x1xf32> to vector<24x16xf32>
      %208 = vector.broadcast %206 : vector<1x16xf32> to vector<24x16xf32>
      %209 = arith.mulf %207, %208 : vector<24x16xf32>
      %210 = arith.addf %203, %209 : vector<24x16xf32>
      %211 = vector.extract_strided_slice %189 {offsets = [3, 0], sizes = [24, 1], strides = [1, 1]} : vector<28x1xf32> to vector<24x1xf32>
      %c8_157 = arith.constant 8 : index
      %c0_158 = arith.constant 0 : index
      %c0_159 = arith.constant 0 : index
      %212 = vector.load %arg2[%c8_157, %c0_158, %c0_159] : memref<25x1x16xf32, #tpu.memory_space<vmem>>, vector<1x1x16xf32>
      %213 = vector.shape_cast %212 : vector<1x1x16xf32> to vector<1x16xf32>
      %214 = vector.broadcast %211 : vector<24x1xf32> to vector<24x16xf32>
      %215 = vector.broadcast %213 : vector<1x16xf32> to vector<24x16xf32>
      %216 = arith.mulf %214, %215 : vector<24x16xf32>
      %217 = arith.addf %210, %216 : vector<24x16xf32>
      %218 = vector.extract_strided_slice %189 {offsets = [4, 0], sizes = [24, 1], strides = [1, 1]} : vector<28x1xf32> to vector<24x1xf32>
      %c9_160 = arith.constant 9 : index
      %c0_161 = arith.constant 0 : index
      %c0_162 = arith.constant 0 : index
      %219 = vector.load %arg2[%c9_160, %c0_161, %c0_162] : memref<25x1x16xf32, #tpu.memory_space<vmem>>, vector<1x1x16xf32>
      %220 = vector.shape_cast %219 : vector<1x1x16xf32> to vector<1x16xf32>
      %221 = vector.broadcast %218 : vector<24x1xf32> to vector<24x16xf32>
      %222 = vector.broadcast %220 : vector<1x16xf32> to vector<24x16xf32>
      %223 = arith.mulf %221, %222 : vector<24x16xf32>
      %224 = arith.addf %217, %223 : vector<24x16xf32>
      %c2_i32_163 = arith.constant 2 : i32
      %225 = arith.addi %arg25, %c2_i32_163 : i32
      %c0_164 = arith.constant 0 : index
      %226 = arith.index_cast %225 : i32 to index
      %c0_165 = arith.constant 0 : index
      %c0_166 = arith.constant 0 : index
      %227 = vector.load %arg1[%c0_164, %226, %c0_165, %c0_166] : memref<1x28x28x1xf32, #tpu.memory_space<vmem>>, vector<1x1x28x1xf32>
      %228 = vector.shape_cast %227 : vector<1x1x28x1xf32> to vector<28x1xf32>
      %229 = vector.extract_strided_slice %228 {offsets = [0, 0], sizes = [24, 1], strides = [1, 1]} : vector<28x1xf32> to vector<24x1xf32>
      %c10_167 = arith.constant 10 : index
      %c0_168 = arith.constant 0 : index
      %c0_169 = arith.constant 0 : index
      %230 = vector.load %arg2[%c10_167, %c0_168, %c0_169] : memref<25x1x16xf32, #tpu.memory_space<vmem>>, vector<1x1x16xf32>
      %231 = vector.shape_cast %230 : vector<1x1x16xf32> to vector<1x16xf32>
      %232 = vector.broadcast %229 : vector<24x1xf32> to vector<24x16xf32>
      %233 = vector.broadcast %231 : vector<1x16xf32> to vector<24x16xf32>
      %234 = arith.mulf %232, %233 : vector<24x16xf32>
      %235 = arith.addf %224, %234 : vector<24x16xf32>
      %236 = vector.extract_strided_slice %228 {offsets = [1, 0], sizes = [24, 1], strides = [1, 1]} : vector<28x1xf32> to vector<24x1xf32>
      %c11_170 = arith.constant 11 : index
      %c0_171 = arith.constant 0 : index
      %c0_172 = arith.constant 0 : index
      %237 = vector.load %arg2[%c11_170, %c0_171, %c0_172] : memref<25x1x16xf32, #tpu.memory_space<vmem>>, vector<1x1x16xf32>
      %238 = vector.shape_cast %237 : vector<1x1x16xf32> to vector<1x16xf32>
      %239 = vector.broadcast %236 : vector<24x1xf32> to vector<24x16xf32>
      %240 = vector.broadcast %238 : vector<1x16xf32> to vector<24x16xf32>
      %241 = arith.mulf %239, %240 : vector<24x16xf32>
      %242 = arith.addf %235, %241 : vector<24x16xf32>
      %243 = vector.extract_strided_slice %228 {offsets = [2, 0], sizes = [24, 1], strides = [1, 1]} : vector<28x1xf32> to vector<24x1xf32>
      %c12_173 = arith.constant 12 : index
      %c0_174 = arith.constant 0 : index
      %c0_175 = arith.constant 0 : index
      %244 = vector.load %arg2[%c12_173, %c0_174, %c0_175] : memref<25x1x16xf32, #tpu.memory_space<vmem>>, vector<1x1x16xf32>
      %245 = vector.shape_cast %244 : vector<1x1x16xf32> to vector<1x16xf32>
      %246 = vector.broadcast %243 : vector<24x1xf32> to vector<24x16xf32>
      %247 = vector.broadcast %245 : vector<1x16xf32> to vector<24x16xf32>
      %248 = arith.mulf %246, %247 : vector<24x16xf32>
      %249 = arith.addf %242, %248 : vector<24x16xf32>
      %250 = vector.extract_strided_slice %228 {offsets = [3, 0], sizes = [24, 1], strides = [1, 1]} : vector<28x1xf32> to vector<24x1xf32>
      %c13_176 = arith.constant 13 : index
      %c0_177 = arith.constant 0 : index
      %c0_178 = arith.constant 0 : index
      %251 = vector.load %arg2[%c13_176, %c0_177, %c0_178] : memref<25x1x16xf32, #tpu.memory_space<vmem>>, vector<1x1x16xf32>
      %252 = vector.shape_cast %251 : vector<1x1x16xf32> to vector<1x16xf32>
      %253 = vector.broadcast %250 : vector<24x1xf32> to vector<24x16xf32>
      %254 = vector.broadcast %252 : vector<1x16xf32> to vector<24x16xf32>
      %255 = arith.mulf %253, %254 : vector<24x16xf32>
      %256 = arith.addf %249, %255 : vector<24x16xf32>
      %257 = vector.extract_strided_slice %228 {offsets = [4, 0], sizes = [24, 1], strides = [1, 1]} : vector<28x1xf32> to vector<24x1xf32>
      %c14_179 = arith.constant 14 : index
      %c0_180 = arith.constant 0 : index
      %c0_181 = arith.constant 0 : index
      %258 = vector.load %arg2[%c14_179, %c0_180, %c0_181] : memref<25x1x16xf32, #tpu.memory_space<vmem>>, vector<1x1x16xf32>
      %259 = vector.shape_cast %258 : vector<1x1x16xf32> to vector<1x16xf32>
      %260 = vector.broadcast %257 : vector<24x1xf32> to vector<24x16xf32>
      %261 = vector.broadcast %259 : vector<1x16xf32> to vector<24x16xf32>
      %262 = arith.mulf %260, %261 : vector<24x16xf32>
      %263 = arith.addf %256, %262 : vector<24x16xf32>
      %c3_i32 = arith.constant 3 : i32
      %264 = arith.addi %arg25, %c3_i32 : i32
      %c0_182 = arith.constant 0 : index
      %265 = arith.index_cast %264 : i32 to index
      %c0_183 = arith.constant 0 : index
      %c0_184 = arith.constant 0 : index
      %266 = vector.load %arg1[%c0_182, %265, %c0_183, %c0_184] : memref<1x28x28x1xf32, #tpu.memory_space<vmem>>, vector<1x1x28x1xf32>
      %267 = vector.shape_cast %266 : vector<1x1x28x1xf32> to vector<28x1xf32>
      %268 = vector.extract_strided_slice %267 {offsets = [0, 0], sizes = [24, 1], strides = [1, 1]} : vector<28x1xf32> to vector<24x1xf32>
      %c15_185 = arith.constant 15 : index
      %c0_186 = arith.constant 0 : index
      %c0_187 = arith.constant 0 : index
      %269 = vector.load %arg2[%c15_185, %c0_186, %c0_187] : memref<25x1x16xf32, #tpu.memory_space<vmem>>, vector<1x1x16xf32>
      %270 = vector.shape_cast %269 : vector<1x1x16xf32> to vector<1x16xf32>
      %271 = vector.broadcast %268 : vector<24x1xf32> to vector<24x16xf32>
      %272 = vector.broadcast %270 : vector<1x16xf32> to vector<24x16xf32>
      %273 = arith.mulf %271, %272 : vector<24x16xf32>
      %274 = arith.addf %263, %273 : vector<24x16xf32>
      %275 = vector.extract_strided_slice %267 {offsets = [1, 0], sizes = [24, 1], strides = [1, 1]} : vector<28x1xf32> to vector<24x1xf32>
      %c16 = arith.constant 16 : index
      %c0_188 = arith.constant 0 : index
      %c0_189 = arith.constant 0 : index
      %276 = vector.load %arg2[%c16, %c0_188, %c0_189] : memref<25x1x16xf32, #tpu.memory_space<vmem>>, vector<1x1x16xf32>
      %277 = vector.shape_cast %276 : vector<1x1x16xf32> to vector<1x16xf32>
      %278 = vector.broadcast %275 : vector<24x1xf32> to vector<24x16xf32>
      %279 = vector.broadcast %277 : vector<1x16xf32> to vector<24x16xf32>
      %280 = arith.mulf %278, %279 : vector<24x16xf32>
      %281 = arith.addf %274, %280 : vector<24x16xf32>
      %282 = vector.extract_strided_slice %267 {offsets = [2, 0], sizes = [24, 1], strides = [1, 1]} : vector<28x1xf32> to vector<24x1xf32>
      %c17 = arith.constant 17 : index
      %c0_190 = arith.constant 0 : index
      %c0_191 = arith.constant 0 : index
      %283 = vector.load %arg2[%c17, %c0_190, %c0_191] : memref<25x1x16xf32, #tpu.memory_space<vmem>>, vector<1x1x16xf32>
      %284 = vector.shape_cast %283 : vector<1x1x16xf32> to vector<1x16xf32>
      %285 = vector.broadcast %282 : vector<24x1xf32> to vector<24x16xf32>
      %286 = vector.broadcast %284 : vector<1x16xf32> to vector<24x16xf32>
      %287 = arith.mulf %285, %286 : vector<24x16xf32>
      %288 = arith.addf %281, %287 : vector<24x16xf32>
      %289 = vector.extract_strided_slice %267 {offsets = [3, 0], sizes = [24, 1], strides = [1, 1]} : vector<28x1xf32> to vector<24x1xf32>
      %c18 = arith.constant 18 : index
      %c0_192 = arith.constant 0 : index
      %c0_193 = arith.constant 0 : index
      %290 = vector.load %arg2[%c18, %c0_192, %c0_193] : memref<25x1x16xf32, #tpu.memory_space<vmem>>, vector<1x1x16xf32>
      %291 = vector.shape_cast %290 : vector<1x1x16xf32> to vector<1x16xf32>
      %292 = vector.broadcast %289 : vector<24x1xf32> to vector<24x16xf32>
      %293 = vector.broadcast %291 : vector<1x16xf32> to vector<24x16xf32>
      %294 = arith.mulf %292, %293 : vector<24x16xf32>
      %295 = arith.addf %288, %294 : vector<24x16xf32>
      %296 = vector.extract_strided_slice %267 {offsets = [4, 0], sizes = [24, 1], strides = [1, 1]} : vector<28x1xf32> to vector<24x1xf32>
      %c19 = arith.constant 19 : index
      %c0_194 = arith.constant 0 : index
      %c0_195 = arith.constant 0 : index
      %297 = vector.load %arg2[%c19, %c0_194, %c0_195] : memref<25x1x16xf32, #tpu.memory_space<vmem>>, vector<1x1x16xf32>
      %298 = vector.shape_cast %297 : vector<1x1x16xf32> to vector<1x16xf32>
      %299 = vector.broadcast %296 : vector<24x1xf32> to vector<24x16xf32>
      %300 = vector.broadcast %298 : vector<1x16xf32> to vector<24x16xf32>
      %301 = arith.mulf %299, %300 : vector<24x16xf32>
      %302 = arith.addf %295, %301 : vector<24x16xf32>
      %c4_i32_196 = arith.constant 4 : i32
      %303 = arith.addi %arg25, %c4_i32_196 : i32
      %c0_197 = arith.constant 0 : index
      %304 = arith.index_cast %303 : i32 to index
      %c0_198 = arith.constant 0 : index
      %c0_199 = arith.constant 0 : index
      %305 = vector.load %arg1[%c0_197, %304, %c0_198, %c0_199] : memref<1x28x28x1xf32, #tpu.memory_space<vmem>>, vector<1x1x28x1xf32>
      %306 = vector.shape_cast %305 : vector<1x1x28x1xf32> to vector<28x1xf32>
      %307 = vector.extract_strided_slice %306 {offsets = [0, 0], sizes = [24, 1], strides = [1, 1]} : vector<28x1xf32> to vector<24x1xf32>
      %c20 = arith.constant 20 : index
      %c0_200 = arith.constant 0 : index
      %c0_201 = arith.constant 0 : index
      %308 = vector.load %arg2[%c20, %c0_200, %c0_201] : memref<25x1x16xf32, #tpu.memory_space<vmem>>, vector<1x1x16xf32>
      %309 = vector.shape_cast %308 : vector<1x1x16xf32> to vector<1x16xf32>
      %310 = vector.broadcast %307 : vector<24x1xf32> to vector<24x16xf32>
      %311 = vector.broadcast %309 : vector<1x16xf32> to vector<24x16xf32>
      %312 = arith.mulf %310, %311 : vector<24x16xf32>
      %313 = arith.addf %302, %312 : vector<24x16xf32>
      %314 = vector.extract_strided_slice %306 {offsets = [1, 0], sizes = [24, 1], strides = [1, 1]} : vector<28x1xf32> to vector<24x1xf32>
      %c21 = arith.constant 21 : index
      %c0_202 = arith.constant 0 : index
      %c0_203 = arith.constant 0 : index
      %315 = vector.load %arg2[%c21, %c0_202, %c0_203] : memref<25x1x16xf32, #tpu.memory_space<vmem>>, vector<1x1x16xf32>
      %316 = vector.shape_cast %315 : vector<1x1x16xf32> to vector<1x16xf32>
      %317 = vector.broadcast %314 : vector<24x1xf32> to vector<24x16xf32>
      %318 = vector.broadcast %316 : vector<1x16xf32> to vector<24x16xf32>
      %319 = arith.mulf %317, %318 : vector<24x16xf32>
      %320 = arith.addf %313, %319 : vector<24x16xf32>
      %321 = vector.extract_strided_slice %306 {offsets = [2, 0], sizes = [24, 1], strides = [1, 1]} : vector<28x1xf32> to vector<24x1xf32>
      %c22 = arith.constant 22 : index
      %c0_204 = arith.constant 0 : index
      %c0_205 = arith.constant 0 : index
      %322 = vector.load %arg2[%c22, %c0_204, %c0_205] : memref<25x1x16xf32, #tpu.memory_space<vmem>>, vector<1x1x16xf32>
      %323 = vector.shape_cast %322 : vector<1x1x16xf32> to vector<1x16xf32>
      %324 = vector.broadcast %321 : vector<24x1xf32> to vector<24x16xf32>
      %325 = vector.broadcast %323 : vector<1x16xf32> to vector<24x16xf32>
      %326 = arith.mulf %324, %325 : vector<24x16xf32>
      %327 = arith.addf %320, %326 : vector<24x16xf32>
      %328 = vector.extract_strided_slice %306 {offsets = [3, 0], sizes = [24, 1], strides = [1, 1]} : vector<28x1xf32> to vector<24x1xf32>
      %c23 = arith.constant 23 : index
      %c0_206 = arith.constant 0 : index
      %c0_207 = arith.constant 0 : index
      %329 = vector.load %arg2[%c23, %c0_206, %c0_207] : memref<25x1x16xf32, #tpu.memory_space<vmem>>, vector<1x1x16xf32>
      %330 = vector.shape_cast %329 : vector<1x1x16xf32> to vector<1x16xf32>
      %331 = vector.broadcast %328 : vector<24x1xf32> to vector<24x16xf32>
      %332 = vector.broadcast %330 : vector<1x16xf32> to vector<24x16xf32>
      %333 = arith.mulf %331, %332 : vector<24x16xf32>
      %334 = arith.addf %327, %333 : vector<24x16xf32>
      %335 = vector.extract_strided_slice %306 {offsets = [4, 0], sizes = [24, 1], strides = [1, 1]} : vector<28x1xf32> to vector<24x1xf32>
      %c24 = arith.constant 24 : index
      %c0_208 = arith.constant 0 : index
      %c0_209 = arith.constant 0 : index
      %336 = vector.load %arg2[%c24, %c0_208, %c0_209] : memref<25x1x16xf32, #tpu.memory_space<vmem>>, vector<1x1x16xf32>
      %337 = vector.shape_cast %336 : vector<1x1x16xf32> to vector<1x16xf32>
      %338 = vector.broadcast %335 : vector<24x1xf32> to vector<24x16xf32>
      %339 = vector.broadcast %337 : vector<1x16xf32> to vector<24x16xf32>
      %340 = arith.mulf %338, %339 : vector<24x16xf32>
      %341 = arith.addf %334, %340 : vector<24x16xf32>
      %342 = arith.index_cast %arg25 : i32 to index
      %c0_210 = arith.constant 0 : index
      %c0_211 = arith.constant 0 : index
      %343 = vector.load %arg17[%342, %c0_210, %c0_211] : memref<24x24x16xf32, #tpu.memory_space<vmem>>, vector<1x24x16xf32>
      %344 = vector.shape_cast %343 : vector<1x24x16xf32> to vector<24x16xf32>
      %345 = vector.shape_cast %341 : vector<24x16xf32> to vector<1x24x16xf32>
      tpu.vector_store %arg17[%342, %c0_210, %c0_211], %345 {strides = array<i32>} : memref<24x24x16xf32, #tpu.memory_space<vmem>>, vector<1x24x16xf32>,
    }
    %c24_i32_16 = arith.constant 24 : i32
    %10 = tpu.iota {dimensions = array<i32: 0>} : vector<12x24xi32>
    %11 = tpu.iota {dimensions = array<i32: 1>} : vector<12x24xi32>
    %c2_i32 = arith.constant 2 : i32
    %12 = vector.broadcast %c2_i32 : i32 to vector<12x24xi32>
    %13 = arith.muli %12, %10 : vector<12x24xi32>
    %14 = arith.cmpi eq, %11, %13 : vector<12x24xi32>
    %15 = arith.extui %14 : vector<12x24xi1> to vector<12x24xi32>
    %16 = arith.sitofp %15 : vector<12x24xi32> to vector<12x24xf32>
    %c2_i32_17 = arith.constant 2 : i32
    %17 = vector.broadcast %c2_i32_17 : i32 to vector<12x24xi32>
    %18 = arith.muli %17, %10 : vector<12x24xi32>
    %c1_i32_18 = arith.constant 1 : i32
    %19 = vector.broadcast %c1_i32_18 : i32 to vector<12x24xi32>
    %20 = arith.addi %18, %19 : vector<12x24xi32>
    %21 = arith.cmpi eq, %11, %20 : vector<12x24xi32>
    %22 = arith.extui %21 : vector<12x24xi1> to vector<12x24xi32>
    %23 = arith.sitofp %22 : vector<12x24xi32> to vector<12x24xf32>
    %c0_i32_19 = arith.constant 0 : i32
    %c12_i32 = arith.constant 12 : i32
    %24 = arith.addi %c0_i32_19, %c12_i32 : i32
    %c1_i32_20 = arith.constant 1 : i32
    scf.for %arg25 = %c0_i32_19 to %24 step %c1_i32_20  : i32 {
      %c2_i32_124 = arith.constant 2 : i32
      %144 = arith.muli %c2_i32_124, %arg25 : i32
      %145 = arith.index_cast %144 : i32 to index
      %c0_125 = arith.constant 0 : index
      %c0_126 = arith.constant 0 : index
      %146 = vector.load %arg17[%145, %c0_125, %c0_126] : memref<24x24x16xf32, #tpu.memory_space<vmem>>, vector<1x24x16xf32>
      %147 = vector.shape_cast %146 : vector<1x24x16xf32> to vector<24x16xf32>
      %c2_i32_127 = arith.constant 2 : i32
      %148 = arith.muli %c2_i32_127, %arg25 : i32
      %c1_i32_128 = arith.constant 1 : i32
      %149 = arith.addi %148, %c1_i32_128 : i32
      %150 = arith.index_cast %149 : i32 to index
      %c0_129 = arith.constant 0 : index
      %c0_130 = arith.constant 0 : index
      %151 = vector.load %arg17[%150, %c0_129, %c0_130] : memref<24x24x16xf32, #tpu.memory_space<vmem>>, vector<1x24x16xf32>
      %152 = vector.shape_cast %151 : vector<1x24x16xf32> to vector<24x16xf32>
      %153 = arith.maximumf %147, %152 : vector<24x16xf32>
      %cst_131 = arith.constant dense<0.000000e+00> : vector<12x16xf32>
      %154 = tpu.matmul %16, %153, %cst_131 {dimension_numbers = #tpu.dot_dimension_numbers<[1], [0], [0], [1], [0, 0, 1, 1], [], []>} : vector<12x24xf32>, vector<24x16xf32>, vector<12x16xf32> -> vector<12x16xf32>
      %cst_132 = arith.constant dense<0.000000e+00> : vector<12x16xf32>
      %155 = tpu.matmul %23, %153, %cst_132 {dimension_numbers = #tpu.dot_dimension_numbers<[1], [0], [0], [1], [0, 0, 1, 1], [], []>} : vector<12x24xf32>, vector<24x16xf32>, vector<12x16xf32> -> vector<12x16xf32>
      %156 = arith.maximumf %154, %155 : vector<12x16xf32>
      %cst_133 = arith.constant 0.000000e+00 : f32
      %157 = vector.broadcast %cst_133 : f32 to vector<12x16xf32>
      %158 = arith.maximumf %156, %157 : vector<12x16xf32>
      %c1_i32_134 = arith.constant 1 : i32
      %159 = arith.addi %arg25, %c1_i32_134 : i32
      %160 = arith.index_cast %159 : i32 to index
      %c1_135 = arith.constant 1 : index
      %c0_136 = arith.constant 0 : index
      %161 = vector.load %arg18[%160, %c1_135, %c0_136] : memref<14x14x16xf32, #tpu.memory_space<vmem>>, vector<1x12x16xf32>
      %162 = vector.shape_cast %161 : vector<1x12x16xf32> to vector<12x16xf32>
      %163 = vector.shape_cast %158 : vector<12x16xf32> to vector<1x12x16xf32>
      tpu.vector_store %arg18[%160, %c1_135, %c0_136], %163 {strides = array<i32>} : memref<14x14x16xf32, #tpu.memory_space<vmem>>, vector<1x12x16xf32>,
    }
    %c12_i32_21 = arith.constant 12 : i32
    %c0_22 = arith.constant 0 : index
    %c0_23 = arith.constant 0 : index
    %25 = vector.load %arg5[%c0_22, %c0_23] : memref<1x16xf32, #tpu.memory_space<vmem>>, vector<1x16xf32>
    %c0_i32_24 = arith.constant 0 : i32
    %c12_i32_25 = arith.constant 12 : i32
    %26 = arith.addi %c0_i32_24, %c12_i32_25 : i32
    %c1_i32_26 = arith.constant 1 : i32
    scf.for %arg25 = %c0_i32_24 to %26 step %c1_i32_26  : i32 {
      %cst_124 = arith.constant 0.000000e+00 : f32
      %144 = vector.broadcast %cst_124 : f32 to vector<12x16xf32>
      %145 = vector.broadcast %25 : vector<1x16xf32> to vector<12x16xf32>
      %146 = arith.addf %144, %145 : vector<12x16xf32>
      %c0_i32_125 = arith.constant 0 : i32
      %147 = arith.addi %arg25, %c0_i32_125 : i32
      %148 = arith.index_cast %147 : i32 to index
      %c0_126 = arith.constant 0 : index
      %c0_127 = arith.constant 0 : index
      %149 = vector.load %arg18[%148, %c0_126, %c0_127] : memref<14x14x16xf32, #tpu.memory_space<vmem>>, vector<1x14x16xf32>
      %150 = vector.shape_cast %149 : vector<1x14x16xf32> to vector<14x16xf32>
      %151 = vector.extract_strided_slice %150 {offsets = [0, 0], sizes = [12, 16], strides = [1, 1]} : vector<14x16xf32> to vector<12x16xf32>
      %c0_128 = arith.constant 0 : index
      %c0_129 = arith.constant 0 : index
      %c0_130 = arith.constant 0 : index
      %152 = vector.load %arg4[%c0_128, %c0_129, %c0_130] : memref<9x16x16xf32, #tpu.memory_space<vmem>>, vector<1x16x16xf32>
      %153 = vector.shape_cast %152 : vector<1x16x16xf32> to vector<16x16xf32>
      %cst_131 = arith.constant dense<0.000000e+00> : vector<12x16xf32>
      %154 = tpu.matmul %151, %153, %cst_131 {dimension_numbers = #tpu.dot_dimension_numbers<[1], [0], [0], [1], [0, 0, 1, 1], [], []>} : vector<12x16xf32>, vector<16x16xf32>, vector<12x16xf32> -> vector<12x16xf32>
      %155 = arith.addf %146, %154 : vector<12x16xf32>
      %156 = vector.extract_strided_slice %150 {offsets = [1, 0], sizes = [12, 16], strides = [1, 1]} : vector<14x16xf32> to vector<12x16xf32>
      %c1_132 = arith.constant 1 : index
      %c0_133 = arith.constant 0 : index
      %c0_134 = arith.constant 0 : index
      %157 = vector.load %arg4[%c1_132, %c0_133, %c0_134] : memref<9x16x16xf32, #tpu.memory_space<vmem>>, vector<1x16x16xf32>
      %158 = vector.shape_cast %157 : vector<1x16x16xf32> to vector<16x16xf32>
      %cst_135 = arith.constant dense<0.000000e+00> : vector<12x16xf32>
      %159 = tpu.matmul %156, %158, %cst_135 {dimension_numbers = #tpu.dot_dimension_numbers<[1], [0], [0], [1], [0, 0, 1, 1], [], []>} : vector<12x16xf32>, vector<16x16xf32>, vector<12x16xf32> -> vector<12x16xf32>
      %160 = arith.addf %155, %159 : vector<12x16xf32>
      %161 = vector.extract_strided_slice %150 {offsets = [2, 0], sizes = [12, 16], strides = [1, 1]} : vector<14x16xf32> to vector<12x16xf32>
      %c2_136 = arith.constant 2 : index
      %c0_137 = arith.constant 0 : index
      %c0_138 = arith.constant 0 : index
      %162 = vector.load %arg4[%c2_136, %c0_137, %c0_138] : memref<9x16x16xf32, #tpu.memory_space<vmem>>, vector<1x16x16xf32>
      %163 = vector.shape_cast %162 : vector<1x16x16xf32> to vector<16x16xf32>
      %cst_139 = arith.constant dense<0.000000e+00> : vector<12x16xf32>
      %164 = tpu.matmul %161, %163, %cst_139 {dimension_numbers = #tpu.dot_dimension_numbers<[1], [0], [0], [1], [0, 0, 1, 1], [], []>} : vector<12x16xf32>, vector<16x16xf32>, vector<12x16xf32> -> vector<12x16xf32>
      %165 = arith.addf %160, %164 : vector<12x16xf32>
      %c1_i32_140 = arith.constant 1 : i32
      %166 = arith.addi %arg25, %c1_i32_140 : i32
      %167 = arith.index_cast %166 : i32 to index
      %c0_141 = arith.constant 0 : index
      %c0_142 = arith.constant 0 : index
      %168 = vector.load %arg18[%167, %c0_141, %c0_142] : memref<14x14x16xf32, #tpu.memory_space<vmem>>, vector<1x14x16xf32>
      %169 = vector.shape_cast %168 : vector<1x14x16xf32> to vector<14x16xf32>
      %170 = vector.extract_strided_slice %169 {offsets = [0, 0], sizes = [12, 16], strides = [1, 1]} : vector<14x16xf32> to vector<12x16xf32>
      %c3_143 = arith.constant 3 : index
      %c0_144 = arith.constant 0 : index
      %c0_145 = arith.constant 0 : index
      %171 = vector.load %arg4[%c3_143, %c0_144, %c0_145] : memref<9x16x16xf32, #tpu.memory_space<vmem>>, vector<1x16x16xf32>
      %172 = vector.shape_cast %171 : vector<1x16x16xf32> to vector<16x16xf32>
      %cst_146 = arith.constant dense<0.000000e+00> : vector<12x16xf32>
      %173 = tpu.matmul %170, %172, %cst_146 {dimension_numbers = #tpu.dot_dimension_numbers<[1], [0], [0], [1], [0, 0, 1, 1], [], []>} : vector<12x16xf32>, vector<16x16xf32>, vector<12x16xf32> -> vector<12x16xf32>
      %174 = arith.addf %165, %173 : vector<12x16xf32>
      %175 = vector.extract_strided_slice %169 {offsets = [1, 0], sizes = [12, 16], strides = [1, 1]} : vector<14x16xf32> to vector<12x16xf32>
      %c4_147 = arith.constant 4 : index
      %c0_148 = arith.constant 0 : index
      %c0_149 = arith.constant 0 : index
      %176 = vector.load %arg4[%c4_147, %c0_148, %c0_149] : memref<9x16x16xf32, #tpu.memory_space<vmem>>, vector<1x16x16xf32>
      %177 = vector.shape_cast %176 : vector<1x16x16xf32> to vector<16x16xf32>
      %cst_150 = arith.constant dense<0.000000e+00> : vector<12x16xf32>
      %178 = tpu.matmul %175, %177, %cst_150 {dimension_numbers = #tpu.dot_dimension_numbers<[1], [0], [0], [1], [0, 0, 1, 1], [], []>} : vector<12x16xf32>, vector<16x16xf32>, vector<12x16xf32> -> vector<12x16xf32>
      %179 = arith.addf %174, %178 : vector<12x16xf32>
      %180 = vector.extract_strided_slice %169 {offsets = [2, 0], sizes = [12, 16], strides = [1, 1]} : vector<14x16xf32> to vector<12x16xf32>
      %c5_151 = arith.constant 5 : index
      %c0_152 = arith.constant 0 : index
      %c0_153 = arith.constant 0 : index
      %181 = vector.load %arg4[%c5_151, %c0_152, %c0_153] : memref<9x16x16xf32, #tpu.memory_space<vmem>>, vector<1x16x16xf32>
      %182 = vector.shape_cast %181 : vector<1x16x16xf32> to vector<16x16xf32>
      %cst_154 = arith.constant dense<0.000000e+00> : vector<12x16xf32>
      %183 = tpu.matmul %180, %182, %cst_154 {dimension_numbers = #tpu.dot_dimension_numbers<[1], [0], [0], [1], [0, 0, 1, 1], [], []>} : vector<12x16xf32>, vector<16x16xf32>, vector<12x16xf32> -> vector<12x16xf32>
      %184 = arith.addf %179, %183 : vector<12x16xf32>
      %c2_i32_155 = arith.constant 2 : i32
      %185 = arith.addi %arg25, %c2_i32_155 : i32
      %186 = arith.index_cast %185 : i32 to index
      %c0_156 = arith.constant 0 : index
      %c0_157 = arith.constant 0 : index
      %187 = vector.load %arg18[%186, %c0_156, %c0_157] : memref<14x14x16xf32, #tpu.memory_space<vmem>>, vector<1x14x16xf32>
      %188 = vector.shape_cast %187 : vector<1x14x16xf32> to vector<14x16xf32>
      %189 = vector.extract_strided_slice %188 {offsets = [0, 0], sizes = [12, 16], strides = [1, 1]} : vector<14x16xf32> to vector<12x16xf32>
      %c6_158 = arith.constant 6 : index
      %c0_159 = arith.constant 0 : index
      %c0_160 = arith.constant 0 : index
      %190 = vector.load %arg4[%c6_158, %c0_159, %c0_160] : memref<9x16x16xf32, #tpu.memory_space<vmem>>, vector<1x16x16xf32>
      %191 = vector.shape_cast %190 : vector<1x16x16xf32> to vector<16x16xf32>
      %cst_161 = arith.constant dense<0.000000e+00> : vector<12x16xf32>
      %192 = tpu.matmul %189, %191, %cst_161 {dimension_numbers = #tpu.dot_dimension_numbers<[1], [0], [0], [1], [0, 0, 1, 1], [], []>} : vector<12x16xf32>, vector<16x16xf32>, vector<12x16xf32> -> vector<12x16xf32>
      %193 = arith.addf %184, %192 : vector<12x16xf32>
      %194 = vector.extract_strided_slice %188 {offsets = [1, 0], sizes = [12, 16], strides = [1, 1]} : vector<14x16xf32> to vector<12x16xf32>
      %c7_162 = arith.constant 7 : index
      %c0_163 = arith.constant 0 : index
      %c0_164 = arith.constant 0 : index
      %195 = vector.load %arg4[%c7_162, %c0_163, %c0_164] : memref<9x16x16xf32, #tpu.memory_space<vmem>>, vector<1x16x16xf32>
      %196 = vector.shape_cast %195 : vector<1x16x16xf32> to vector<16x16xf32>
      %cst_165 = arith.constant dense<0.000000e+00> : vector<12x16xf32>
      %197 = tpu.matmul %194, %196, %cst_165 {dimension_numbers = #tpu.dot_dimension_numbers<[1], [0], [0], [1], [0, 0, 1, 1], [], []>} : vector<12x16xf32>, vector<16x16xf32>, vector<12x16xf32> -> vector<12x16xf32>
      %198 = arith.addf %193, %197 : vector<12x16xf32>
      %199 = vector.extract_strided_slice %188 {offsets = [2, 0], sizes = [12, 16], strides = [1, 1]} : vector<14x16xf32> to vector<12x16xf32>
      %c8_166 = arith.constant 8 : index
      %c0_167 = arith.constant 0 : index
      %c0_168 = arith.constant 0 : index
      %200 = vector.load %arg4[%c8_166, %c0_167, %c0_168] : memref<9x16x16xf32, #tpu.memory_space<vmem>>, vector<1x16x16xf32>
      %201 = vector.shape_cast %200 : vector<1x16x16xf32> to vector<16x16xf32>
      %cst_169 = arith.constant dense<0.000000e+00> : vector<12x16xf32>
      %202 = tpu.matmul %199, %201, %cst_169 {dimension_numbers = #tpu.dot_dimension_numbers<[1], [0], [0], [1], [0, 0, 1, 1], [], []>} : vector<12x16xf32>, vector<16x16xf32>, vector<12x16xf32> -> vector<12x16xf32>
      %203 = arith.addf %198, %202 : vector<12x16xf32>
      %cst_170 = arith.constant 0.000000e+00 : f32
      %204 = vector.broadcast %cst_170 : f32 to vector<12x16xf32>
      %205 = arith.maximumf %203, %204 : vector<12x16xf32>
      %c1_i32_171 = arith.constant 1 : i32
      %206 = arith.addi %arg25, %c1_i32_171 : i32
      %207 = arith.index_cast %206 : i32 to index
      %c1_172 = arith.constant 1 : index
      %c0_173 = arith.constant 0 : index
      %208 = vector.load %arg19[%207, %c1_172, %c0_173] : memref<14x14x16xf32, #tpu.memory_space<vmem>>, vector<1x12x16xf32>
      %209 = vector.shape_cast %208 : vector<1x12x16xf32> to vector<12x16xf32>
      %210 = vector.shape_cast %205 : vector<12x16xf32> to vector<1x12x16xf32>
      tpu.vector_store %arg19[%207, %c1_172, %c0_173], %210 {strides = array<i32>} : memref<14x14x16xf32, #tpu.memory_space<vmem>>, vector<1x12x16xf32>,
    }
    %c12_i32_27 = arith.constant 12 : i32
    %c0_28 = arith.constant 0 : index
    %c0_29 = arith.constant 0 : index
    %27 = vector.load %arg7[%c0_28, %c0_29] : memref<1x16xf32, #tpu.memory_space<vmem>>, vector<1x16xf32>
    %c0_i32_30 = arith.constant 0 : i32
    %c12_i32_31 = arith.constant 12 : i32
    %28 = arith.addi %c0_i32_30, %c12_i32_31 : i32
    %c1_i32_32 = arith.constant 1 : i32
    scf.for %arg25 = %c0_i32_30 to %28 step %c1_i32_32  : i32 {
      %cst_124 = arith.constant 0.000000e+00 : f32
      %144 = vector.broadcast %cst_124 : f32 to vector<12x16xf32>
      %145 = vector.broadcast %27 : vector<1x16xf32> to vector<12x16xf32>
      %146 = arith.addf %144, %145 : vector<12x16xf32>
      %c0_i32_125 = arith.constant 0 : i32
      %147 = arith.addi %arg25, %c0_i32_125 : i32
      %148 = arith.index_cast %147 : i32 to index
      %c0_126 = arith.constant 0 : index
      %c0_127 = arith.constant 0 : index
      %149 = vector.load %arg19[%148, %c0_126, %c0_127] : memref<14x14x16xf32, #tpu.memory_space<vmem>>, vector<1x14x16xf32>
      %150 = vector.shape_cast %149 : vector<1x14x16xf32> to vector<14x16xf32>
      %151 = vector.extract_strided_slice %150 {offsets = [0, 0], sizes = [12, 16], strides = [1, 1]} : vector<14x16xf32> to vector<12x16xf32>
      %c0_128 = arith.constant 0 : index
      %c0_129 = arith.constant 0 : index
      %c0_130 = arith.constant 0 : index
      %152 = vector.load %arg6[%c0_128, %c0_129, %c0_130] : memref<9x16x16xf32, #tpu.memory_space<vmem>>, vector<1x16x16xf32>
      %153 = vector.shape_cast %152 : vector<1x16x16xf32> to vector<16x16xf32>
      %cst_131 = arith.constant dense<0.000000e+00> : vector<12x16xf32>
      %154 = tpu.matmul %151, %153, %cst_131 {dimension_numbers = #tpu.dot_dimension_numbers<[1], [0], [0], [1], [0, 0, 1, 1], [], []>} : vector<12x16xf32>, vector<16x16xf32>, vector<12x16xf32> -> vector<12x16xf32>
      %155 = arith.addf %146, %154 : vector<12x16xf32>
      %156 = vector.extract_strided_slice %150 {offsets = [1, 0], sizes = [12, 16], strides = [1, 1]} : vector<14x16xf32> to vector<12x16xf32>
      %c1_132 = arith.constant 1 : index
      %c0_133 = arith.constant 0 : index
      %c0_134 = arith.constant 0 : index
      %157 = vector.load %arg6[%c1_132, %c0_133, %c0_134] : memref<9x16x16xf32, #tpu.memory_space<vmem>>, vector<1x16x16xf32>
      %158 = vector.shape_cast %157 : vector<1x16x16xf32> to vector<16x16xf32>
      %cst_135 = arith.constant dense<0.000000e+00> : vector<12x16xf32>
      %159 = tpu.matmul %156, %158, %cst_135 {dimension_numbers = #tpu.dot_dimension_numbers<[1], [0], [0], [1], [0, 0, 1, 1], [], []>} : vector<12x16xf32>, vector<16x16xf32>, vector<12x16xf32> -> vector<12x16xf32>
      %160 = arith.addf %155, %159 : vector<12x16xf32>
      %161 = vector.extract_strided_slice %150 {offsets = [2, 0], sizes = [12, 16], strides = [1, 1]} : vector<14x16xf32> to vector<12x16xf32>
      %c2_136 = arith.constant 2 : index
      %c0_137 = arith.constant 0 : index
      %c0_138 = arith.constant 0 : index
      %162 = vector.load %arg6[%c2_136, %c0_137, %c0_138] : memref<9x16x16xf32, #tpu.memory_space<vmem>>, vector<1x16x16xf32>
      %163 = vector.shape_cast %162 : vector<1x16x16xf32> to vector<16x16xf32>
      %cst_139 = arith.constant dense<0.000000e+00> : vector<12x16xf32>
      %164 = tpu.matmul %161, %163, %cst_139 {dimension_numbers = #tpu.dot_dimension_numbers<[1], [0], [0], [1], [0, 0, 1, 1], [], []>} : vector<12x16xf32>, vector<16x16xf32>, vector<12x16xf32> -> vector<12x16xf32>
      %165 = arith.addf %160, %164 : vector<12x16xf32>
      %c1_i32_140 = arith.constant 1 : i32
      %166 = arith.addi %arg25, %c1_i32_140 : i32
      %167 = arith.index_cast %166 : i32 to index
      %c0_141 = arith.constant 0 : index
      %c0_142 = arith.constant 0 : index
      %168 = vector.load %arg19[%167, %c0_141, %c0_142] : memref<14x14x16xf32, #tpu.memory_space<vmem>>, vector<1x14x16xf32>
      %169 = vector.shape_cast %168 : vector<1x14x16xf32> to vector<14x16xf32>
      %170 = vector.extract_strided_slice %169 {offsets = [0, 0], sizes = [12, 16], strides = [1, 1]} : vector<14x16xf32> to vector<12x16xf32>
      %c3_143 = arith.constant 3 : index
      %c0_144 = arith.constant 0 : index
      %c0_145 = arith.constant 0 : index
      %171 = vector.load %arg6[%c3_143, %c0_144, %c0_145] : memref<9x16x16xf32, #tpu.memory_space<vmem>>, vector<1x16x16xf32>
      %172 = vector.shape_cast %171 : vector<1x16x16xf32> to vector<16x16xf32>
      %cst_146 = arith.constant dense<0.000000e+00> : vector<12x16xf32>
      %173 = tpu.matmul %170, %172, %cst_146 {dimension_numbers = #tpu.dot_dimension_numbers<[1], [0], [0], [1], [0, 0, 1, 1], [], []>} : vector<12x16xf32>, vector<16x16xf32>, vector<12x16xf32> -> vector<12x16xf32>
      %174 = arith.addf %165, %173 : vector<12x16xf32>
      %175 = vector.extract_strided_slice %169 {offsets = [1, 0], sizes = [12, 16], strides = [1, 1]} : vector<14x16xf32> to vector<12x16xf32>
      %c4_147 = arith.constant 4 : index
      %c0_148 = arith.constant 0 : index
      %c0_149 = arith.constant 0 : index
      %176 = vector.load %arg6[%c4_147, %c0_148, %c0_149] : memref<9x16x16xf32, #tpu.memory_space<vmem>>, vector<1x16x16xf32>
      %177 = vector.shape_cast %176 : vector<1x16x16xf32> to vector<16x16xf32>
      %cst_150 = arith.constant dense<0.000000e+00> : vector<12x16xf32>
      %178 = tpu.matmul %175, %177, %cst_150 {dimension_numbers = #tpu.dot_dimension_numbers<[1], [0], [0], [1], [0, 0, 1, 1], [], []>} : vector<12x16xf32>, vector<16x16xf32>, vector<12x16xf32> -> vector<12x16xf32>
      %179 = arith.addf %174, %178 : vector<12x16xf32>
      %180 = vector.extract_strided_slice %169 {offsets = [2, 0], sizes = [12, 16], strides = [1, 1]} : vector<14x16xf32> to vector<12x16xf32>
      %c5_151 = arith.constant 5 : index
      %c0_152 = arith.constant 0 : index
      %c0_153 = arith.constant 0 : index
      %181 = vector.load %arg6[%c5_151, %c0_152, %c0_153] : memref<9x16x16xf32, #tpu.memory_space<vmem>>, vector<1x16x16xf32>
      %182 = vector.shape_cast %181 : vector<1x16x16xf32> to vector<16x16xf32>
      %cst_154 = arith.constant dense<0.000000e+00> : vector<12x16xf32>
      %183 = tpu.matmul %180, %182, %cst_154 {dimension_numbers = #tpu.dot_dimension_numbers<[1], [0], [0], [1], [0, 0, 1, 1], [], []>} : vector<12x16xf32>, vector<16x16xf32>, vector<12x16xf32> -> vector<12x16xf32>
      %184 = arith.addf %179, %183 : vector<12x16xf32>
      %c2_i32_155 = arith.constant 2 : i32
      %185 = arith.addi %arg25, %c2_i32_155 : i32
      %186 = arith.index_cast %185 : i32 to index
      %c0_156 = arith.constant 0 : index
      %c0_157 = arith.constant 0 : index
      %187 = vector.load %arg19[%186, %c0_156, %c0_157] : memref<14x14x16xf32, #tpu.memory_space<vmem>>, vector<1x14x16xf32>
      %188 = vector.shape_cast %187 : vector<1x14x16xf32> to vector<14x16xf32>
      %189 = vector.extract_strided_slice %188 {offsets = [0, 0], sizes = [12, 16], strides = [1, 1]} : vector<14x16xf32> to vector<12x16xf32>
      %c6_158 = arith.constant 6 : index
      %c0_159 = arith.constant 0 : index
      %c0_160 = arith.constant 0 : index
      %190 = vector.load %arg6[%c6_158, %c0_159, %c0_160] : memref<9x16x16xf32, #tpu.memory_space<vmem>>, vector<1x16x16xf32>
      %191 = vector.shape_cast %190 : vector<1x16x16xf32> to vector<16x16xf32>
      %cst_161 = arith.constant dense<0.000000e+00> : vector<12x16xf32>
      %192 = tpu.matmul %189, %191, %cst_161 {dimension_numbers = #tpu.dot_dimension_numbers<[1], [0], [0], [1], [0, 0, 1, 1], [], []>} : vector<12x16xf32>, vector<16x16xf32>, vector<12x16xf32> -> vector<12x16xf32>
      %193 = arith.addf %184, %192 : vector<12x16xf32>
      %194 = vector.extract_strided_slice %188 {offsets = [1, 0], sizes = [12, 16], strides = [1, 1]} : vector<14x16xf32> to vector<12x16xf32>
      %c7_162 = arith.constant 7 : index
      %c0_163 = arith.constant 0 : index
      %c0_164 = arith.constant 0 : index
      %195 = vector.load %arg6[%c7_162, %c0_163, %c0_164] : memref<9x16x16xf32, #tpu.memory_space<vmem>>, vector<1x16x16xf32>
      %196 = vector.shape_cast %195 : vector<1x16x16xf32> to vector<16x16xf32>
      %cst_165 = arith.constant dense<0.000000e+00> : vector<12x16xf32>
      %197 = tpu.matmul %194, %196, %cst_165 {dimension_numbers = #tpu.dot_dimension_numbers<[1], [0], [0], [1], [0, 0, 1, 1], [], []>} : vector<12x16xf32>, vector<16x16xf32>, vector<12x16xf32> -> vector<12x16xf32>
      %198 = arith.addf %193, %197 : vector<12x16xf32>
      %199 = vector.extract_strided_slice %188 {offsets = [2, 0], sizes = [12, 16], strides = [1, 1]} : vector<14x16xf32> to vector<12x16xf32>
      %c8_166 = arith.constant 8 : index
      %c0_167 = arith.constant 0 : index
      %c0_168 = arith.constant 0 : index
      %200 = vector.load %arg6[%c8_166, %c0_167, %c0_168] : memref<9x16x16xf32, #tpu.memory_space<vmem>>, vector<1x16x16xf32>
      %201 = vector.shape_cast %200 : vector<1x16x16xf32> to vector<16x16xf32>
      %cst_169 = arith.constant dense<0.000000e+00> : vector<12x16xf32>
      %202 = tpu.matmul %199, %201, %cst_169 {dimension_numbers = #tpu.dot_dimension_numbers<[1], [0], [0], [1], [0, 0, 1, 1], [], []>} : vector<12x16xf32>, vector<16x16xf32>, vector<12x16xf32> -> vector<12x16xf32>
      %203 = arith.addf %198, %202 : vector<12x16xf32>
      %c1_i32_170 = arith.constant 1 : i32
      %204 = arith.addi %arg25, %c1_i32_170 : i32
      %205 = arith.index_cast %204 : i32 to index
      %c1_171 = arith.constant 1 : index
      %c0_172 = arith.constant 0 : index
      %206 = vector.load %arg18[%205, %c1_171, %c0_172] : memref<14x14x16xf32, #tpu.memory_space<vmem>>, vector<1x12x16xf32>
      %207 = vector.shape_cast %206 : vector<1x12x16xf32> to vector<12x16xf32>
      %208 = arith.addf %203, %207 : vector<12x16xf32>
      %cst_173 = arith.constant 0.000000e+00 : f32
      %209 = vector.broadcast %cst_173 : f32 to vector<12x16xf32>
      %210 = arith.maximumf %208, %209 : vector<12x16xf32>
      %211 = arith.index_cast %arg25 : i32 to index
      %c0_174 = arith.constant 0 : index
      %c0_175 = arith.constant 0 : index
      %212 = vector.load %arg20[%211, %c0_174, %c0_175] : memref<12x12x16xf32, #tpu.memory_space<vmem>>, vector<1x12x16xf32>
      %213 = vector.shape_cast %212 : vector<1x12x16xf32> to vector<12x16xf32>
      %214 = vector.shape_cast %210 : vector<12x16xf32> to vector<1x12x16xf32>
      tpu.vector_store %arg20[%211, %c0_174, %c0_175], %214 {strides = array<i32>} : memref<12x12x16xf32, #tpu.memory_space<vmem>>, vector<1x12x16xf32>,
    }
    %c12_i32_33 = arith.constant 12 : i32
    %c0_34 = arith.constant 0 : index
    %c0_35 = arith.constant 0 : index
    %29 = vector.load %arg9[%c0_34, %c0_35] : memref<1x32xf32, #tpu.memory_space<vmem>>, vector<1x32xf32>
    %c0_i32_36 = arith.constant 0 : i32
    %c8_i32 = arith.constant 8 : i32
    %30 = arith.addi %c0_i32_36, %c8_i32 : i32
    %c1_i32_37 = arith.constant 1 : i32
    scf.for %arg25 = %c0_i32_36 to %30 step %c1_i32_37  : i32 {
      %cst_124 = arith.constant 0.000000e+00 : f32
      %144 = vector.broadcast %cst_124 : f32 to vector<8x32xf32>
      %145 = vector.broadcast %29 : vector<1x32xf32> to vector<8x32xf32>
      %146 = arith.addf %144, %145 : vector<8x32xf32>
      %c0_i32_125 = arith.constant 0 : i32
      %147 = arith.addi %arg25, %c0_i32_125 : i32
      %148 = arith.index_cast %147 : i32 to index
      %c0_126 = arith.constant 0 : index
      %c0_127 = arith.constant 0 : index
      %149 = vector.load %arg20[%148, %c0_126, %c0_127] : memref<12x12x16xf32, #tpu.memory_space<vmem>>, vector<1x12x16xf32>
      %150 = vector.shape_cast %149 : vector<1x12x16xf32> to vector<12x16xf32>
      %151 = vector.extract_strided_slice %150 {offsets = [0, 0], sizes = [8, 16], strides = [1, 1]} : vector<12x16xf32> to vector<8x16xf32>
      %c0_128 = arith.constant 0 : index
      %c0_129 = arith.constant 0 : index
      %c0_130 = arith.constant 0 : index
      %152 = vector.load %arg8[%c0_128, %c0_129, %c0_130] : memref<25x16x32xf32, #tpu.memory_space<vmem>>, vector<1x16x32xf32>
      %153 = vector.shape_cast %152 : vector<1x16x32xf32> to vector<16x32xf32>
      %cst_131 = arith.constant dense<0.000000e+00> : vector<8x32xf32>
      %154 = tpu.matmul %151, %153, %cst_131 {dimension_numbers = #tpu.dot_dimension_numbers<[1], [0], [0], [1], [0, 0, 1, 1], [], []>} : vector<8x16xf32>, vector<16x32xf32>, vector<8x32xf32> -> vector<8x32xf32>
      %155 = arith.addf %146, %154 : vector<8x32xf32>
      %156 = vector.extract_strided_slice %150 {offsets = [1, 0], sizes = [8, 16], strides = [1, 1]} : vector<12x16xf32> to vector<8x16xf32>
      %c1_132 = arith.constant 1 : index
      %c0_133 = arith.constant 0 : index
      %c0_134 = arith.constant 0 : index
      %157 = vector.load %arg8[%c1_132, %c0_133, %c0_134] : memref<25x16x32xf32, #tpu.memory_space<vmem>>, vector<1x16x32xf32>
      %158 = vector.shape_cast %157 : vector<1x16x32xf32> to vector<16x32xf32>
      %cst_135 = arith.constant dense<0.000000e+00> : vector<8x32xf32>
      %159 = tpu.matmul %156, %158, %cst_135 {dimension_numbers = #tpu.dot_dimension_numbers<[1], [0], [0], [1], [0, 0, 1, 1], [], []>} : vector<8x16xf32>, vector<16x32xf32>, vector<8x32xf32> -> vector<8x32xf32>
      %160 = arith.addf %155, %159 : vector<8x32xf32>
      %161 = vector.extract_strided_slice %150 {offsets = [2, 0], sizes = [8, 16], strides = [1, 1]} : vector<12x16xf32> to vector<8x16xf32>
      %c2_136 = arith.constant 2 : index
      %c0_137 = arith.constant 0 : index
      %c0_138 = arith.constant 0 : index
      %162 = vector.load %arg8[%c2_136, %c0_137, %c0_138] : memref<25x16x32xf32, #tpu.memory_space<vmem>>, vector<1x16x32xf32>
      %163 = vector.shape_cast %162 : vector<1x16x32xf32> to vector<16x32xf32>
      %cst_139 = arith.constant dense<0.000000e+00> : vector<8x32xf32>
      %164 = tpu.matmul %161, %163, %cst_139 {dimension_numbers = #tpu.dot_dimension_numbers<[1], [0], [0], [1], [0, 0, 1, 1], [], []>} : vector<8x16xf32>, vector<16x32xf32>, vector<8x32xf32> -> vector<8x32xf32>
      %165 = arith.addf %160, %164 : vector<8x32xf32>
      %166 = vector.extract_strided_slice %150 {offsets = [3, 0], sizes = [8, 16], strides = [1, 1]} : vector<12x16xf32> to vector<8x16xf32>
      %c3_140 = arith.constant 3 : index
      %c0_141 = arith.constant 0 : index
      %c0_142 = arith.constant 0 : index
      %167 = vector.load %arg8[%c3_140, %c0_141, %c0_142] : memref<25x16x32xf32, #tpu.memory_space<vmem>>, vector<1x16x32xf32>
      %168 = vector.shape_cast %167 : vector<1x16x32xf32> to vector<16x32xf32>
      %cst_143 = arith.constant dense<0.000000e+00> : vector<8x32xf32>
      %169 = tpu.matmul %166, %168, %cst_143 {dimension_numbers = #tpu.dot_dimension_numbers<[1], [0], [0], [1], [0, 0, 1, 1], [], []>} : vector<8x16xf32>, vector<16x32xf32>, vector<8x32xf32> -> vector<8x32xf32>
      %170 = arith.addf %165, %169 : vector<8x32xf32>
      %171 = vector.extract_strided_slice %150 {offsets = [4, 0], sizes = [8, 16], strides = [1, 1]} : vector<12x16xf32> to vector<8x16xf32>
      %c4_144 = arith.constant 4 : index
      %c0_145 = arith.constant 0 : index
      %c0_146 = arith.constant 0 : index
      %172 = vector.load %arg8[%c4_144, %c0_145, %c0_146] : memref<25x16x32xf32, #tpu.memory_space<vmem>>, vector<1x16x32xf32>
      %173 = vector.shape_cast %172 : vector<1x16x32xf32> to vector<16x32xf32>
      %cst_147 = arith.constant dense<0.000000e+00> : vector<8x32xf32>
      %174 = tpu.matmul %171, %173, %cst_147 {dimension_numbers = #tpu.dot_dimension_numbers<[1], [0], [0], [1], [0, 0, 1, 1], [], []>} : vector<8x16xf32>, vector<16x32xf32>, vector<8x32xf32> -> vector<8x32xf32>
      %175 = arith.addf %170, %174 : vector<8x32xf32>
      %c1_i32_148 = arith.constant 1 : i32
      %176 = arith.addi %arg25, %c1_i32_148 : i32
      %177 = arith.index_cast %176 : i32 to index
      %c0_149 = arith.constant 0 : index
      %c0_150 = arith.constant 0 : index
      %178 = vector.load %arg20[%177, %c0_149, %c0_150] : memref<12x12x16xf32, #tpu.memory_space<vmem>>, vector<1x12x16xf32>
      %179 = vector.shape_cast %178 : vector<1x12x16xf32> to vector<12x16xf32>
      %180 = vector.extract_strided_slice %179 {offsets = [0, 0], sizes = [8, 16], strides = [1, 1]} : vector<12x16xf32> to vector<8x16xf32>
      %c5_151 = arith.constant 5 : index
      %c0_152 = arith.constant 0 : index
      %c0_153 = arith.constant 0 : index
      %181 = vector.load %arg8[%c5_151, %c0_152, %c0_153] : memref<25x16x32xf32, #tpu.memory_space<vmem>>, vector<1x16x32xf32>
      %182 = vector.shape_cast %181 : vector<1x16x32xf32> to vector<16x32xf32>
      %cst_154 = arith.constant dense<0.000000e+00> : vector<8x32xf32>
      %183 = tpu.matmul %180, %182, %cst_154 {dimension_numbers = #tpu.dot_dimension_numbers<[1], [0], [0], [1], [0, 0, 1, 1], [], []>} : vector<8x16xf32>, vector<16x32xf32>, vector<8x32xf32> -> vector<8x32xf32>
      %184 = arith.addf %175, %183 : vector<8x32xf32>
      %185 = vector.extract_strided_slice %179 {offsets = [1, 0], sizes = [8, 16], strides = [1, 1]} : vector<12x16xf32> to vector<8x16xf32>
      %c6_155 = arith.constant 6 : index
      %c0_156 = arith.constant 0 : index
      %c0_157 = arith.constant 0 : index
      %186 = vector.load %arg8[%c6_155, %c0_156, %c0_157] : memref<25x16x32xf32, #tpu.memory_space<vmem>>, vector<1x16x32xf32>
      %187 = vector.shape_cast %186 : vector<1x16x32xf32> to vector<16x32xf32>
      %cst_158 = arith.constant dense<0.000000e+00> : vector<8x32xf32>
      %188 = tpu.matmul %185, %187, %cst_158 {dimension_numbers = #tpu.dot_dimension_numbers<[1], [0], [0], [1], [0, 0, 1, 1], [], []>} : vector<8x16xf32>, vector<16x32xf32>, vector<8x32xf32> -> vector<8x32xf32>
      %189 = arith.addf %184, %188 : vector<8x32xf32>
      %190 = vector.extract_strided_slice %179 {offsets = [2, 0], sizes = [8, 16], strides = [1, 1]} : vector<12x16xf32> to vector<8x16xf32>
      %c7_159 = arith.constant 7 : index
      %c0_160 = arith.constant 0 : index
      %c0_161 = arith.constant 0 : index
      %191 = vector.load %arg8[%c7_159, %c0_160, %c0_161] : memref<25x16x32xf32, #tpu.memory_space<vmem>>, vector<1x16x32xf32>
      %192 = vector.shape_cast %191 : vector<1x16x32xf32> to vector<16x32xf32>
      %cst_162 = arith.constant dense<0.000000e+00> : vector<8x32xf32>
      %193 = tpu.matmul %190, %192, %cst_162 {dimension_numbers = #tpu.dot_dimension_numbers<[1], [0], [0], [1], [0, 0, 1, 1], [], []>} : vector<8x16xf32>, vector<16x32xf32>, vector<8x32xf32> -> vector<8x32xf32>
      %194 = arith.addf %189, %193 : vector<8x32xf32>
      %195 = vector.extract_strided_slice %179 {offsets = [3, 0], sizes = [8, 16], strides = [1, 1]} : vector<12x16xf32> to vector<8x16xf32>
      %c8_163 = arith.constant 8 : index
      %c0_164 = arith.constant 0 : index
      %c0_165 = arith.constant 0 : index
      %196 = vector.load %arg8[%c8_163, %c0_164, %c0_165] : memref<25x16x32xf32, #tpu.memory_space<vmem>>, vector<1x16x32xf32>
      %197 = vector.shape_cast %196 : vector<1x16x32xf32> to vector<16x32xf32>
      %cst_166 = arith.constant dense<0.000000e+00> : vector<8x32xf32>
      %198 = tpu.matmul %195, %197, %cst_166 {dimension_numbers = #tpu.dot_dimension_numbers<[1], [0], [0], [1], [0, 0, 1, 1], [], []>} : vector<8x16xf32>, vector<16x32xf32>, vector<8x32xf32> -> vector<8x32xf32>
      %199 = arith.addf %194, %198 : vector<8x32xf32>
      %200 = vector.extract_strided_slice %179 {offsets = [4, 0], sizes = [8, 16], strides = [1, 1]} : vector<12x16xf32> to vector<8x16xf32>
      %c9_167 = arith.constant 9 : index
      %c0_168 = arith.constant 0 : index
      %c0_169 = arith.constant 0 : index
      %201 = vector.load %arg8[%c9_167, %c0_168, %c0_169] : memref<25x16x32xf32, #tpu.memory_space<vmem>>, vector<1x16x32xf32>
      %202 = vector.shape_cast %201 : vector<1x16x32xf32> to vector<16x32xf32>
      %cst_170 = arith.constant dense<0.000000e+00> : vector<8x32xf32>
      %203 = tpu.matmul %200, %202, %cst_170 {dimension_numbers = #tpu.dot_dimension_numbers<[1], [0], [0], [1], [0, 0, 1, 1], [], []>} : vector<8x16xf32>, vector<16x32xf32>, vector<8x32xf32> -> vector<8x32xf32>
      %204 = arith.addf %199, %203 : vector<8x32xf32>
      %c2_i32_171 = arith.constant 2 : i32
      %205 = arith.addi %arg25, %c2_i32_171 : i32
      %206 = arith.index_cast %205 : i32 to index
      %c0_172 = arith.constant 0 : index
      %c0_173 = arith.constant 0 : index
      %207 = vector.load %arg20[%206, %c0_172, %c0_173] : memref<12x12x16xf32, #tpu.memory_space<vmem>>, vector<1x12x16xf32>
      %208 = vector.shape_cast %207 : vector<1x12x16xf32> to vector<12x16xf32>
      %209 = vector.extract_strided_slice %208 {offsets = [0, 0], sizes = [8, 16], strides = [1, 1]} : vector<12x16xf32> to vector<8x16xf32>
      %c10_174 = arith.constant 10 : index
      %c0_175 = arith.constant 0 : index
      %c0_176 = arith.constant 0 : index
      %210 = vector.load %arg8[%c10_174, %c0_175, %c0_176] : memref<25x16x32xf32, #tpu.memory_space<vmem>>, vector<1x16x32xf32>
      %211 = vector.shape_cast %210 : vector<1x16x32xf32> to vector<16x32xf32>
      %cst_177 = arith.constant dense<0.000000e+00> : vector<8x32xf32>
      %212 = tpu.matmul %209, %211, %cst_177 {dimension_numbers = #tpu.dot_dimension_numbers<[1], [0], [0], [1], [0, 0, 1, 1], [], []>} : vector<8x16xf32>, vector<16x32xf32>, vector<8x32xf32> -> vector<8x32xf32>
      %213 = arith.addf %204, %212 : vector<8x32xf32>
      %214 = vector.extract_strided_slice %208 {offsets = [1, 0], sizes = [8, 16], strides = [1, 1]} : vector<12x16xf32> to vector<8x16xf32>
      %c11_178 = arith.constant 11 : index
      %c0_179 = arith.constant 0 : index
      %c0_180 = arith.constant 0 : index
      %215 = vector.load %arg8[%c11_178, %c0_179, %c0_180] : memref<25x16x32xf32, #tpu.memory_space<vmem>>, vector<1x16x32xf32>
      %216 = vector.shape_cast %215 : vector<1x16x32xf32> to vector<16x32xf32>
      %cst_181 = arith.constant dense<0.000000e+00> : vector<8x32xf32>
      %217 = tpu.matmul %214, %216, %cst_181 {dimension_numbers = #tpu.dot_dimension_numbers<[1], [0], [0], [1], [0, 0, 1, 1], [], []>} : vector<8x16xf32>, vector<16x32xf32>, vector<8x32xf32> -> vector<8x32xf32>
      %218 = arith.addf %213, %217 : vector<8x32xf32>
      %219 = vector.extract_strided_slice %208 {offsets = [2, 0], sizes = [8, 16], strides = [1, 1]} : vector<12x16xf32> to vector<8x16xf32>
      %c12_182 = arith.constant 12 : index
      %c0_183 = arith.constant 0 : index
      %c0_184 = arith.constant 0 : index
      %220 = vector.load %arg8[%c12_182, %c0_183, %c0_184] : memref<25x16x32xf32, #tpu.memory_space<vmem>>, vector<1x16x32xf32>
      %221 = vector.shape_cast %220 : vector<1x16x32xf32> to vector<16x32xf32>
      %cst_185 = arith.constant dense<0.000000e+00> : vector<8x32xf32>
      %222 = tpu.matmul %219, %221, %cst_185 {dimension_numbers = #tpu.dot_dimension_numbers<[1], [0], [0], [1], [0, 0, 1, 1], [], []>} : vector<8x16xf32>, vector<16x32xf32>, vector<8x32xf32> -> vector<8x32xf32>
      %223 = arith.addf %218, %222 : vector<8x32xf32>
      %224 = vector.extract_strided_slice %208 {offsets = [3, 0], sizes = [8, 16], strides = [1, 1]} : vector<12x16xf32> to vector<8x16xf32>
      %c13_186 = arith.constant 13 : index
      %c0_187 = arith.constant 0 : index
      %c0_188 = arith.constant 0 : index
      %225 = vector.load %arg8[%c13_186, %c0_187, %c0_188] : memref<25x16x32xf32, #tpu.memory_space<vmem>>, vector<1x16x32xf32>
      %226 = vector.shape_cast %225 : vector<1x16x32xf32> to vector<16x32xf32>
      %cst_189 = arith.constant dense<0.000000e+00> : vector<8x32xf32>
      %227 = tpu.matmul %224, %226, %cst_189 {dimension_numbers = #tpu.dot_dimension_numbers<[1], [0], [0], [1], [0, 0, 1, 1], [], []>} : vector<8x16xf32>, vector<16x32xf32>, vector<8x32xf32> -> vector<8x32xf32>
      %228 = arith.addf %223, %227 : vector<8x32xf32>
      %229 = vector.extract_strided_slice %208 {offsets = [4, 0], sizes = [8, 16], strides = [1, 1]} : vector<12x16xf32> to vector<8x16xf32>
      %c14_190 = arith.constant 14 : index
      %c0_191 = arith.constant 0 : index
      %c0_192 = arith.constant 0 : index
      %230 = vector.load %arg8[%c14_190, %c0_191, %c0_192] : memref<25x16x32xf32, #tpu.memory_space<vmem>>, vector<1x16x32xf32>
      %231 = vector.shape_cast %230 : vector<1x16x32xf32> to vector<16x32xf32>
      %cst_193 = arith.constant dense<0.000000e+00> : vector<8x32xf32>
      %232 = tpu.matmul %229, %231, %cst_193 {dimension_numbers = #tpu.dot_dimension_numbers<[1], [0], [0], [1], [0, 0, 1, 1], [], []>} : vector<8x16xf32>, vector<16x32xf32>, vector<8x32xf32> -> vector<8x32xf32>
      %233 = arith.addf %228, %232 : vector<8x32xf32>
      %c3_i32 = arith.constant 3 : i32
      %234 = arith.addi %arg25, %c3_i32 : i32
      %235 = arith.index_cast %234 : i32 to index
      %c0_194 = arith.constant 0 : index
      %c0_195 = arith.constant 0 : index
      %236 = vector.load %arg20[%235, %c0_194, %c0_195] : memref<12x12x16xf32, #tpu.memory_space<vmem>>, vector<1x12x16xf32>
      %237 = vector.shape_cast %236 : vector<1x12x16xf32> to vector<12x16xf32>
      %238 = vector.extract_strided_slice %237 {offsets = [0, 0], sizes = [8, 16], strides = [1, 1]} : vector<12x16xf32> to vector<8x16xf32>
      %c15_196 = arith.constant 15 : index
      %c0_197 = arith.constant 0 : index
      %c0_198 = arith.constant 0 : index
      %239 = vector.load %arg8[%c15_196, %c0_197, %c0_198] : memref<25x16x32xf32, #tpu.memory_space<vmem>>, vector<1x16x32xf32>
      %240 = vector.shape_cast %239 : vector<1x16x32xf32> to vector<16x32xf32>
      %cst_199 = arith.constant dense<0.000000e+00> : vector<8x32xf32>
      %241 = tpu.matmul %238, %240, %cst_199 {dimension_numbers = #tpu.dot_dimension_numbers<[1], [0], [0], [1], [0, 0, 1, 1], [], []>} : vector<8x16xf32>, vector<16x32xf32>, vector<8x32xf32> -> vector<8x32xf32>
      %242 = arith.addf %233, %241 : vector<8x32xf32>
      %243 = vector.extract_strided_slice %237 {offsets = [1, 0], sizes = [8, 16], strides = [1, 1]} : vector<12x16xf32> to vector<8x16xf32>
      %c16 = arith.constant 16 : index
      %c0_200 = arith.constant 0 : index
      %c0_201 = arith.constant 0 : index
      %244 = vector.load %arg8[%c16, %c0_200, %c0_201] : memref<25x16x32xf32, #tpu.memory_space<vmem>>, vector<1x16x32xf32>
      %245 = vector.shape_cast %244 : vector<1x16x32xf32> to vector<16x32xf32>
      %cst_202 = arith.constant dense<0.000000e+00> : vector<8x32xf32>
      %246 = tpu.matmul %243, %245, %cst_202 {dimension_numbers = #tpu.dot_dimension_numbers<[1], [0], [0], [1], [0, 0, 1, 1], [], []>} : vector<8x16xf32>, vector<16x32xf32>, vector<8x32xf32> -> vector<8x32xf32>
      %247 = arith.addf %242, %246 : vector<8x32xf32>
      %248 = vector.extract_strided_slice %237 {offsets = [2, 0], sizes = [8, 16], strides = [1, 1]} : vector<12x16xf32> to vector<8x16xf32>
      %c17 = arith.constant 17 : index
      %c0_203 = arith.constant 0 : index
      %c0_204 = arith.constant 0 : index
      %249 = vector.load %arg8[%c17, %c0_203, %c0_204] : memref<25x16x32xf32, #tpu.memory_space<vmem>>, vector<1x16x32xf32>
      %250 = vector.shape_cast %249 : vector<1x16x32xf32> to vector<16x32xf32>
      %cst_205 = arith.constant dense<0.000000e+00> : vector<8x32xf32>
      %251 = tpu.matmul %248, %250, %cst_205 {dimension_numbers = #tpu.dot_dimension_numbers<[1], [0], [0], [1], [0, 0, 1, 1], [], []>} : vector<8x16xf32>, vector<16x32xf32>, vector<8x32xf32> -> vector<8x32xf32>
      %252 = arith.addf %247, %251 : vector<8x32xf32>
      %253 = vector.extract_strided_slice %237 {offsets = [3, 0], sizes = [8, 16], strides = [1, 1]} : vector<12x16xf32> to vector<8x16xf32>
      %c18 = arith.constant 18 : index
      %c0_206 = arith.constant 0 : index
      %c0_207 = arith.constant 0 : index
      %254 = vector.load %arg8[%c18, %c0_206, %c0_207] : memref<25x16x32xf32, #tpu.memory_space<vmem>>, vector<1x16x32xf32>
      %255 = vector.shape_cast %254 : vector<1x16x32xf32> to vector<16x32xf32>
      %cst_208 = arith.constant dense<0.000000e+00> : vector<8x32xf32>
      %256 = tpu.matmul %253, %255, %cst_208 {dimension_numbers = #tpu.dot_dimension_numbers<[1], [0], [0], [1], [0, 0, 1, 1], [], []>} : vector<8x16xf32>, vector<16x32xf32>, vector<8x32xf32> -> vector<8x32xf32>
      %257 = arith.addf %252, %256 : vector<8x32xf32>
      %258 = vector.extract_strided_slice %237 {offsets = [4, 0], sizes = [8, 16], strides = [1, 1]} : vector<12x16xf32> to vector<8x16xf32>
      %c19 = arith.constant 19 : index
      %c0_209 = arith.constant 0 : index
      %c0_210 = arith.constant 0 : index
      %259 = vector.load %arg8[%c19, %c0_209, %c0_210] : memref<25x16x32xf32, #tpu.memory_space<vmem>>, vector<1x16x32xf32>
      %260 = vector.shape_cast %259 : vector<1x16x32xf32> to vector<16x32xf32>
      %cst_211 = arith.constant dense<0.000000e+00> : vector<8x32xf32>
      %261 = tpu.matmul %258, %260, %cst_211 {dimension_numbers = #tpu.dot_dimension_numbers<[1], [0], [0], [1], [0, 0, 1, 1], [], []>} : vector<8x16xf32>, vector<16x32xf32>, vector<8x32xf32> -> vector<8x32xf32>
      %262 = arith.addf %257, %261 : vector<8x32xf32>
      %c4_i32_212 = arith.constant 4 : i32
      %263 = arith.addi %arg25, %c4_i32_212 : i32
      %264 = arith.index_cast %263 : i32 to index
      %c0_213 = arith.constant 0 : index
      %c0_214 = arith.constant 0 : index
      %265 = vector.load %arg20[%264, %c0_213, %c0_214] : memref<12x12x16xf32, #tpu.memory_space<vmem>>, vector<1x12x16xf32>
      %266 = vector.shape_cast %265 : vector<1x12x16xf32> to vector<12x16xf32>
      %267 = vector.extract_strided_slice %266 {offsets = [0, 0], sizes = [8, 16], strides = [1, 1]} : vector<12x16xf32> to vector<8x16xf32>
      %c20 = arith.constant 20 : index
      %c0_215 = arith.constant 0 : index
      %c0_216 = arith.constant 0 : index
      %268 = vector.load %arg8[%c20, %c0_215, %c0_216] : memref<25x16x32xf32, #tpu.memory_space<vmem>>, vector<1x16x32xf32>
      %269 = vector.shape_cast %268 : vector<1x16x32xf32> to vector<16x32xf32>
      %cst_217 = arith.constant dense<0.000000e+00> : vector<8x32xf32>
      %270 = tpu.matmul %267, %269, %cst_217 {dimension_numbers = #tpu.dot_dimension_numbers<[1], [0], [0], [1], [0, 0, 1, 1], [], []>} : vector<8x16xf32>, vector<16x32xf32>, vector<8x32xf32> -> vector<8x32xf32>
      %271 = arith.addf %262, %270 : vector<8x32xf32>
      %272 = vector.extract_strided_slice %266 {offsets = [1, 0], sizes = [8, 16], strides = [1, 1]} : vector<12x16xf32> to vector<8x16xf32>
      %c21 = arith.constant 21 : index
      %c0_218 = arith.constant 0 : index
      %c0_219 = arith.constant 0 : index
      %273 = vector.load %arg8[%c21, %c0_218, %c0_219] : memref<25x16x32xf32, #tpu.memory_space<vmem>>, vector<1x16x32xf32>
      %274 = vector.shape_cast %273 : vector<1x16x32xf32> to vector<16x32xf32>
      %cst_220 = arith.constant dense<0.000000e+00> : vector<8x32xf32>
      %275 = tpu.matmul %272, %274, %cst_220 {dimension_numbers = #tpu.dot_dimension_numbers<[1], [0], [0], [1], [0, 0, 1, 1], [], []>} : vector<8x16xf32>, vector<16x32xf32>, vector<8x32xf32> -> vector<8x32xf32>
      %276 = arith.addf %271, %275 : vector<8x32xf32>
      %277 = vector.extract_strided_slice %266 {offsets = [2, 0], sizes = [8, 16], strides = [1, 1]} : vector<12x16xf32> to vector<8x16xf32>
      %c22 = arith.constant 22 : index
      %c0_221 = arith.constant 0 : index
      %c0_222 = arith.constant 0 : index
      %278 = vector.load %arg8[%c22, %c0_221, %c0_222] : memref<25x16x32xf32, #tpu.memory_space<vmem>>, vector<1x16x32xf32>
      %279 = vector.shape_cast %278 : vector<1x16x32xf32> to vector<16x32xf32>
      %cst_223 = arith.constant dense<0.000000e+00> : vector<8x32xf32>
      %280 = tpu.matmul %277, %279, %cst_223 {dimension_numbers = #tpu.dot_dimension_numbers<[1], [0], [0], [1], [0, 0, 1, 1], [], []>} : vector<8x16xf32>, vector<16x32xf32>, vector<8x32xf32> -> vector<8x32xf32>
      %281 = arith.addf %276, %280 : vector<8x32xf32>
      %282 = vector.extract_strided_slice %266 {offsets = [3, 0], sizes = [8, 16], strides = [1, 1]} : vector<12x16xf32> to vector<8x16xf32>
      %c23 = arith.constant 23 : index
      %c0_224 = arith.constant 0 : index
      %c0_225 = arith.constant 0 : index
      %283 = vector.load %arg8[%c23, %c0_224, %c0_225] : memref<25x16x32xf32, #tpu.memory_space<vmem>>, vector<1x16x32xf32>
      %284 = vector.shape_cast %283 : vector<1x16x32xf32> to vector<16x32xf32>
      %cst_226 = arith.constant dense<0.000000e+00> : vector<8x32xf32>
      %285 = tpu.matmul %282, %284, %cst_226 {dimension_numbers = #tpu.dot_dimension_numbers<[1], [0], [0], [1], [0, 0, 1, 1], [], []>} : vector<8x16xf32>, vector<16x32xf32>, vector<8x32xf32> -> vector<8x32xf32>
      %286 = arith.addf %281, %285 : vector<8x32xf32>
      %287 = vector.extract_strided_slice %266 {offsets = [4, 0], sizes = [8, 16], strides = [1, 1]} : vector<12x16xf32> to vector<8x16xf32>
      %c24 = arith.constant 24 : index
      %c0_227 = arith.constant 0 : index
      %c0_228 = arith.constant 0 : index
      %288 = vector.load %arg8[%c24, %c0_227, %c0_228] : memref<25x16x32xf32, #tpu.memory_space<vmem>>, vector<1x16x32xf32>
      %289 = vector.shape_cast %288 : vector<1x16x32xf32> to vector<16x32xf32>
      %cst_229 = arith.constant dense<0.000000e+00> : vector<8x32xf32>
      %290 = tpu.matmul %287, %289, %cst_229 {dimension_numbers = #tpu.dot_dimension_numbers<[1], [0], [0], [1], [0, 0, 1, 1], [], []>} : vector<8x16xf32>, vector<16x32xf32>, vector<8x32xf32> -> vector<8x32xf32>
      %291 = arith.addf %286, %290 : vector<8x32xf32>
      %292 = arith.index_cast %arg25 : i32 to index
      %c0_230 = arith.constant 0 : index
      %c0_231 = arith.constant 0 : index
      %293 = vector.load %arg21[%292, %c0_230, %c0_231] : memref<8x8x32xf32, #tpu.memory_space<vmem>>, vector<1x8x32xf32>
      %294 = vector.shape_cast %293 : vector<1x8x32xf32> to vector<8x32xf32>
      %295 = vector.shape_cast %291 : vector<8x32xf32> to vector<1x8x32xf32>
      tpu.vector_store %arg21[%292, %c0_230, %c0_231], %295 {strides = array<i32>} : memref<8x8x32xf32, #tpu.memory_space<vmem>>, vector<1x8x32xf32>,
    }
    %c8_i32_38 = arith.constant 8 : i32
    %31 = tpu.iota {dimensions = array<i32: 0>} : vector<4x8xi32>
    %32 = tpu.iota {dimensions = array<i32: 1>} : vector<4x8xi32>
    %c2_i32_39 = arith.constant 2 : i32
    %33 = vector.broadcast %c2_i32_39 : i32 to vector<4x8xi32>
    %34 = arith.muli %33, %31 : vector<4x8xi32>
    %35 = arith.cmpi eq, %32, %34 : vector<4x8xi32>
    %36 = arith.extui %35 : vector<4x8xi1> to vector<4x8xi32>
    %37 = arith.sitofp %36 : vector<4x8xi32> to vector<4x8xf32>
    %c2_i32_40 = arith.constant 2 : i32
    %38 = vector.broadcast %c2_i32_40 : i32 to vector<4x8xi32>
    %39 = arith.muli %38, %31 : vector<4x8xi32>
    %c1_i32_41 = arith.constant 1 : i32
    %40 = vector.broadcast %c1_i32_41 : i32 to vector<4x8xi32>
    %41 = arith.addi %39, %40 : vector<4x8xi32>
    %42 = arith.cmpi eq, %32, %41 : vector<4x8xi32>
    %43 = arith.extui %42 : vector<4x8xi1> to vector<4x8xi32>
    %44 = arith.sitofp %43 : vector<4x8xi32> to vector<4x8xf32>
    %c0_i32_42 = arith.constant 0 : i32
    %c4_i32 = arith.constant 4 : i32
    %45 = arith.addi %c0_i32_42, %c4_i32 : i32
    %c1_i32_43 = arith.constant 1 : i32
    scf.for %arg25 = %c0_i32_42 to %45 step %c1_i32_43  : i32 {
      %c2_i32_124 = arith.constant 2 : i32
      %144 = arith.muli %c2_i32_124, %arg25 : i32
      %145 = arith.index_cast %144 : i32 to index
      %c0_125 = arith.constant 0 : index
      %c0_126 = arith.constant 0 : index
      %146 = vector.load %arg21[%145, %c0_125, %c0_126] : memref<8x8x32xf32, #tpu.memory_space<vmem>>, vector<1x8x32xf32>
      %147 = vector.shape_cast %146 : vector<1x8x32xf32> to vector<8x32xf32>
      %c2_i32_127 = arith.constant 2 : i32
      %148 = arith.muli %c2_i32_127, %arg25 : i32
      %c1_i32_128 = arith.constant 1 : i32
      %149 = arith.addi %148, %c1_i32_128 : i32
      %150 = arith.index_cast %149 : i32 to index
      %c0_129 = arith.constant 0 : index
      %c0_130 = arith.constant 0 : index
      %151 = vector.load %arg21[%150, %c0_129, %c0_130] : memref<8x8x32xf32, #tpu.memory_space<vmem>>, vector<1x8x32xf32>
      %152 = vector.shape_cast %151 : vector<1x8x32xf32> to vector<8x32xf32>
      %153 = arith.maximumf %147, %152 : vector<8x32xf32>
      %cst_131 = arith.constant dense<0.000000e+00> : vector<4x32xf32>
      %154 = tpu.matmul %37, %153, %cst_131 {dimension_numbers = #tpu.dot_dimension_numbers<[1], [0], [0], [1], [0, 0, 1, 1], [], []>} : vector<4x8xf32>, vector<8x32xf32>, vector<4x32xf32> -> vector<4x32xf32>
      %cst_132 = arith.constant dense<0.000000e+00> : vector<4x32xf32>
      %155 = tpu.matmul %44, %153, %cst_132 {dimension_numbers = #tpu.dot_dimension_numbers<[1], [0], [0], [1], [0, 0, 1, 1], [], []>} : vector<4x8xf32>, vector<8x32xf32>, vector<4x32xf32> -> vector<4x32xf32>
      %156 = arith.maximumf %154, %155 : vector<4x32xf32>
      %cst_133 = arith.constant 0.000000e+00 : f32
      %157 = vector.broadcast %cst_133 : f32 to vector<4x32xf32>
      %158 = arith.maximumf %156, %157 : vector<4x32xf32>
      %c1_i32_134 = arith.constant 1 : i32
      %159 = arith.addi %arg25, %c1_i32_134 : i32
      %160 = arith.index_cast %159 : i32 to index
      %c1_135 = arith.constant 1 : index
      %c0_136 = arith.constant 0 : index
      %161 = vector.load %arg22[%160, %c1_135, %c0_136] : memref<6x6x32xf32, #tpu.memory_space<vmem>>, vector<1x4x32xf32>
      %162 = vector.shape_cast %161 : vector<1x4x32xf32> to vector<4x32xf32>
      %163 = vector.shape_cast %158 : vector<4x32xf32> to vector<1x4x32xf32>
      tpu.vector_store %arg22[%160, %c1_135, %c0_136], %163 {strides = array<i32>} : memref<6x6x32xf32, #tpu.memory_space<vmem>>, vector<1x4x32xf32>,
    }
    %c4_i32_44 = arith.constant 4 : i32
    %c0_45 = arith.constant 0 : index
    %c0_46 = arith.constant 0 : index
    %46 = vector.load %arg11[%c0_45, %c0_46] : memref<1x32xf32, #tpu.memory_space<vmem>>, vector<1x32xf32>
    %c0_i32_47 = arith.constant 0 : i32
    %c4_i32_48 = arith.constant 4 : i32
    %47 = arith.addi %c0_i32_47, %c4_i32_48 : i32
    %c1_i32_49 = arith.constant 1 : i32
    scf.for %arg25 = %c0_i32_47 to %47 step %c1_i32_49  : i32 {
      %cst_124 = arith.constant 0.000000e+00 : f32
      %144 = vector.broadcast %cst_124 : f32 to vector<4x32xf32>
      %145 = vector.broadcast %46 : vector<1x32xf32> to vector<4x32xf32>
      %146 = arith.addf %144, %145 : vector<4x32xf32>
      %c0_i32_125 = arith.constant 0 : i32
      %147 = arith.addi %arg25, %c0_i32_125 : i32
      %148 = arith.index_cast %147 : i32 to index
      %c0_126 = arith.constant 0 : index
      %c0_127 = arith.constant 0 : index
      %149 = vector.load %arg22[%148, %c0_126, %c0_127] : memref<6x6x32xf32, #tpu.memory_space<vmem>>, vector<1x6x32xf32>
      %150 = vector.shape_cast %149 : vector<1x6x32xf32> to vector<6x32xf32>
      %151 = vector.extract_strided_slice %150 {offsets = [0, 0], sizes = [4, 32], strides = [1, 1]} : vector<6x32xf32> to vector<4x32xf32>
      %c0_128 = arith.constant 0 : index
      %c0_129 = arith.constant 0 : index
      %c0_130 = arith.constant 0 : index
      %152 = vector.load %arg10[%c0_128, %c0_129, %c0_130] : memref<9x32x32xf32, #tpu.memory_space<vmem>>, vector<1x32x32xf32>
      %153 = vector.shape_cast %152 : vector<1x32x32xf32> to vector<32x32xf32>
      %cst_131 = arith.constant dense<0.000000e+00> : vector<4x32xf32>
      %154 = tpu.matmul %151, %153, %cst_131 {dimension_numbers = #tpu.dot_dimension_numbers<[1], [0], [0], [1], [0, 0, 1, 1], [], []>} : vector<4x32xf32>, vector<32x32xf32>, vector<4x32xf32> -> vector<4x32xf32>
      %155 = arith.addf %146, %154 : vector<4x32xf32>
      %156 = vector.extract_strided_slice %150 {offsets = [1, 0], sizes = [4, 32], strides = [1, 1]} : vector<6x32xf32> to vector<4x32xf32>
      %c1_132 = arith.constant 1 : index
      %c0_133 = arith.constant 0 : index
      %c0_134 = arith.constant 0 : index
      %157 = vector.load %arg10[%c1_132, %c0_133, %c0_134] : memref<9x32x32xf32, #tpu.memory_space<vmem>>, vector<1x32x32xf32>
      %158 = vector.shape_cast %157 : vector<1x32x32xf32> to vector<32x32xf32>
      %cst_135 = arith.constant dense<0.000000e+00> : vector<4x32xf32>
      %159 = tpu.matmul %156, %158, %cst_135 {dimension_numbers = #tpu.dot_dimension_numbers<[1], [0], [0], [1], [0, 0, 1, 1], [], []>} : vector<4x32xf32>, vector<32x32xf32>, vector<4x32xf32> -> vector<4x32xf32>
      %160 = arith.addf %155, %159 : vector<4x32xf32>
      %161 = vector.extract_strided_slice %150 {offsets = [2, 0], sizes = [4, 32], strides = [1, 1]} : vector<6x32xf32> to vector<4x32xf32>
      %c2_136 = arith.constant 2 : index
      %c0_137 = arith.constant 0 : index
      %c0_138 = arith.constant 0 : index
      %162 = vector.load %arg10[%c2_136, %c0_137, %c0_138] : memref<9x32x32xf32, #tpu.memory_space<vmem>>, vector<1x32x32xf32>
      %163 = vector.shape_cast %162 : vector<1x32x32xf32> to vector<32x32xf32>
      %cst_139 = arith.constant dense<0.000000e+00> : vector<4x32xf32>
      %164 = tpu.matmul %161, %163, %cst_139 {dimension_numbers = #tpu.dot_dimension_numbers<[1], [0], [0], [1], [0, 0, 1, 1], [], []>} : vector<4x32xf32>, vector<32x32xf32>, vector<4x32xf32> -> vector<4x32xf32>
      %165 = arith.addf %160, %164 : vector<4x32xf32>
      %c1_i32_140 = arith.constant 1 : i32
      %166 = arith.addi %arg25, %c1_i32_140 : i32
      %167 = arith.index_cast %166 : i32 to index
      %c0_141 = arith.constant 0 : index
      %c0_142 = arith.constant 0 : index
      %168 = vector.load %arg22[%167, %c0_141, %c0_142] : memref<6x6x32xf32, #tpu.memory_space<vmem>>, vector<1x6x32xf32>
      %169 = vector.shape_cast %168 : vector<1x6x32xf32> to vector<6x32xf32>
      %170 = vector.extract_strided_slice %169 {offsets = [0, 0], sizes = [4, 32], strides = [1, 1]} : vector<6x32xf32> to vector<4x32xf32>
      %c3_143 = arith.constant 3 : index
      %c0_144 = arith.constant 0 : index
      %c0_145 = arith.constant 0 : index
      %171 = vector.load %arg10[%c3_143, %c0_144, %c0_145] : memref<9x32x32xf32, #tpu.memory_space<vmem>>, vector<1x32x32xf32>
      %172 = vector.shape_cast %171 : vector<1x32x32xf32> to vector<32x32xf32>
      %cst_146 = arith.constant dense<0.000000e+00> : vector<4x32xf32>
      %173 = tpu.matmul %170, %172, %cst_146 {dimension_numbers = #tpu.dot_dimension_numbers<[1], [0], [0], [1], [0, 0, 1, 1], [], []>} : vector<4x32xf32>, vector<32x32xf32>, vector<4x32xf32> -> vector<4x32xf32>
      %174 = arith.addf %165, %173 : vector<4x32xf32>
      %175 = vector.extract_strided_slice %169 {offsets = [1, 0], sizes = [4, 32], strides = [1, 1]} : vector<6x32xf32> to vector<4x32xf32>
      %c4_147 = arith.constant 4 : index
      %c0_148 = arith.constant 0 : index
      %c0_149 = arith.constant 0 : index
      %176 = vector.load %arg10[%c4_147, %c0_148, %c0_149] : memref<9x32x32xf32, #tpu.memory_space<vmem>>, vector<1x32x32xf32>
      %177 = vector.shape_cast %176 : vector<1x32x32xf32> to vector<32x32xf32>
      %cst_150 = arith.constant dense<0.000000e+00> : vector<4x32xf32>
      %178 = tpu.matmul %175, %177, %cst_150 {dimension_numbers = #tpu.dot_dimension_numbers<[1], [0], [0], [1], [0, 0, 1, 1], [], []>} : vector<4x32xf32>, vector<32x32xf32>, vector<4x32xf32> -> vector<4x32xf32>
      %179 = arith.addf %174, %178 : vector<4x32xf32>
      %180 = vector.extract_strided_slice %169 {offsets = [2, 0], sizes = [4, 32], strides = [1, 1]} : vector<6x32xf32> to vector<4x32xf32>
      %c5_151 = arith.constant 5 : index
      %c0_152 = arith.constant 0 : index
      %c0_153 = arith.constant 0 : index
      %181 = vector.load %arg10[%c5_151, %c0_152, %c0_153] : memref<9x32x32xf32, #tpu.memory_space<vmem>>, vector<1x32x32xf32>
      %182 = vector.shape_cast %181 : vector<1x32x32xf32> to vector<32x32xf32>
      %cst_154 = arith.constant dense<0.000000e+00> : vector<4x32xf32>
      %183 = tpu.matmul %180, %182, %cst_154 {dimension_numbers = #tpu.dot_dimension_numbers<[1], [0], [0], [1], [0, 0, 1, 1], [], []>} : vector<4x32xf32>, vector<32x32xf32>, vector<4x32xf32> -> vector<4x32xf32>
      %184 = arith.addf %179, %183 : vector<4x32xf32>
      %c2_i32_155 = arith.constant 2 : i32
      %185 = arith.addi %arg25, %c2_i32_155 : i32
      %186 = arith.index_cast %185 : i32 to index
      %c0_156 = arith.constant 0 : index
      %c0_157 = arith.constant 0 : index
      %187 = vector.load %arg22[%186, %c0_156, %c0_157] : memref<6x6x32xf32, #tpu.memory_space<vmem>>, vector<1x6x32xf32>
      %188 = vector.shape_cast %187 : vector<1x6x32xf32> to vector<6x32xf32>
      %189 = vector.extract_strided_slice %188 {offsets = [0, 0], sizes = [4, 32], strides = [1, 1]} : vector<6x32xf32> to vector<4x32xf32>
      %c6_158 = arith.constant 6 : index
      %c0_159 = arith.constant 0 : index
      %c0_160 = arith.constant 0 : index
      %190 = vector.load %arg10[%c6_158, %c0_159, %c0_160] : memref<9x32x32xf32, #tpu.memory_space<vmem>>, vector<1x32x32xf32>
      %191 = vector.shape_cast %190 : vector<1x32x32xf32> to vector<32x32xf32>
      %cst_161 = arith.constant dense<0.000000e+00> : vector<4x32xf32>
      %192 = tpu.matmul %189, %191, %cst_161 {dimension_numbers = #tpu.dot_dimension_numbers<[1], [0], [0], [1], [0, 0, 1, 1], [], []>} : vector<4x32xf32>, vector<32x32xf32>, vector<4x32xf32> -> vector<4x32xf32>
      %193 = arith.addf %184, %192 : vector<4x32xf32>
      %194 = vector.extract_strided_slice %188 {offsets = [1, 0], sizes = [4, 32], strides = [1, 1]} : vector<6x32xf32> to vector<4x32xf32>
      %c7_162 = arith.constant 7 : index
      %c0_163 = arith.constant 0 : index
      %c0_164 = arith.constant 0 : index
      %195 = vector.load %arg10[%c7_162, %c0_163, %c0_164] : memref<9x32x32xf32, #tpu.memory_space<vmem>>, vector<1x32x32xf32>
      %196 = vector.shape_cast %195 : vector<1x32x32xf32> to vector<32x32xf32>
      %cst_165 = arith.constant dense<0.000000e+00> : vector<4x32xf32>
      %197 = tpu.matmul %194, %196, %cst_165 {dimension_numbers = #tpu.dot_dimension_numbers<[1], [0], [0], [1], [0, 0, 1, 1], [], []>} : vector<4x32xf32>, vector<32x32xf32>, vector<4x32xf32> -> vector<4x32xf32>
      %198 = arith.addf %193, %197 : vector<4x32xf32>
      %199 = vector.extract_strided_slice %188 {offsets = [2, 0], sizes = [4, 32], strides = [1, 1]} : vector<6x32xf32> to vector<4x32xf32>
      %c8_166 = arith.constant 8 : index
      %c0_167 = arith.constant 0 : index
      %c0_168 = arith.constant 0 : index
      %200 = vector.load %arg10[%c8_166, %c0_167, %c0_168] : memref<9x32x32xf32, #tpu.memory_space<vmem>>, vector<1x32x32xf32>
      %201 = vector.shape_cast %200 : vector<1x32x32xf32> to vector<32x32xf32>
      %cst_169 = arith.constant dense<0.000000e+00> : vector<4x32xf32>
      %202 = tpu.matmul %199, %201, %cst_169 {dimension_numbers = #tpu.dot_dimension_numbers<[1], [0], [0], [1], [0, 0, 1, 1], [], []>} : vector<4x32xf32>, vector<32x32xf32>, vector<4x32xf32> -> vector<4x32xf32>
      %203 = arith.addf %198, %202 : vector<4x32xf32>
      %cst_170 = arith.constant 0.000000e+00 : f32
      %204 = vector.broadcast %cst_170 : f32 to vector<4x32xf32>
      %205 = arith.maximumf %203, %204 : vector<4x32xf32>
      %c1_i32_171 = arith.constant 1 : i32
      %206 = arith.addi %arg25, %c1_i32_171 : i32
      %207 = arith.index_cast %206 : i32 to index
      %c1_172 = arith.constant 1 : index
      %c0_173 = arith.constant 0 : index
      %208 = vector.load %arg23[%207, %c1_172, %c0_173] : memref<6x6x32xf32, #tpu.memory_space<vmem>>, vector<1x4x32xf32>
      %209 = vector.shape_cast %208 : vector<1x4x32xf32> to vector<4x32xf32>
      %210 = vector.shape_cast %205 : vector<4x32xf32> to vector<1x4x32xf32>
      tpu.vector_store %arg23[%207, %c1_172, %c0_173], %210 {strides = array<i32>} : memref<6x6x32xf32, #tpu.memory_space<vmem>>, vector<1x4x32xf32>,
    }
    %c4_i32_50 = arith.constant 4 : i32
    %c0_51 = arith.constant 0 : index
    %c0_52 = arith.constant 0 : index
    %48 = vector.load %arg13[%c0_51, %c0_52] : memref<1x32xf32, #tpu.memory_space<vmem>>, vector<1x32xf32>
    %c0_i32_53 = arith.constant 0 : i32
    %c4_i32_54 = arith.constant 4 : i32
    %49 = arith.addi %c0_i32_53, %c4_i32_54 : i32
    %c1_i32_55 = arith.constant 1 : i32
    scf.for %arg25 = %c0_i32_53 to %49 step %c1_i32_55  : i32 {
      %cst_124 = arith.constant 0.000000e+00 : f32
      %144 = vector.broadcast %cst_124 : f32 to vector<4x32xf32>
      %145 = vector.broadcast %48 : vector<1x32xf32> to vector<4x32xf32>
      %146 = arith.addf %144, %145 : vector<4x32xf32>
      %c0_i32_125 = arith.constant 0 : i32
      %147 = arith.addi %arg25, %c0_i32_125 : i32
      %148 = arith.index_cast %147 : i32 to index
      %c0_126 = arith.constant 0 : index
      %c0_127 = arith.constant 0 : index
      %149 = vector.load %arg23[%148, %c0_126, %c0_127] : memref<6x6x32xf32, #tpu.memory_space<vmem>>, vector<1x6x32xf32>
      %150 = vector.shape_cast %149 : vector<1x6x32xf32> to vector<6x32xf32>
      %151 = vector.extract_strided_slice %150 {offsets = [0, 0], sizes = [4, 32], strides = [1, 1]} : vector<6x32xf32> to vector<4x32xf32>
      %c0_128 = arith.constant 0 : index
      %c0_129 = arith.constant 0 : index
      %c0_130 = arith.constant 0 : index
      %152 = vector.load %arg12[%c0_128, %c0_129, %c0_130] : memref<9x32x32xf32, #tpu.memory_space<vmem>>, vector<1x32x32xf32>
      %153 = vector.shape_cast %152 : vector<1x32x32xf32> to vector<32x32xf32>
      %cst_131 = arith.constant dense<0.000000e+00> : vector<4x32xf32>
      %154 = tpu.matmul %151, %153, %cst_131 {dimension_numbers = #tpu.dot_dimension_numbers<[1], [0], [0], [1], [0, 0, 1, 1], [], []>} : vector<4x32xf32>, vector<32x32xf32>, vector<4x32xf32> -> vector<4x32xf32>
      %155 = arith.addf %146, %154 : vector<4x32xf32>
      %156 = vector.extract_strided_slice %150 {offsets = [1, 0], sizes = [4, 32], strides = [1, 1]} : vector<6x32xf32> to vector<4x32xf32>
      %c1_132 = arith.constant 1 : index
      %c0_133 = arith.constant 0 : index
      %c0_134 = arith.constant 0 : index
      %157 = vector.load %arg12[%c1_132, %c0_133, %c0_134] : memref<9x32x32xf32, #tpu.memory_space<vmem>>, vector<1x32x32xf32>
      %158 = vector.shape_cast %157 : vector<1x32x32xf32> to vector<32x32xf32>
      %cst_135 = arith.constant dense<0.000000e+00> : vector<4x32xf32>
      %159 = tpu.matmul %156, %158, %cst_135 {dimension_numbers = #tpu.dot_dimension_numbers<[1], [0], [0], [1], [0, 0, 1, 1], [], []>} : vector<4x32xf32>, vector<32x32xf32>, vector<4x32xf32> -> vector<4x32xf32>
      %160 = arith.addf %155, %159 : vector<4x32xf32>
      %161 = vector.extract_strided_slice %150 {offsets = [2, 0], sizes = [4, 32], strides = [1, 1]} : vector<6x32xf32> to vector<4x32xf32>
      %c2_136 = arith.constant 2 : index
      %c0_137 = arith.constant 0 : index
      %c0_138 = arith.constant 0 : index
      %162 = vector.load %arg12[%c2_136, %c0_137, %c0_138] : memref<9x32x32xf32, #tpu.memory_space<vmem>>, vector<1x32x32xf32>
      %163 = vector.shape_cast %162 : vector<1x32x32xf32> to vector<32x32xf32>
      %cst_139 = arith.constant dense<0.000000e+00> : vector<4x32xf32>
      %164 = tpu.matmul %161, %163, %cst_139 {dimension_numbers = #tpu.dot_dimension_numbers<[1], [0], [0], [1], [0, 0, 1, 1], [], []>} : vector<4x32xf32>, vector<32x32xf32>, vector<4x32xf32> -> vector<4x32xf32>
      %165 = arith.addf %160, %164 : vector<4x32xf32>
      %c1_i32_140 = arith.constant 1 : i32
      %166 = arith.addi %arg25, %c1_i32_140 : i32
      %167 = arith.index_cast %166 : i32 to index
      %c0_141 = arith.constant 0 : index
      %c0_142 = arith.constant 0 : index
      %168 = vector.load %arg23[%167, %c0_141, %c0_142] : memref<6x6x32xf32, #tpu.memory_space<vmem>>, vector<1x6x32xf32>
      %169 = vector.shape_cast %168 : vector<1x6x32xf32> to vector<6x32xf32>
      %170 = vector.extract_strided_slice %169 {offsets = [0, 0], sizes = [4, 32], strides = [1, 1]} : vector<6x32xf32> to vector<4x32xf32>
      %c3_143 = arith.constant 3 : index
      %c0_144 = arith.constant 0 : index
      %c0_145 = arith.constant 0 : index
      %171 = vector.load %arg12[%c3_143, %c0_144, %c0_145] : memref<9x32x32xf32, #tpu.memory_space<vmem>>, vector<1x32x32xf32>
      %172 = vector.shape_cast %171 : vector<1x32x32xf32> to vector<32x32xf32>
      %cst_146 = arith.constant dense<0.000000e+00> : vector<4x32xf32>
      %173 = tpu.matmul %170, %172, %cst_146 {dimension_numbers = #tpu.dot_dimension_numbers<[1], [0], [0], [1], [0, 0, 1, 1], [], []>} : vector<4x32xf32>, vector<32x32xf32>, vector<4x32xf32> -> vector<4x32xf32>
      %174 = arith.addf %165, %173 : vector<4x32xf32>
      %175 = vector.extract_strided_slice %169 {offsets = [1, 0], sizes = [4, 32], strides = [1, 1]} : vector<6x32xf32> to vector<4x32xf32>
      %c4_147 = arith.constant 4 : index
      %c0_148 = arith.constant 0 : index
      %c0_149 = arith.constant 0 : index
      %176 = vector.load %arg12[%c4_147, %c0_148, %c0_149] : memref<9x32x32xf32, #tpu.memory_space<vmem>>, vector<1x32x32xf32>
      %177 = vector.shape_cast %176 : vector<1x32x32xf32> to vector<32x32xf32>
      %cst_150 = arith.constant dense<0.000000e+00> : vector<4x32xf32>
      %178 = tpu.matmul %175, %177, %cst_150 {dimension_numbers = #tpu.dot_dimension_numbers<[1], [0], [0], [1], [0, 0, 1, 1], [], []>} : vector<4x32xf32>, vector<32x32xf32>, vector<4x32xf32> -> vector<4x32xf32>
      %179 = arith.addf %174, %178 : vector<4x32xf32>
      %180 = vector.extract_strided_slice %169 {offsets = [2, 0], sizes = [4, 32], strides = [1, 1]} : vector<6x32xf32> to vector<4x32xf32>
      %c5_151 = arith.constant 5 : index
      %c0_152 = arith.constant 0 : index
      %c0_153 = arith.constant 0 : index
      %181 = vector.load %arg12[%c5_151, %c0_152, %c0_153] : memref<9x32x32xf32, #tpu.memory_space<vmem>>, vector<1x32x32xf32>
      %182 = vector.shape_cast %181 : vector<1x32x32xf32> to vector<32x32xf32>
      %cst_154 = arith.constant dense<0.000000e+00> : vector<4x32xf32>
      %183 = tpu.matmul %180, %182, %cst_154 {dimension_numbers = #tpu.dot_dimension_numbers<[1], [0], [0], [1], [0, 0, 1, 1], [], []>} : vector<4x32xf32>, vector<32x32xf32>, vector<4x32xf32> -> vector<4x32xf32>
      %184 = arith.addf %179, %183 : vector<4x32xf32>
      %c2_i32_155 = arith.constant 2 : i32
      %185 = arith.addi %arg25, %c2_i32_155 : i32
      %186 = arith.index_cast %185 : i32 to index
      %c0_156 = arith.constant 0 : index
      %c0_157 = arith.constant 0 : index
      %187 = vector.load %arg23[%186, %c0_156, %c0_157] : memref<6x6x32xf32, #tpu.memory_space<vmem>>, vector<1x6x32xf32>
      %188 = vector.shape_cast %187 : vector<1x6x32xf32> to vector<6x32xf32>
      %189 = vector.extract_strided_slice %188 {offsets = [0, 0], sizes = [4, 32], strides = [1, 1]} : vector<6x32xf32> to vector<4x32xf32>
      %c6_158 = arith.constant 6 : index
      %c0_159 = arith.constant 0 : index
      %c0_160 = arith.constant 0 : index
      %190 = vector.load %arg12[%c6_158, %c0_159, %c0_160] : memref<9x32x32xf32, #tpu.memory_space<vmem>>, vector<1x32x32xf32>
      %191 = vector.shape_cast %190 : vector<1x32x32xf32> to vector<32x32xf32>
      %cst_161 = arith.constant dense<0.000000e+00> : vector<4x32xf32>
      %192 = tpu.matmul %189, %191, %cst_161 {dimension_numbers = #tpu.dot_dimension_numbers<[1], [0], [0], [1], [0, 0, 1, 1], [], []>} : vector<4x32xf32>, vector<32x32xf32>, vector<4x32xf32> -> vector<4x32xf32>
      %193 = arith.addf %184, %192 : vector<4x32xf32>
      %194 = vector.extract_strided_slice %188 {offsets = [1, 0], sizes = [4, 32], strides = [1, 1]} : vector<6x32xf32> to vector<4x32xf32>
      %c7_162 = arith.constant 7 : index
      %c0_163 = arith.constant 0 : index
      %c0_164 = arith.constant 0 : index
      %195 = vector.load %arg12[%c7_162, %c0_163, %c0_164] : memref<9x32x32xf32, #tpu.memory_space<vmem>>, vector<1x32x32xf32>
      %196 = vector.shape_cast %195 : vector<1x32x32xf32> to vector<32x32xf32>
      %cst_165 = arith.constant dense<0.000000e+00> : vector<4x32xf32>
      %197 = tpu.matmul %194, %196, %cst_165 {dimension_numbers = #tpu.dot_dimension_numbers<[1], [0], [0], [1], [0, 0, 1, 1], [], []>} : vector<4x32xf32>, vector<32x32xf32>, vector<4x32xf32> -> vector<4x32xf32>
      %198 = arith.addf %193, %197 : vector<4x32xf32>
      %199 = vector.extract_strided_slice %188 {offsets = [2, 0], sizes = [4, 32], strides = [1, 1]} : vector<6x32xf32> to vector<4x32xf32>
      %c8_166 = arith.constant 8 : index
      %c0_167 = arith.constant 0 : index
      %c0_168 = arith.constant 0 : index
      %200 = vector.load %arg12[%c8_166, %c0_167, %c0_168] : memref<9x32x32xf32, #tpu.memory_space<vmem>>, vector<1x32x32xf32>
      %201 = vector.shape_cast %200 : vector<1x32x32xf32> to vector<32x32xf32>
      %cst_169 = arith.constant dense<0.000000e+00> : vector<4x32xf32>
      %202 = tpu.matmul %199, %201, %cst_169 {dimension_numbers = #tpu.dot_dimension_numbers<[1], [0], [0], [1], [0, 0, 1, 1], [], []>} : vector<4x32xf32>, vector<32x32xf32>, vector<4x32xf32> -> vector<4x32xf32>
      %203 = arith.addf %198, %202 : vector<4x32xf32>
      %c1_i32_170 = arith.constant 1 : i32
      %204 = arith.addi %arg25, %c1_i32_170 : i32
      %205 = arith.index_cast %204 : i32 to index
      %c1_171 = arith.constant 1 : index
      %c0_172 = arith.constant 0 : index
      %206 = vector.load %arg22[%205, %c1_171, %c0_172] : memref<6x6x32xf32, #tpu.memory_space<vmem>>, vector<1x4x32xf32>
      %207 = vector.shape_cast %206 : vector<1x4x32xf32> to vector<4x32xf32>
      %208 = arith.addf %203, %207 : vector<4x32xf32>
      %cst_173 = arith.constant 0.000000e+00 : f32
      %209 = vector.broadcast %cst_173 : f32 to vector<4x32xf32>
      %210 = arith.maximumf %208, %209 : vector<4x32xf32>
      %211 = arith.index_cast %arg25 : i32 to index
      %c0_174 = arith.constant 0 : index
      %c0_175 = arith.constant 0 : index
      %212 = vector.load %arg24[%211, %c0_174, %c0_175] : memref<4x4x32xf32, #tpu.memory_space<vmem>>, vector<1x4x32xf32>
      %213 = vector.shape_cast %212 : vector<1x4x32xf32> to vector<4x32xf32>
      %214 = vector.shape_cast %210 : vector<4x32xf32> to vector<1x4x32xf32>
      tpu.vector_store %arg24[%211, %c0_174, %c0_175], %214 {strides = array<i32>} : memref<4x4x32xf32, #tpu.memory_space<vmem>>, vector<1x4x32xf32>,
    }
    %c4_i32_56 = arith.constant 4 : i32
    %cst_57 = arith.constant 0.000000e+00 : f32
    %50 = vector.broadcast %cst_57 : f32 to vector<1x10xf32>
    %c0_58 = arith.constant 0 : index
    %c0_59 = arith.constant 0 : index
    %51 = vector.load %arg15[%c0_58, %c0_59] : memref<1x10xf32, #tpu.memory_space<vmem>>, vector<1x10xf32>
    %52 = arith.addf %50, %51 : vector<1x10xf32>
    %c0_60 = arith.constant 0 : index
    %c0_61 = arith.constant 0 : index
    %c0_62 = arith.constant 0 : index
    %53 = vector.load %arg24[%c0_60, %c0_61, %c0_62] : memref<4x4x32xf32, #tpu.memory_space<vmem>>, vector<1x4x32xf32>
    %54 = vector.shape_cast %53 : vector<1x4x32xf32> to vector<4x32xf32>
    %55 = vector.extract_strided_slice %54 {offsets = [0, 0], sizes = [1, 32], strides = [1, 1]} : vector<4x32xf32> to vector<1x32xf32>
    %c0_63 = arith.constant 0 : index
    %c0_64 = arith.constant 0 : index
    %c0_65 = arith.constant 0 : index
    %56 = vector.load %arg14[%c0_63, %c0_64, %c0_65] : memref<16x32x10xf32, #tpu.memory_space<vmem>>, vector<1x32x10xf32>
    %57 = vector.shape_cast %56 : vector<1x32x10xf32> to vector<32x10xf32>
    %cst_66 = arith.constant dense<0.000000e+00> : vector<1x10xf32>
    %58 = tpu.matmul %55, %57, %cst_66 {dimension_numbers = #tpu.dot_dimension_numbers<[1], [0], [0], [1], [0, 0, 1, 1], [], []>} : vector<1x32xf32>, vector<32x10xf32>, vector<1x10xf32> -> vector<1x10xf32>
    %59 = arith.addf %52, %58 : vector<1x10xf32>
    %60 = vector.extract_strided_slice %54 {offsets = [1, 0], sizes = [1, 32], strides = [1, 1]} : vector<4x32xf32> to vector<1x32xf32>
    %c1 = arith.constant 1 : index
    %c0_67 = arith.constant 0 : index
    %c0_68 = arith.constant 0 : index
    %61 = vector.load %arg14[%c1, %c0_67, %c0_68] : memref<16x32x10xf32, #tpu.memory_space<vmem>>, vector<1x32x10xf32>
    %62 = vector.shape_cast %61 : vector<1x32x10xf32> to vector<32x10xf32>
    %cst_69 = arith.constant dense<0.000000e+00> : vector<1x10xf32>
    %63 = tpu.matmul %60, %62, %cst_69 {dimension_numbers = #tpu.dot_dimension_numbers<[1], [0], [0], [1], [0, 0, 1, 1], [], []>} : vector<1x32xf32>, vector<32x10xf32>, vector<1x10xf32> -> vector<1x10xf32>
    %64 = arith.addf %59, %63 : vector<1x10xf32>
    %65 = vector.extract_strided_slice %54 {offsets = [2, 0], sizes = [1, 32], strides = [1, 1]} : vector<4x32xf32> to vector<1x32xf32>
    %c2 = arith.constant 2 : index
    %c0_70 = arith.constant 0 : index
    %c0_71 = arith.constant 0 : index
    %66 = vector.load %arg14[%c2, %c0_70, %c0_71] : memref<16x32x10xf32, #tpu.memory_space<vmem>>, vector<1x32x10xf32>
    %67 = vector.shape_cast %66 : vector<1x32x10xf32> to vector<32x10xf32>
    %cst_72 = arith.constant dense<0.000000e+00> : vector<1x10xf32>
    %68 = tpu.matmul %65, %67, %cst_72 {dimension_numbers = #tpu.dot_dimension_numbers<[1], [0], [0], [1], [0, 0, 1, 1], [], []>} : vector<1x32xf32>, vector<32x10xf32>, vector<1x10xf32> -> vector<1x10xf32>
    %69 = arith.addf %64, %68 : vector<1x10xf32>
    %70 = vector.extract_strided_slice %54 {offsets = [3, 0], sizes = [1, 32], strides = [1, 1]} : vector<4x32xf32> to vector<1x32xf32>
    %c3 = arith.constant 3 : index
    %c0_73 = arith.constant 0 : index
    %c0_74 = arith.constant 0 : index
    %71 = vector.load %arg14[%c3, %c0_73, %c0_74] : memref<16x32x10xf32, #tpu.memory_space<vmem>>, vector<1x32x10xf32>
    %72 = vector.shape_cast %71 : vector<1x32x10xf32> to vector<32x10xf32>
    %cst_75 = arith.constant dense<0.000000e+00> : vector<1x10xf32>
    %73 = tpu.matmul %70, %72, %cst_75 {dimension_numbers = #tpu.dot_dimension_numbers<[1], [0], [0], [1], [0, 0, 1, 1], [], []>} : vector<1x32xf32>, vector<32x10xf32>, vector<1x10xf32> -> vector<1x10xf32>
    %74 = arith.addf %69, %73 : vector<1x10xf32>
    %c1_76 = arith.constant 1 : index
    %c0_77 = arith.constant 0 : index
    %c0_78 = arith.constant 0 : index
    %75 = vector.load %arg24[%c1_76, %c0_77, %c0_78] : memref<4x4x32xf32, #tpu.memory_space<vmem>>, vector<1x4x32xf32>
    %76 = vector.shape_cast %75 : vector<1x4x32xf32> to vector<4x32xf32>
    %77 = vector.extract_strided_slice %76 {offsets = [0, 0], sizes = [1, 32], strides = [1, 1]} : vector<4x32xf32> to vector<1x32xf32>
    %c4 = arith.constant 4 : index
    %c0_79 = arith.constant 0 : index
    %c0_80 = arith.constant 0 : index
    %78 = vector.load %arg14[%c4, %c0_79, %c0_80] : memref<16x32x10xf32, #tpu.memory_space<vmem>>, vector<1x32x10xf32>
    %79 = vector.shape_cast %78 : vector<1x32x10xf32> to vector<32x10xf32>
    %cst_81 = arith.constant dense<0.000000e+00> : vector<1x10xf32>
    %80 = tpu.matmul %77, %79, %cst_81 {dimension_numbers = #tpu.dot_dimension_numbers<[1], [0], [0], [1], [0, 0, 1, 1], [], []>} : vector<1x32xf32>, vector<32x10xf32>, vector<1x10xf32> -> vector<1x10xf32>
    %81 = arith.addf %74, %80 : vector<1x10xf32>
    %82 = vector.extract_strided_slice %76 {offsets = [1, 0], sizes = [1, 32], strides = [1, 1]} : vector<4x32xf32> to vector<1x32xf32>
    %c5 = arith.constant 5 : index
    %c0_82 = arith.constant 0 : index
    %c0_83 = arith.constant 0 : index
    %83 = vector.load %arg14[%c5, %c0_82, %c0_83] : memref<16x32x10xf32, #tpu.memory_space<vmem>>, vector<1x32x10xf32>
    %84 = vector.shape_cast %83 : vector<1x32x10xf32> to vector<32x10xf32>
    %cst_84 = arith.constant dense<0.000000e+00> : vector<1x10xf32>
    %85 = tpu.matmul %82, %84, %cst_84 {dimension_numbers = #tpu.dot_dimension_numbers<[1], [0], [0], [1], [0, 0, 1, 1], [], []>} : vector<1x32xf32>, vector<32x10xf32>, vector<1x10xf32> -> vector<1x10xf32>
    %86 = arith.addf %81, %85 : vector<1x10xf32>
    %87 = vector.extract_strided_slice %76 {offsets = [2, 0], sizes = [1, 32], strides = [1, 1]} : vector<4x32xf32> to vector<1x32xf32>
    %c6 = arith.constant 6 : index
    %c0_85 = arith.constant 0 : index
    %c0_86 = arith.constant 0 : index
    %88 = vector.load %arg14[%c6, %c0_85, %c0_86] : memref<16x32x10xf32, #tpu.memory_space<vmem>>, vector<1x32x10xf32>
    %89 = vector.shape_cast %88 : vector<1x32x10xf32> to vector<32x10xf32>
    %cst_87 = arith.constant dense<0.000000e+00> : vector<1x10xf32>
    %90 = tpu.matmul %87, %89, %cst_87 {dimension_numbers = #tpu.dot_dimension_numbers<[1], [0], [0], [1], [0, 0, 1, 1], [], []>} : vector<1x32xf32>, vector<32x10xf32>, vector<1x10xf32> -> vector<1x10xf32>
    %91 = arith.addf %86, %90 : vector<1x10xf32>
    %92 = vector.extract_strided_slice %76 {offsets = [3, 0], sizes = [1, 32], strides = [1, 1]} : vector<4x32xf32> to vector<1x32xf32>
    %c7 = arith.constant 7 : index
    %c0_88 = arith.constant 0 : index
    %c0_89 = arith.constant 0 : index
    %93 = vector.load %arg14[%c7, %c0_88, %c0_89] : memref<16x32x10xf32, #tpu.memory_space<vmem>>, vector<1x32x10xf32>
    %94 = vector.shape_cast %93 : vector<1x32x10xf32> to vector<32x10xf32>
    %cst_90 = arith.constant dense<0.000000e+00> : vector<1x10xf32>
    %95 = tpu.matmul %92, %94, %cst_90 {dimension_numbers = #tpu.dot_dimension_numbers<[1], [0], [0], [1], [0, 0, 1, 1], [], []>} : vector<1x32xf32>, vector<32x10xf32>, vector<1x10xf32> -> vector<1x10xf32>
    %96 = arith.addf %91, %95 : vector<1x10xf32>
    %c2_91 = arith.constant 2 : index
    %c0_92 = arith.constant 0 : index
    %c0_93 = arith.constant 0 : index
    %97 = vector.load %arg24[%c2_91, %c0_92, %c0_93] : memref<4x4x32xf32, #tpu.memory_space<vmem>>, vector<1x4x32xf32>
    %98 = vector.shape_cast %97 : vector<1x4x32xf32> to vector<4x32xf32>
    %99 = vector.extract_strided_slice %98 {offsets = [0, 0], sizes = [1, 32], strides = [1, 1]} : vector<4x32xf32> to vector<1x32xf32>
    %c8 = arith.constant 8 : index
    %c0_94 = arith.constant 0 : index
    %c0_95 = arith.constant 0 : index
    %100 = vector.load %arg14[%c8, %c0_94, %c0_95] : memref<16x32x10xf32, #tpu.memory_space<vmem>>, vector<1x32x10xf32>
    %101 = vector.shape_cast %100 : vector<1x32x10xf32> to vector<32x10xf32>
    %cst_96 = arith.constant dense<0.000000e+00> : vector<1x10xf32>
    %102 = tpu.matmul %99, %101, %cst_96 {dimension_numbers = #tpu.dot_dimension_numbers<[1], [0], [0], [1], [0, 0, 1, 1], [], []>} : vector<1x32xf32>, vector<32x10xf32>, vector<1x10xf32> -> vector<1x10xf32>
    %103 = arith.addf %96, %102 : vector<1x10xf32>
    %104 = vector.extract_strided_slice %98 {offsets = [1, 0], sizes = [1, 32], strides = [1, 1]} : vector<4x32xf32> to vector<1x32xf32>
    %c9 = arith.constant 9 : index
    %c0_97 = arith.constant 0 : index
    %c0_98 = arith.constant 0 : index
    %105 = vector.load %arg14[%c9, %c0_97, %c0_98] : memref<16x32x10xf32, #tpu.memory_space<vmem>>, vector<1x32x10xf32>
    %106 = vector.shape_cast %105 : vector<1x32x10xf32> to vector<32x10xf32>
    %cst_99 = arith.constant dense<0.000000e+00> : vector<1x10xf32>
    %107 = tpu.matmul %104, %106, %cst_99 {dimension_numbers = #tpu.dot_dimension_numbers<[1], [0], [0], [1], [0, 0, 1, 1], [], []>} : vector<1x32xf32>, vector<32x10xf32>, vector<1x10xf32> -> vector<1x10xf32>
    %108 = arith.addf %103, %107 : vector<1x10xf32>
    %109 = vector.extract_strided_slice %98 {offsets = [2, 0], sizes = [1, 32], strides = [1, 1]} : vector<4x32xf32> to vector<1x32xf32>
    %c10 = arith.constant 10 : index
    %c0_100 = arith.constant 0 : index
    %c0_101 = arith.constant 0 : index
    %110 = vector.load %arg14[%c10, %c0_100, %c0_101] : memref<16x32x10xf32, #tpu.memory_space<vmem>>, vector<1x32x10xf32>
    %111 = vector.shape_cast %110 : vector<1x32x10xf32> to vector<32x10xf32>
    %cst_102 = arith.constant dense<0.000000e+00> : vector<1x10xf32>
    %112 = tpu.matmul %109, %111, %cst_102 {dimension_numbers = #tpu.dot_dimension_numbers<[1], [0], [0], [1], [0, 0, 1, 1], [], []>} : vector<1x32xf32>, vector<32x10xf32>, vector<1x10xf32> -> vector<1x10xf32>
    %113 = arith.addf %108, %112 : vector<1x10xf32>
    %114 = vector.extract_strided_slice %98 {offsets = [3, 0], sizes = [1, 32], strides = [1, 1]} : vector<4x32xf32> to vector<1x32xf32>
    %c11 = arith.constant 11 : index
    %c0_103 = arith.constant 0 : index
    %c0_104 = arith.constant 0 : index
    %115 = vector.load %arg14[%c11, %c0_103, %c0_104] : memref<16x32x10xf32, #tpu.memory_space<vmem>>, vector<1x32x10xf32>
    %116 = vector.shape_cast %115 : vector<1x32x10xf32> to vector<32x10xf32>
    %cst_105 = arith.constant dense<0.000000e+00> : vector<1x10xf32>
    %117 = tpu.matmul %114, %116, %cst_105 {dimension_numbers = #tpu.dot_dimension_numbers<[1], [0], [0], [1], [0, 0, 1, 1], [], []>} : vector<1x32xf32>, vector<32x10xf32>, vector<1x10xf32> -> vector<1x10xf32>
    %118 = arith.addf %113, %117 : vector<1x10xf32>
    %c3_106 = arith.constant 3 : index
    %c0_107 = arith.constant 0 : index
    %c0_108 = arith.constant 0 : index
    %119 = vector.load %arg24[%c3_106, %c0_107, %c0_108] : memref<4x4x32xf32, #tpu.memory_space<vmem>>, vector<1x4x32xf32>
    %120 = vector.shape_cast %119 : vector<1x4x32xf32> to vector<4x32xf32>
    %121 = vector.extract_strided_slice %120 {offsets = [0, 0], sizes = [1, 32], strides = [1, 1]} : vector<4x32xf32> to vector<1x32xf32>
    %c12 = arith.constant 12 : index
    %c0_109 = arith.constant 0 : index
    %c0_110 = arith.constant 0 : index
    %122 = vector.load %arg14[%c12, %c0_109, %c0_110] : memref<16x32x10xf32, #tpu.memory_space<vmem>>, vector<1x32x10xf32>
    %123 = vector.shape_cast %122 : vector<1x32x10xf32> to vector<32x10xf32>
    %cst_111 = arith.constant dense<0.000000e+00> : vector<1x10xf32>
    %124 = tpu.matmul %121, %123, %cst_111 {dimension_numbers = #tpu.dot_dimension_numbers<[1], [0], [0], [1], [0, 0, 1, 1], [], []>} : vector<1x32xf32>, vector<32x10xf32>, vector<1x10xf32> -> vector<1x10xf32>
    %125 = arith.addf %118, %124 : vector<1x10xf32>
    %126 = vector.extract_strided_slice %120 {offsets = [1, 0], sizes = [1, 32], strides = [1, 1]} : vector<4x32xf32> to vector<1x32xf32>
    %c13 = arith.constant 13 : index
    %c0_112 = arith.constant 0 : index
    %c0_113 = arith.constant 0 : index
    %127 = vector.load %arg14[%c13, %c0_112, %c0_113] : memref<16x32x10xf32, #tpu.memory_space<vmem>>, vector<1x32x10xf32>
    %128 = vector.shape_cast %127 : vector<1x32x10xf32> to vector<32x10xf32>
    %cst_114 = arith.constant dense<0.000000e+00> : vector<1x10xf32>
    %129 = tpu.matmul %126, %128, %cst_114 {dimension_numbers = #tpu.dot_dimension_numbers<[1], [0], [0], [1], [0, 0, 1, 1], [], []>} : vector<1x32xf32>, vector<32x10xf32>, vector<1x10xf32> -> vector<1x10xf32>
    %130 = arith.addf %125, %129 : vector<1x10xf32>
    %131 = vector.extract_strided_slice %120 {offsets = [2, 0], sizes = [1, 32], strides = [1, 1]} : vector<4x32xf32> to vector<1x32xf32>
    %c14 = arith.constant 14 : index
    %c0_115 = arith.constant 0 : index
    %c0_116 = arith.constant 0 : index
    %132 = vector.load %arg14[%c14, %c0_115, %c0_116] : memref<16x32x10xf32, #tpu.memory_space<vmem>>, vector<1x32x10xf32>
    %133 = vector.shape_cast %132 : vector<1x32x10xf32> to vector<32x10xf32>
    %cst_117 = arith.constant dense<0.000000e+00> : vector<1x10xf32>
    %134 = tpu.matmul %131, %133, %cst_117 {dimension_numbers = #tpu.dot_dimension_numbers<[1], [0], [0], [1], [0, 0, 1, 1], [], []>} : vector<1x32xf32>, vector<32x10xf32>, vector<1x10xf32> -> vector<1x10xf32>
    %135 = arith.addf %130, %134 : vector<1x10xf32>
    %136 = vector.extract_strided_slice %120 {offsets = [3, 0], sizes = [1, 32], strides = [1, 1]} : vector<4x32xf32> to vector<1x32xf32>
    %c15 = arith.constant 15 : index
    %c0_118 = arith.constant 0 : index
    %c0_119 = arith.constant 0 : index
    %137 = vector.load %arg14[%c15, %c0_118, %c0_119] : memref<16x32x10xf32, #tpu.memory_space<vmem>>, vector<1x32x10xf32>
    %138 = vector.shape_cast %137 : vector<1x32x10xf32> to vector<32x10xf32>
    %cst_120 = arith.constant dense<0.000000e+00> : vector<1x10xf32>
    %139 = tpu.matmul %136, %138, %cst_120 {dimension_numbers = #tpu.dot_dimension_numbers<[1], [0], [0], [1], [0, 0, 1, 1], [], []>} : vector<1x32xf32>, vector<32x10xf32>, vector<1x10xf32> -> vector<1x10xf32>
    %140 = arith.addf %135, %139 : vector<1x10xf32>
    %c0_121 = arith.constant 0 : index
    %c0_122 = arith.constant 0 : index
    %c0_123 = arith.constant 0 : index
    %141 = vector.load %arg16[%c0_121, %c0_122, %c0_123] : memref<1x1x10xf32, #tpu.memory_space<vmem>>, vector<1x1x10xf32>
    %142 = vector.shape_cast %141 : vector<1x1x10xf32> to vector<1x10xf32>
    %143 = vector.shape_cast %140 : vector<1x10xf32> to vector<1x1x10xf32>
    tpu.vector_store %arg16[%c0_121, %c0_122, %c0_123], %143 {strides = array<i32>} : memref<1x1x10xf32, #tpu.memory_space<vmem>>, vector<1x1x10xf32>,
    return
  }
  func.func @transform_0(%arg0: i32) -> (i32, i32, i32, i32) {
    %c0_i32 = arith.constant 0 : i32
    %c0_i32_0 = arith.constant 0 : i32
    %c0_i32_1 = arith.constant 0 : i32
    %c0_i32_2 = arith.constant 0 : i32
    return %arg0, %c0_i32, %c0_i32_0, %c0_i32_1 : i32, i32, i32, i32
  }
  func.func @transform_1(%arg0: i32) -> (i32, i32, i32) {
    %c0_i32 = arith.constant 0 : i32
    %c0_i32_0 = arith.constant 0 : i32
    %c0_i32_1 = arith.constant 0 : i32
    %c0_i32_2 = arith.constant 0 : i32
    return %c0_i32, %c0_i32_0, %c0_i32_1 : i32, i32, i32
  }
  func.func @transform_2(%arg0: i32) -> (i32, i32) {
    %c0_i32 = arith.constant 0 : i32
    %c0_i32_0 = arith.constant 0 : i32
    %c0_i32_1 = arith.constant 0 : i32
    return %c0_i32, %c0_i32_0 : i32, i32
  }
  func.func @transform_3(%arg0: i32) -> (i32, i32, i32) {
    %c0_i32 = arith.constant 0 : i32
    %c0_i32_0 = arith.constant 0 : i32
    %c0_i32_1 = arith.constant 0 : i32
    %c0_i32_2 = arith.constant 0 : i32
    return %c0_i32, %c0_i32_0, %c0_i32_1 : i32, i32, i32
  }
  func.func @transform_4(%arg0: i32) -> (i32, i32) {
    %c0_i32 = arith.constant 0 : i32
    %c0_i32_0 = arith.constant 0 : i32
    %c0_i32_1 = arith.constant 0 : i32
    return %c0_i32, %c0_i32_0 : i32, i32
  }
  func.func @transform_5(%arg0: i32) -> (i32, i32, i32) {
    %c0_i32 = arith.constant 0 : i32
    %c0_i32_0 = arith.constant 0 : i32
    %c0_i32_1 = arith.constant 0 : i32
    %c0_i32_2 = arith.constant 0 : i32
    return %c0_i32, %c0_i32_0, %c0_i32_1 : i32, i32, i32
  }
  func.func @transform_6(%arg0: i32) -> (i32, i32) {
    %c0_i32 = arith.constant 0 : i32
    %c0_i32_0 = arith.constant 0 : i32
    %c0_i32_1 = arith.constant 0 : i32
    return %c0_i32, %c0_i32_0 : i32, i32
  }
  func.func @transform_7(%arg0: i32) -> (i32, i32, i32) {
    %c0_i32 = arith.constant 0 : i32
    %c0_i32_0 = arith.constant 0 : i32
    %c0_i32_1 = arith.constant 0 : i32
    %c0_i32_2 = arith.constant 0 : i32
    return %c0_i32, %c0_i32_0, %c0_i32_1 : i32, i32, i32
  }
  func.func @transform_8(%arg0: i32) -> (i32, i32) {
    %c0_i32 = arith.constant 0 : i32
    %c0_i32_0 = arith.constant 0 : i32
    %c0_i32_1 = arith.constant 0 : i32
    return %c0_i32, %c0_i32_0 : i32, i32
  }
  func.func @transform_9(%arg0: i32) -> (i32, i32, i32) {
    %c0_i32 = arith.constant 0 : i32
    %c0_i32_0 = arith.constant 0 : i32
    %c0_i32_1 = arith.constant 0 : i32
    %c0_i32_2 = arith.constant 0 : i32
    return %c0_i32, %c0_i32_0, %c0_i32_1 : i32, i32, i32
  }
  func.func @transform_10(%arg0: i32) -> (i32, i32) {
    %c0_i32 = arith.constant 0 : i32
    %c0_i32_0 = arith.constant 0 : i32
    %c0_i32_1 = arith.constant 0 : i32
    return %c0_i32, %c0_i32_0 : i32, i32
  }
  func.func @transform_11(%arg0: i32) -> (i32, i32, i32) {
    %c0_i32 = arith.constant 0 : i32
    %c0_i32_0 = arith.constant 0 : i32
    %c0_i32_1 = arith.constant 0 : i32
    %c0_i32_2 = arith.constant 0 : i32
    return %c0_i32, %c0_i32_0, %c0_i32_1 : i32, i32, i32
  }
  func.func @transform_12(%arg0: i32) -> (i32, i32) {
    %c0_i32 = arith.constant 0 : i32
    %c0_i32_0 = arith.constant 0 : i32
    %c0_i32_1 = arith.constant 0 : i32
    return %c0_i32, %c0_i32_0 : i32, i32
  }
  func.func @transform_13(%arg0: i32) -> (i32, i32, i32) {
    %c0_i32 = arith.constant 0 : i32
    %c0_i32_0 = arith.constant 0 : i32
    %c0_i32_1 = arith.constant 0 : i32
    %c0_i32_2 = arith.constant 0 : i32
    return %c0_i32, %c0_i32_0, %c0_i32_1 : i32, i32, i32
  }
  func.func @transform_14(%arg0: i32) -> (i32, i32) {
    %c0_i32 = arith.constant 0 : i32
    %c0_i32_0 = arith.constant 0 : i32
    %c0_i32_1 = arith.constant 0 : i32
    return %c0_i32, %c0_i32_0 : i32, i32
  }
  func.func @transform_15(%arg0: i32) -> (i32, i32, i32) {
    %c0_i32 = arith.constant 0 : i32
    %c0_i32_0 = arith.constant 0 : i32
    %c0_i32_1 = arith.constant 0 : i32
    return %arg0, %c0_i32, %c0_i32_0 : i32, i32, i32
  }
}

</mosaic_0001>

<llo_original>
// kernel: net_forward.1
$region0: #{net_forward.1}
  #allocation0 [shape = 'u32[]', space=smem, size = 0x4, offset = 0x4, fixed_abs, tag = 'smem constant byte address 0x4 - core index']
  #allocation1 [shape = 'u32[72,128]{1,0:T(1,128)}', space=vmem, size = 0x9000, scoped, tag = 'internal scratch']
  #allocation2 [shape = 'f32[24,24,16]{2,1,0:T(8,128)}', space=vmem, size = 0x48000, scoped, tag = 'scratch operand']
  #allocation3 [shape = 'f32[14,14,16]{2,1,0:T(8,128)}', space=vmem, size = 0x1c000, scoped, tag = 'scratch operand']
  #allocation4 [shape = 'f32[14,14,16]{2,1,0:T(8,128)}', space=vmem, size = 0x1c000, scoped, tag = 'scratch operand']
  #allocation5 [shape = 'f32[12,12,16]{2,1,0:T(8,128)}', space=vmem, size = 0x18000, scoped, tag = 'scratch operand']
  #allocation6 [shape = 'f32[8,8,32]{2,1,0:T(8,128)}', space=vmem, size = 0x8000, scoped, tag = 'scratch operand']
  #allocation7 [shape = 'f32[6,6,32]{2,1,0:T(8,128)}', space=vmem, size = 0x6000, scoped, tag = 'scratch operand']
  #allocation8 [shape = 'f32[6,6,32]{2,1,0:T(8,128)}', space=vmem, size = 0x6000, scoped, tag = 'scratch operand']
  #allocation9 [shape = 'f32[4,4,32]{2,1,0:T(4,128)}', space=vmem, size = 0x2000, scoped, tag = 'scratch operand']
  %s0 = inlined_call_operand.vmem [shape: f32[2,28,28,1], index: 0, kind: input, shape index: {}]
  %s1 = inlined_call_operand.vmem [shape: f32[25,1,16], index: 1, kind: input, shape index: {}]
  %s2 = inlined_call_operand.vmem [shape: f32[1,16], index: 2, kind: input, shape index: {}]
  %s3 = inlined_call_operand.vmem [shape: f32[9,16,16], index: 3, kind: input, shape index: {}]
  %s4 = inlined_call_operand.vmem [shape: f32[1,16], index: 4, kind: input, shape index: {}]
  %s5 = inlined_call_operand.vmem [shape: f32[9,16,16], index: 5, kind: input, shape index: {}]
  %s6 = inlined_call_operand.vmem [shape: f32[1,16], index: 6, kind: input, shape index: {}]
  %s7 = inlined_call_operand.vmem [shape: f32[25,16,32], index: 7, kind: input, shape index: {}]
  %s8 = inlined_call_operand.vmem [shape: f32[1,32], index: 8, kind: input, shape index: {}]
  %s9 = inlined_call_operand.vmem [shape: f32[9,32,32], index: 9, kind: input, shape index: {}]
  %s10 = inlined_call_operand.vmem [shape: f32[1,32], index: 10, kind: input, shape index: {}]
  %s11 = inlined_call_operand.vmem [shape: f32[9,32,32], index: 11, kind: input, shape index: {}]
  %s12 = inlined_call_operand.vmem [shape: f32[1,32], index: 12, kind: input, shape index: {}]
  %s13 = inlined_call_operand.vmem [shape: f32[16,32,10], index: 13, kind: input, shape index: {}]
  %s14 = inlined_call_operand.vmem [shape: f32[1,10], index: 14, kind: input, shape index: {}]
  %s15 = inlined_call_operand.hbm [shape: f32[2,1,10], index: 15, kind: output, shape index: {}]
  %s16 = sld [smem:[#allocation0]]
  $region149: #{net_forward.1} parent=0
    _
  %s18 = ssub.s32 1, %s16
  %s19 = scalar_select 0, %s18, %s16
  $region1: #{net_forward.1} parent=0
    #allocation10 [shape = 'u8[1024]{0}', space=vmem, size = 0x400, scoped, tag = 'output window, operand 0']
    #allocation11 [shape = 's32[2]{0}', space=sflag, size = 0x8, scoped, tag = 'scoped memory for net_forward.1']
    %20 = vsyncpa [#allocation11], 0
    %s21 = scalar_lea.sflag [#allocation11], 1
    %22 = vsyncpa %s21, 0
    loop: start=0, step=1, limit=4
    $region2: #{net_forward.1} parent=1 // loop_pre_header
      _
    $region3: #{net_forward.1} parent=1 // loop_header
      %s24 = sphi 0, %s28
      %p25 = scmp.ge.s32.totalorder %s24, 4
      %s34 = sphi 0, %s36
      %s37 = sphi 0, %s34
      %s38 = sphi 0, %s37
      %s54 = sphi 0, %s38
      %s58 = sphi 0, %s58
      %s60 = sphi 0, %s58
      %s61 = sphi 0, %s60
      %s75 = sphi 0, %s61
      %s79 = sphi 0, %s79
      %s81 = sphi 0, %s79
      %s82 = sphi 0, %s81
      %s96 = sphi 0, %s82
      %s100 = sphi 0, %s100
      %s102 = sphi 0, %s100
      %s103 = sphi 0, %s102
      %s117 = sphi 0, %s103
      %s121 = sphi 0, %s121
      %s123 = sphi 0, %s121
      %s124 = sphi 0, %s123
      %s138 = sphi 0, %s124
      %s142 = sphi 0, %s142
      %s144 = sphi 0, %s142
      %s145 = sphi 0, %s144
      %s159 = sphi 0, %s145
      %s163 = sphi 0, %s163
      %s165 = sphi 0, %s163
      %s166 = sphi 0, %s165
      %s180 = sphi 0, %s166
      %s184 = sphi 0, %s184
      %s186 = sphi 0, %s184
      %s187 = sphi 0, %s186
      %s201 = sphi 0, %s187
      %s205 = sphi 0, %s205
      %s207 = sphi 0, %s205
      %s208 = sphi 0, %s207
      %s222 = sphi 0, %s208
      %s226 = sphi 0, %s226
      %s228 = sphi 0, %s226
      %s229 = sphi 0, %s228
      %s243 = sphi 0, %s229
      %s247 = sphi 0, %s247
      %s249 = sphi 0, %s247
      %s250 = sphi 0, %s249
      %s264 = sphi 0, %s250
      %s268 = sphi 0, %s268
      %s270 = sphi 0, %s268
      %s271 = sphi 0, %s270
      %s285 = sphi 0, %s271
      %s289 = sphi 0, %s289
      %s291 = sphi 0, %s289
      %s292 = sphi 0, %s291
      %s306 = sphi 0, %s292
      %s310 = sphi 0, %s310
      %s312 = sphi 0, %s310
      %s313 = sphi 0, %s312
      %s327 = sphi 0, %s313
      %s331 = sphi 0, %s331
      %s333 = sphi 0, %s331
      %s334 = sphi 0, %s333
      %s348 = sphi 0, %s334
      %s354 = sphi 0, %s356
      %s357 = sphi 0, %s354
      %s358 = sphi 0, %s357
      %s374 = sphi 0, %s358
    $region4: #{net_forward.1} parent=1 // loop_header_branch
      %27 = sbr.rel (%p25) target = $region8
    $region5: #{net_forward.1} parent=1 // loop_body
      %s29 = ssub.s32 %s24, 1
      %s30 = ssub.s32 %s24, 2
      %s31 = sadd.s32 %s24, 1
      %s32 = ssub.s32 %s24, %s31
      %p33 = scmp.eq.s32.totalorder %s32, 0
      %s35 = sadd.s32 %s34, 1
      %s36 = scalar_select %p33, %s34, %s35
      %p39 = pneg %p33
      %p40 = scmp.eq.s32.totalorder %s24, 1
      %p41 = por %p39, %p40
      %p42 = scmp.ne.s32.totalorder %s34, %s37
      %p43 = scmp.eq.s32.totalorder %s24, 0
      %p44 = por %p42, %p43
      %p45 = scmp.ne.s32.totalorder %s34, %s37
      %p46 = scmp.eq.s32.totalorder %s29, 1
      %p47 = por %p45, %p46
      %p48 = scmp.ne.s32.totalorder %s37, %s38
      %p49 = scmp.eq.s32.totalorder %s29, 0
      %p50 = por %p48, %p49
      %p51 = scmp.ne.s32.totalorder %s37, %s38
      %p52 = scmp.eq.s32.totalorder %s30, 1
      %p53 = por %p51, %p52
      %p55 = scmp.ne.s32.totalorder %s38, %s54
      %p56 = scmp.eq.s32.totalorder %s30, 0
      %p57 = por %p55, %p56
      %s59 = sadd.s32 %s58, 1
      %p62 = scmp.eq.s32.totalorder %s24, 1
      %p63 = scmp.ne.s32.totalorder %s58, %s60
      %p64 = scmp.eq.s32.totalorder %s24, 0
      %p65 = por %p63, %p64
      %p66 = scmp.ne.s32.totalorder %s58, %s60
      %p67 = scmp.eq.s32.totalorder %s29, 1
      %p68 = por %p66, %p67
      %p69 = scmp.ne.s32.totalorder %s60, %s61
      %p70 = scmp.eq.s32.totalorder %s29, 0
      %p71 = por %p69, %p70
      %p72 = scmp.ne.s32.totalorder %s60, %s61
      %p73 = scmp.eq.s32.totalorder %s30, 1
      %p74 = por %p72, %p73
      %p76 = scmp.ne.s32.totalorder %s61, %s75
      %p77 = scmp.eq.s32.totalorder %s30, 0
      %p78 = por %p76, %p77
      %s80 = sadd.s32 %s79, 1
      %p83 = scmp.eq.s32.totalorder %s24, 1
      %p84 = scmp.ne.s32.totalorder %s79, %s81
      %p85 = scmp.eq.s32.totalorder %s24, 0
      %p86 = por %p84, %p85
      %p87 = scmp.ne.s32.totalorder %s79, %s81
      %p88 = scmp.eq.s32.totalorder %s29, 1
      %p89 = por %p87, %p88
      %p90 = scmp.ne.s32.totalorder %s81, %s82
      %p91 = scmp.eq.s32.totalorder %s29, 0
      %p92 = por %p90, %p91
      %p93 = scmp.ne.s32.totalorder %s81, %s82
      %p94 = scmp.eq.s32.totalorder %s30, 1
      %p95 = por %p93, %p94
      %p97 = scmp.ne.s32.totalorder %s82, %s96
      %p98 = scmp.eq.s32.totalorder %s30, 0
      %p99 = por %p97, %p98
      %s101 = sadd.s32 %s100, 1
      %p104 = scmp.eq.s32.totalorder %s24, 1
      %p105 = scmp.ne.s32.totalorder %s100, %s102
      %p106 = scmp.eq.s32.totalorder %s24, 0
      %p107 = por %p105, %p106
      %p108 = scmp.ne.s32.totalorder %s100, %s102
      %p109 = scmp.eq.s32.totalorder %s29, 1
      %p110 = por %p108, %p109
      %p111 = scmp.ne.s32.totalorder %s102, %s103
      %p112 = scmp.eq.s32.totalorder %s29, 0
      %p113 = por %p111, %p112
      %p114 = scmp.ne.s32.totalorder %s102, %s103
      %p115 = scmp.eq.s32.totalorder %s30, 1
      %p116 = por %p114, %p115
      %p118 = scmp.ne.s32.totalorder %s103, %s117
      %p119 = scmp.eq.s32.totalorder %s30, 0
      %p120 = por %p118, %p119
      %s122 = sadd.s32 %s121, 1
      %p125 = scmp.eq.s32.totalorder %s24, 1
      %p126 = scmp.ne.s32.totalorder %s121, %s123
      %p127 = scmp.eq.s32.totalorder %s24, 0
      %p128 = por %p126, %p127
      %p129 = scmp.ne.s32.totalorder %s121, %s123
      %p130 = scmp.eq.s32.totalorder %s29, 1
      %p131 = por %p129, %p130
      %p132 = scmp.ne.s32.totalorder %s123, %s124
      %p133 = scmp.eq.s32.totalorder %s29, 0
      %p134 = por %p132, %p133
      %p135 = scmp.ne.s32.totalorder %s123, %s124
      %p136 = scmp.eq.s32.totalorder %s30, 1
      %p137 = por %p135, %p136
      %p139 = scmp.ne.s32.totalorder %s124, %s138
      %p140 = scmp.eq.s32.totalorder %s30, 0
      %p141 = por %p139, %p140
      %s143 = sadd.s32 %s142, 1
      %p146 = scmp.eq.s32.totalorder %s24, 1
      %p147 = scmp.ne.s32.totalorder %s142, %s144
      %p148 = scmp.eq.s32.totalorder %s24, 0
      %p149 = por %p147, %p148
      %p150 = scmp.ne.s32.totalorder %s142, %s144
      %p151 = scmp.eq.s32.totalorder %s29, 1
      %p152 = por %p150, %p151
      %p153 = scmp.ne.s32.totalorder %s144, %s145
      %p154 = scmp.eq.s32.totalorder %s29, 0
      %p155 = por %p153, %p154
      %p156 = scmp.ne.s32.totalorder %s144, %s145
      %p157 = scmp.eq.s32.totalorder %s30, 1
      %p158 = por %p156, %p157
      %p160 = scmp.ne.s32.totalorder %s145, %s159
      %p161 = scmp.eq.s32.totalorder %s30, 0
      %p162 = por %p160, %p161
      %s164 = sadd.s32 %s163, 1
      %p167 = scmp.eq.s32.totalorder %s24, 1
      %p168 = scmp.ne.s32.totalorder %s163, %s165
      %p169 = scmp.eq.s32.totalorder %s24, 0
      %p170 = por %p168, %p169
      %p171 = scmp.ne.s32.totalorder %s163, %s165
      %p172 = scmp.eq.s32.totalorder %s29, 1
      %p173 = por %p171, %p172
      %p174 = scmp.ne.s32.totalorder %s165, %s166
      %p175 = scmp.eq.s32.totalorder %s29, 0
      %p176 = por %p174, %p175
      %p177 = scmp.ne.s32.totalorder %s165, %s166
      %p178 = scmp.eq.s32.totalorder %s30, 1
      %p179 = por %p177, %p178
      %p181 = scmp.ne.s32.totalorder %s166, %s180
      %p182 = scmp.eq.s32.totalorder %s30, 0
      %p183 = por %p181, %p182
      %s185 = sadd.s32 %s184, 1
      %p188 = scmp.eq.s32.totalorder %s24, 1
      %p189 = scmp.ne.s32.totalorder %s184, %s186
      %p190 = scmp.eq.s32.totalorder %s24, 0
      %p191 = por %p189, %p190
      %p192 = scmp.ne.s32.totalorder %s184, %s186
      %p193 = scmp.eq.s32.totalorder %s29, 1
      %p194 = por %p192, %p193
      %p195 = scmp.ne.s32.totalorder %s186, %s187
      %p196 = scmp.eq.s32.totalorder %s29, 0
      %p197 = por %p195, %p196
      %p198 = scmp.ne.s32.totalorder %s186, %s187
      %p199 = scmp.eq.s32.totalorder %s30, 1
      %p200 = por %p198, %p199
      %p202 = scmp.ne.s32.totalorder %s187, %s201
      %p203 = scmp.eq.s32.totalorder %s30, 0
      %p204 = por %p202, %p203
      %s206 = sadd.s32 %s205, 1
      %p209 = scmp.eq.s32.totalorder %s24, 1
      %p210 = scmp.ne.s32.totalorder %s205, %s207
      %p211 = scmp.eq.s32.totalorder %s24, 0
      %p212 = por %p210, %p211
      %p213 = scmp.ne.s32.totalorder %s205, %s207
      %p214 = scmp.eq.s32.totalorder %s29, 1
      %p215 = por %p213, %p214
      %p216 = scmp.ne.s32.totalorder %s207, %s208
      %p217 = scmp.eq.s32.totalorder %s29, 0
      %p218 = por %p216, %p217
      %p219 = scmp.ne.s32.totalorder %s207, %s208
      %p220 = scmp.eq.s32.totalorder %s30, 1
      %p221 = por %p219, %p220
      %p223 = scmp.ne.s32.totalorder %s208, %s222
      %p224 = scmp.eq.s32.totalorder %s30, 0
      %p225 = por %p223, %p224
      %s227 = sadd.s32 %s226, 1
      %p230 = scmp.eq.s32.totalorder %s24, 1
      %p231 = scmp.ne.s32.totalorder %s226, %s228
      %p232 = scmp.eq.s32.totalorder %s24, 0
      %p233 = por %p231, %p232
      %p234 = scmp.ne.s32.totalorder %s226, %s228
      %p235 = scmp.eq.s32.totalorder %s29, 1
      %p236 = por %p234, %p235
      %p237 = scmp.ne.s32.totalorder %s228, %s229
      %p238 = scmp.eq.s32.totalorder %s29, 0
      %p239 = por %p237, %p238
      %p240 = scmp.ne.s32.totalorder %s228, %s229
      %p241 = scmp.eq.s32.totalorder %s30, 1
      %p242 = por %p240, %p241
      %p244 = scmp.ne.s32.totalorder %s229, %s243
      %p245 = scmp.eq.s32.totalorder %s30, 0
      %p246 = por %p244, %p245
      %s248 = sadd.s32 %s247, 1
      %p251 = scmp.eq.s32.totalorder %s24, 1
      %p252 = scmp.ne.s32.totalorder %s247, %s249
      %p253 = scmp.eq.s32.totalorder %s24, 0
      %p254 = por %p252, %p253
      %p255 = scmp.ne.s32.totalorder %s247, %s249
      %p256 = scmp.eq.s32.totalorder %s29, 1
      %p257 = por %p255, %p256
      %p258 = scmp.ne.s32.totalorder %s249, %s250
      %p259 = scmp.eq.s32.totalorder %s29, 0
      %p260 = por %p258, %p259
      %p261 = scmp.ne.s32.totalorder %s249, %s250
      %p262 = scmp.eq.s32.totalorder %s30, 1
      %p263 = por %p261, %p262
      %p265 = scmp.ne.s32.totalorder %s250, %s264
      %p266 = scmp.eq.s32.totalorder %s30, 0
      %p267 = por %p265, %p266
      %s269 = sadd.s32 %s268, 1
      %p272 = scmp.eq.s32.totalorder %s24, 1
      %p273 = scmp.ne.s32.totalorder %s268, %s270
      %p274 = scmp.eq.s32.totalorder %s24, 0
      %p275 = por %p273, %p274
      %p276 = scmp.ne.s32.totalorder %s268, %s270
      %p277 = scmp.eq.s32.totalorder %s29, 1
      %p278 = por %p276, %p277
      %p279 = scmp.ne.s32.totalorder %s270, %s271
      %p280 = scmp.eq.s32.totalorder %s29, 0
      %p281 = por %p279, %p280
      %p282 = scmp.ne.s32.totalorder %s270, %s271
      %p283 = scmp.eq.s32.totalorder %s30, 1
      %p284 = por %p282, %p283
      %p286 = scmp.ne.s32.totalorder %s271, %s285
      %p287 = scmp.eq.s32.totalorder %s30, 0
      %p288 = por %p286, %p287
      %s290 = sadd.s32 %s289, 1
      %p293 = scmp.eq.s32.totalorder %s24, 1
      %p294 = scmp.ne.s32.totalorder %s289, %s291
      %p295 = scmp.eq.s32.totalorder %s24, 0
      %p296 = por %p294, %p295
      %p297 = scmp.ne.s32.totalorder %s289, %s291
      %p298 = scmp.eq.s32.totalorder %s29, 1
      %p299 = por %p297, %p298
      %p300 = scmp.ne.s32.totalorder %s291, %s292
      %p301 = scmp.eq.s32.totalorder %s29, 0
      %p302 = por %p300, %p301
      %p303 = scmp.ne.s32.totalorder %s291, %s292
      %p304 = scmp.eq.s32.totalorder %s30, 1
      %p305 = por %p303, %p304
      %p307 = scmp.ne.s32.totalorder %s292, %s306
      %p308 = scmp.eq.s32.totalorder %s30, 0
      %p309 = por %p307, %p308
      %s311 = sadd.s32 %s310, 1
      %p314 = scmp.eq.s32.totalorder %s24, 1
      %p315 = scmp.ne.s32.totalorder %s310, %s312
      %p316 = scmp.eq.s32.totalorder %s24, 0
      %p317 = por %p315, %p316
      %p318 = scmp.ne.s32.totalorder %s310, %s312
      %p319 = scmp.eq.s32.totalorder %s29, 1
      %p320 = por %p318, %p319
      %p321 = scmp.ne.s32.totalorder %s312, %s313
      %p322 = scmp.eq.s32.totalorder %s29, 0
      %p323 = por %p321, %p322
      %p324 = scmp.ne.s32.totalorder %s312, %s313
      %p325 = scmp.eq.s32.totalorder %s30, 1
      %p326 = por %p324, %p325
      %p328 = scmp.ne.s32.totalorder %s313, %s327
      %p329 = scmp.eq.s32.totalorder %s30, 0
      %p330 = por %p328, %p329
      %s332 = sadd.s32 %s331, 1
      %p335 = scmp.eq.s32.totalorder %s24, 1
      %p336 = scmp.ne.s32.totalorder %s331, %s333
      %p337 = scmp.eq.s32.totalorder %s24, 0
      %p338 = por %p336, %p337
      %p339 = scmp.ne.s32.totalorder %s331, %s333
      %p340 = scmp.eq.s32.totalorder %s29, 1
      %p341 = por %p339, %p340
      %p342 = scmp.ne.s32.totalorder %s333, %s334
      %p343 = scmp.eq.s32.totalorder %s29, 0
      %p344 = por %p342, %p343
      %p345 = scmp.ne.s32.totalorder %s333, %s334
      %p346 = scmp.eq.s32.totalorder %s30, 1
      %p347 = por %p345, %p346
      %p349 = scmp.ne.s32.totalorder %s334, %s348
      %p350 = scmp.eq.s32.totalorder %s30, 0
      %p351 = por %p349, %p350
      %s352 = ssub.s32 %s24, %s31
      %p353 = scmp.eq.s32.totalorder %s352, 0
      %s355 = sadd.s32 %s354, 1
      %s356 = scalar_select %p353, %s354, %s355
      %p359 = pneg %p353
      %p360 = scmp.eq.s32.totalorder %s24, 1
      %p361 = por %p359, %p360
      %p362 = scmp.ne.s32.totalorder %s354, %s357
      %p363 = scmp.eq.s32.totalorder %s24, 0
      %p364 = por %p362, %p363
      %p365 = scmp.ne.s32.totalorder %s354, %s357
      %p366 = scmp.eq.s32.totalorder %s29, 1
      %p367 = por %p365, %p366
      %p368 = scmp.ne.s32.totalorder %s357, %s358
      %p369 = scmp.eq.s32.totalorder %s29, 0
      %p370 = por %p368, %p369
      %p371 = scmp.ne.s32.totalorder %s357, %s358
      %p372 = scmp.eq.s32.totalorder %s30, 1
      %p373 = por %p371, %p372
      %p375 = scmp.ne.s32.totalorder %s358, %s374
      %p376 = scmp.eq.s32.totalorder %s30, 0
      %p377 = por %p375, %p376
      %p378 = scmp.le.s32.totalorder 1, %s24
      %p379 = scmp.lt.s32.totalorder %s24, 3
      %p380 = pnand %p378, %p379
      %p381 = pneg %p380
      // Predicated region
      $region9: #{net_forward.1} parent=5 // pred_check
        _
      $region10: #{net_forward.1} parent=5 // pred_check_branch
        %383 = sbr.rel (%p380) target = $region12
      $region11: #{net_forward.1} parent=5 // pred_region
        %s384 = ssub.s32 %s24, 1
        // Predicated region
        $region13: #{net_forward.1} parent=11 // pred_check
          %p385 = pneg %p71
        $region14: #{net_forward.1} parent=11 // pred_check_branch
          %387 = sbr.rel (%p385) target = $region16
        $region15: #{net_forward.1} parent=11 // pred_region
          _
        $region16: #{net_forward.1} parent=11 // pred_fallthru
          _
        // Predicated region
        $region17: #{net_forward.1} parent=11 // pred_check
          %p388 = pneg %p92
        $region18: #{net_forward.1} parent=11 // pred_check_branch
          %390 = sbr.rel (%p388) target = $region20
        $region19: #{net_forward.1} parent=11 // pred_region
          _
        $region20: #{net_forward.1} parent=11 // pred_fallthru
          _
        // Predicated region
        $region21: #{net_forward.1} parent=11 // pred_check
          %p391 = pneg %p113
        $region22: #{net_forward.1} parent=11 // pred_check_branch
          %393 = sbr.rel (%p391) target = $region24
        $region23: #{net_forward.1} parent=11 // pred_region
          _
        $region24: #{net_forward.1} parent=11 // pred_fallthru
          _
        // Predicated region
        $region25: #{net_forward.1} parent=11 // pred_check
          %p394 = pneg %p134
        $region26: #{net_forward.1} parent=11 // pred_check_branch
          %396 = sbr.rel (%p394) target = $region28
        $region27: #{net_forward.1} parent=11 // pred_region
          _
        $region28: #{net_forward.1} parent=11 // pred_fallthru
          _
        // Predicated region
        $region29: #{net_forward.1} parent=11 // pred_check
          %p397 = pneg %p155
        $region30: #{net_forward.1} parent=11 // pred_check_branch
          %399 = sbr.rel (%p397) target = $region32
        $region31: #{net_forward.1} parent=11 // pred_region
          _
        $region32: #{net_forward.1} parent=11 // pred_fallthru
          _
        // Predicated region
        $region33: #{net_forward.1} parent=11 // pred_check
          %p400 = pneg %p176
        $region34: #{net_forward.1} parent=11 // pred_check_branch
          %402 = sbr.rel (%p400) target = $region36
        $region35: #{net_forward.1} parent=11 // pred_region
          _
        $region36: #{net_forward.1} parent=11 // pred_fallthru
          _
        // Predicated region
        $region37: #{net_forward.1} parent=11 // pred_check
          %p403 = pneg %p197
        $region38: #{net_forward.1} parent=11 // pred_check_branch
          %405 = sbr.rel (%p403) target = $region40
        $region39: #{net_forward.1} parent=11 // pred_region
          _
        $region40: #{net_forward.1} parent=11 // pred_fallthru
          _
        // Predicated region
        $region41: #{net_forward.1} parent=11 // pred_check
          %p406 = pneg %p218
        $region42: #{net_forward.1} parent=11 // pred_check_branch
          %408 = sbr.rel (%p406) target = $region44
        $region43: #{net_forward.1} parent=11 // pred_region
          _
        $region44: #{net_forward.1} parent=11 // pred_fallthru
          _
        // Predicated region
        $region45: #{net_forward.1} parent=11 // pred_check
          %p409 = pneg %p239
        $region46: #{net_forward.1} parent=11 // pred_check_branch
          %411 = sbr.rel (%p409) target = $region48
        $region47: #{net_forward.1} parent=11 // pred_region
          _
        $region48: #{net_forward.1} parent=11 // pred_fallthru
          _
        // Predicated region
        $region49: #{net_forward.1} parent=11 // pred_check
          %p412 = pneg %p260
        $region50: #{net_forward.1} parent=11 // pred_check_branch
          %414 = sbr.rel (%p412) target = $region52
        $region51: #{net_forward.1} parent=11 // pred_region
          _
        $region52: #{net_forward.1} parent=11 // pred_fallthru
          _
        // Predicated region
        $region53: #{net_forward.1} parent=11 // pred_check
          %p415 = pneg %p281
        $region54: #{net_forward.1} parent=11 // pred_check_branch
          %417 = sbr.rel (%p415) target = $region56
        $region55: #{net_forward.1} parent=11 // pred_region
          _
        $region56: #{net_forward.1} parent=11 // pred_fallthru
          _
        // Predicated region
        $region57: #{net_forward.1} parent=11 // pred_check
          %p418 = pneg %p302
        $region58: #{net_forward.1} parent=11 // pred_check_branch
          %420 = sbr.rel (%p418) target = $region60
        $region59: #{net_forward.1} parent=11 // pred_region
          _
        $region60: #{net_forward.1} parent=11 // pred_fallthru
          _
        // Predicated region
        $region61: #{net_forward.1} parent=11 // pred_check
          %p421 = pneg %p323
        $region62: #{net_forward.1} parent=11 // pred_check_branch
          %423 = sbr.rel (%p421) target = $region64
        $region63: #{net_forward.1} parent=11 // pred_region
          _
        $region64: #{net_forward.1} parent=11 // pred_fallthru
          _
        // Predicated region
        $region65: #{net_forward.1} parent=11 // pred_check
          %p424 = pneg %p344
        $region66: #{net_forward.1} parent=11 // pred_check_branch
          %426 = sbr.rel (%p424) target = $region68
        $region67: #{net_forward.1} parent=11 // pred_region
          _
        $region68: #{net_forward.1} parent=11 // pred_fallthru
          _
      $region12: #{net_forward.1} parent=5 // pred_fallthru
        _
      %p427 = scmp.lt.s32.totalorder %s24, 2
      // Predicated region
      $region69: #{net_forward.1} parent=5 // pred_check
        %p428 = pneg %p427
      $region70: #{net_forward.1} parent=5 // pred_check_branch
        %430 = sbr.rel (%p428) target = $region72
      $region71: #{net_forward.1} parent=5 // pred_region
        // Predicated region
        $region73: #{net_forward.1} parent=71 // pred_check
          %p431 = pneg %p44
        $region74: #{net_forward.1} parent=71 // pred_check_branch
          %433 = sbr.rel (%p431) target = $region76
        $region75: #{net_forward.1} parent=71 // pred_region
          %p434 = scmp.lt.s32.totalorder %s24, 1
          %s435 = scalar_select %p434, %s24, 1
          %s436 = smul.addr %s435, 112
          %s437 = smul.addr %s436, 8
          %s438 = scalar_lea.vmem %s0, %s437
        $region76: #{net_forward.1} parent=71 // pred_fallthru
          _
      $region72: #{net_forward.1} parent=5 // pred_fallthru
        _
      %p439 = scmp.le.s32.totalorder 1, %s24
      %p440 = scmp.lt.s32.totalorder %s24, 3
      %p441 = pnand %p439, %p440
      %p442 = pneg %p441
      // Predicated region
      $region77: #{net_forward.1} parent=5 // pred_check
        _
      $region78: #{net_forward.1} parent=5 // pred_check_branch
        %444 = sbr.rel (%p441) target = $region80
      $region79: #{net_forward.1} parent=5 // pred_region
        %s445 = ssub.s32 %s24, 1
        %p446 = scmp.lt.s32.totalorder %s29, 1
        %s447 = scalar_select %p446, %s29, 1
        %s448 = smul.addr %s447, 112
        %s449 = smul.addr %s448, 8
        %s450 = scalar_lea.vmem %s0, %s449
        %p451 = pneg %p50
        %p452 = pneg %p47
        %p453 = pneg %p71
        %p454 = pneg %p68
        %p455 = pneg %p92
        %p456 = pneg %p89
        %p457 = pneg %p113
        %p458 = pneg %p110
        %p459 = pneg %p134
        %p460 = pneg %p131
        %p461 = pneg %p155
        %p462 = pneg %p152
        %p463 = pneg %p176
        %p464 = pneg %p173
        %p465 = pneg %p197
        %p466 = pneg %p194
        %p467 = pneg %p218
        %p468 = pneg %p215
        %p469 = pneg %p239
        %p470 = pneg %p236
        %p471 = pneg %p260
        %p472 = pneg %p257
        %p473 = pneg %p281
        %p474 = pneg %p278
        %p475 = pneg %p302
        %p476 = pneg %p299
        %p477 = pneg %p323
        %p478 = pneg %p320
        %p479 = pneg %p344
        %p480 = pneg %p341
        %p481 = pneg %p370
        %p482 = pneg %p367
        %s483 = sand.u32 %s357, 1
        %s484 = scalar_lea.sflag [#allocation11], %s483
        %s485 = sand.u32 %s357, 1
        %s486 = scalar_lea.vmem [#allocation10], %s485
        %p487 = scmp.lt.s32.totalorder %s29, 1
        %s488 = scalar_select %p487, %s29, 1
        %s489 = smul.addr %s488, 112
        %s490 = smul.addr %s489, 8
        %s491 = scalar_lea.vmem %s0, %s490
        %vm492 = vcmask 130048
        %493 = vst.msk [vmem:[#allocation3] sm:$0xff] %vm492, 0.0
        %vm494 = vcmask 128000
        %495 = vst.msk [vmem:[#allocation3 + $0x8] sm:$0x3f] %vm494, 0.0
        %496 = vst.msk [vmem:[#allocation3 + $0x10] sm:$0xff] %vm492, 0.0
        %497 = vst.msk [vmem:[#allocation3 + $0x18] sm:$0x3f] %vm494, 0.0
        %498 = vst.msk [vmem:[#allocation3 + $0x20] sm:$0xff] %vm492, 0.0
        %499 = vst.msk [vmem:[#allocation3 + $0x28] sm:$0x3f] %vm494, 0.0
        %500 = vst.msk [vmem:[#allocation3 + $0x30] sm:$0xff] %vm492, 0.0
        %501 = vst.msk [vmem:[#allocation3 + $0x38] sm:$0x3f] %vm494, 0.0
        %502 = vst.msk [vmem:[#allocation3 + $0x40] sm:$0xff] %vm492, 0.0
        %503 = vst.msk [vmem:[#allocation3 + $0x48] sm:$0x3f] %vm494, 0.0
        %504 = vst.msk [vmem:[#allocation3 + $0x50] sm:$0xff] %vm492, 0.0
        %505 = vst.msk [vmem:[#allocation3 + $0x58] sm:$0x3f] %vm494, 0.0
        %506 = vst.msk [vmem:[#allocation3 + $0x60] sm:$0xff] %vm492, 0.0
        %507 = vst.msk [vmem:[#allocation3 + $0x68] sm:$0x3f] %vm494, 0.0
        %508 = vst.msk [vmem:[#allocation3 + $0x70] sm:$0xff] %vm492, 0.0
        %509 = vst.msk [vmem:[#allocation3 + $0x78] sm:$0x3f] %vm494, 0.0
        %510 = vst.msk [vmem:[#allocation3 + $0x80] sm:$0xff] %vm492, 0.0
        %511 = vst.msk [vmem:[#allocation3 + $0x88] sm:$0x3f] %vm494, 0.0
        %512 = vst.msk [vmem:[#allocation3 + $0x90] sm:$0xff] %vm492, 0.0
        %513 = vst.msk [vmem:[#allocation3 + $0x98] sm:$0x3f] %vm494, 0.0
        %514 = vst.msk [vmem:[#allocation3 + $0xa0] sm:$0xff] %vm492, 0.0
        %515 = vst.msk [vmem:[#allocation3 + $0xa8] sm:$0x3f] %vm494, 0.0
        %516 = vst.msk [vmem:[#allocation3 + $0xb0] sm:$0xff] %vm492, 0.0
        %517 = vst.msk [vmem:[#allocation3 + $0xb8] sm:$0x3f] %vm494, 0.0
        %518 = vst.msk [vmem:[#allocation3 + $0xc0] sm:$0xff] %vm492, 0.0
        %519 = vst.msk [vmem:[#allocation3 + $0xc8] sm:$0x3f] %vm494, 0.0
        %520 = vst.msk [vmem:[#allocation3 + $0xd0] sm:$0xff] %vm492, 0.0
        %521 = vst.msk [vmem:[#allocation3 + $0xd8] sm:$0x3f] %vm494, 0.0
        %522 = vst.msk [vmem:[#allocation4] sm:$0xff] %vm492, 0.0
        %523 = vst.msk [vmem:[#allocation4 + $0x8] sm:$0x3f] %vm494, 0.0
        %524 = vst.msk [vmem:[#allocation4 + $0x10] sm:$0xff] %vm492, 0.0
        %525 = vst.msk [vmem:[#allocation4 + $0x18] sm:$0x3f] %vm494, 0.0
        %526 = vst.msk [vmem:[#allocation4 + $0x20] sm:$0xff] %vm492, 0.0
        %527 = vst.msk [vmem:[#allocation4 + $0x28] sm:$0x3f] %vm494, 0.0
        %528 = vst.msk [vmem:[#allocation4 + $0x30] sm:$0xff] %vm492, 0.0
        %529 = vst.msk [vmem:[#allocation4 + $0x38] sm:$0x3f] %vm494, 0.0
        %530 = vst.msk [vmem:[#allocation4 + $0x40] sm:$0xff] %vm492, 0.0
        %531 = vst.msk [vmem:[#allocation4 + $0x48] sm:$0x3f] %vm494, 0.0
        %532 = vst.msk [vmem:[#allocation4 + $0x50] sm:$0xff] %vm492, 0.0
        %533 = vst.msk [vmem:[#allocation4 + $0x58] sm:$0x3f] %vm494, 0.0
        %534 = vst.msk [vmem:[#allocation4 + $0x60] sm:$0xff] %vm492, 0.0
        %535 = vst.msk [vmem:[#allocation4 + $0x68] sm:$0x3f] %vm494, 0.0
        %536 = vst.msk [vmem:[#allocation4 + $0x70] sm:$0xff] %vm492, 0.0
        %537 = vst.msk [vmem:[#allocation4 + $0x78] sm:$0x3f] %vm494, 0.0
        %538 = vst.msk [vmem:[#allocation4 + $0x80] sm:$0xff] %vm492, 0.0
        %539 = vst.msk [vmem:[#allocation4 + $0x88] sm:$0x3f] %vm494, 0.0
        %540 = vst.msk [vmem:[#allocation4 + $0x90] sm:$0xff] %vm492, 0.0
        %541 = vst.msk [vmem:[#allocation4 + $0x98] sm:$0x3f] %vm494, 0.0
        %542 = vst.msk [vmem:[#allocation4 + $0xa0] sm:$0xff] %vm492, 0.0
        %543 = vst.msk [vmem:[#allocation4 + $0xa8] sm:$0x3f] %vm494, 0.0
        %544 = vst.msk [vmem:[#allocation4 + $0xb0] sm:$0xff] %vm492, 0.0
        %545 = vst.msk [vmem:[#allocation4 + $0xb8] sm:$0x3f] %vm494, 0.0
        %546 = vst.msk [vmem:[#allocation4 + $0xc0] sm:$0xff] %vm492, 0.0
        %547 = vst.msk [vmem:[#allocation4 + $0xc8] sm:$0x3f] %vm494, 0.0
        %548 = vst.msk [vmem:[#allocation4 + $0xd0] sm:$0xff] %vm492, 0.0
        %549 = vst.msk [vmem:[#allocation4 + $0xd8] sm:$0x3f] %vm494, 0.0
        %vm550 = vcmask 259072
        %551 = vst.msk [vmem:[#allocation7] sm:$0x3f] %vm550, 0.0
        %552 = vst.msk [vmem:[#allocation7 + $0x8] sm:$0x3f] %vm550, 0.0
        %553 = vst.msk [vmem:[#allocation7 + $0x10] sm:$0x3f] %vm550, 0.0
        %554 = vst.msk [vmem:[#allocation7 + $0x18] sm:$0x3f] %vm550, 0.0
        %555 = vst.msk [vmem:[#allocation7 + $0x20] sm:$0x3f] %vm550, 0.0
        %556 = vst.msk [vmem:[#allocation7 + $0x28] sm:$0x3f] %vm550, 0.0
        %557 = vst.msk [vmem:[#allocation8] sm:$0x3f] %vm550, 0.0
        %558 = vst.msk [vmem:[#allocation8 + $0x8] sm:$0x3f] %vm550, 0.0
        %559 = vst.msk [vmem:[#allocation8 + $0x10] sm:$0x3f] %vm550, 0.0
        %560 = vst.msk [vmem:[#allocation8 + $0x18] sm:$0x3f] %vm550, 0.0
        %561 = vst.msk [vmem:[#allocation8 + $0x20] sm:$0x3f] %vm550, 0.0
        %562 = vst.msk [vmem:[#allocation8 + $0x28] sm:$0x3f] %vm550, 0.0
        %v563 = vld [vmem:[%s2] sm:$0x1]
        loop: start=0, step=1, limit=24
        $region81: #{net_forward.1} parent=79 // loop_pre_header
          _
        $region82: #{net_forward.1} parent=79 // loop_header
          %s565 = sphi 0, %s569
          %p566 = scmp.ge.s32.totalorder %s565, 24
        $region83: #{net_forward.1} parent=79 // loop_header_branch
          %568 = sbr.rel (%p566) target = $region87
        $region84: #{net_forward.1} parent=79 // loop_body
          %v571 = vperm.slane %v563, 0
          %v573 = vadd.f32 %v571, 0.0
          %s574 = smul.u32 %s565, 32
          %s575 = scalar_lea.vmem %s491, %s574
          %v576 = vld [vmem:[%s575] sm:$0xff]
          %v577 = vld [vmem:[%s575 + $0x8] sm:$0xff]
          %v578 = vld [vmem:[%s575 + $0x10] sm:$0xff]
          %v579 = vld [vmem:[%s575 + $0x18] sm:$0xf]
          %v580 = vld [vmem:[%s1] sm:$0x1]
          %582 = vset.pattern.permute.xlu0 0
          %583 = vperm.xlu0 %582, %v576
          %v584 = vpop.permute.xlu0 %583
          %587 = vset.pattern.permute.xlu0 0
          %588 = vperm.xlu0 %587, %v577
          %v589 = vpop.permute.xlu0 %588
          %592 = vset.pattern.permute.xlu0 0
          %593 = vperm.xlu0 %592, %v578
          %v594 = vpop.permute.xlu0 %593
          %v597 = vperm.slane %v580, 0
          %v599 = vmul.f32 %v584, %v597
          %v600 = vmul.f32 %v589, %v597
          %v601 = vmul.f32 %v594, %v597
          %v602 = vadd.f32 %v573, %v599
          %v603 = vadd.f32 %v573, %v600
          %v604 = vadd.f32 %v573, %v601
          %s605 = scalar_lea.vmem %s1, 1
          %v606 = vld [vmem:[%s605] sm:$0x1]
          %608 = vset.pattern.permute.xlu0 0
          %609 = vperm.xlu0 %608, %v579
          %v610 = vpop.permute.xlu0 %609
          %v613 = vperm.slane %v606, 0
          %v615 = vmul.f32 %v584, %v613
          %v616 = vmul.f32 %v589, %v613
          %v617 = vmul.f32 %v594, %v613
          %v618 = vmul.f32 %v610, %v613
          %vm623 = vcmask 1046528
          %v624 = vrot.slane %v615, 1
          %v625 = vrot.slane %v616, 1
          %v626 = vsel %vm623, %v624, %v625
          %v627 = vrot.slane %v617, 1
          %v628 = vsel %vm623, %v625, %v627
          %v629 = vrot.slane %v618, 1
          %v630 = vsel %vm623, %v627, %v629
          %v634 = vadd.f32 %v602, %v626
          %v635 = vadd.f32 %v603, %v628
          %v636 = vadd.f32 %v604, %v630
          %s637 = scalar_lea.vmem %s1, 2
          %v638 = vld [vmem:[%s637] sm:$0x1]
          %v640 = vperm.slane %v638, 0
          %v642 = vmul.f32 %v584, %v640
          %v643 = vmul.f32 %v589, %v640
          %v644 = vmul.f32 %v594, %v640
          %v645 = vmul.f32 %v610, %v640
          %vm650 = vcmask 1045504
          %v651 = vrot.slane %v642, 2
          %v652 = vrot.slane %v643, 2
          %v653 = vsel %vm650, %v651, %v652
          %v654 = vrot.slane %v644, 2
          %v655 = vsel %vm650, %v652, %v654
          %v656 = vrot.slane %v645, 2
          %v657 = vsel %vm650, %v654, %v656
          %v661 = vadd.f32 %v634, %v653
          %v662 = vadd.f32 %v635, %v655
          %v663 = vadd.f32 %v636, %v657
          %s664 = scalar_lea.vmem %s1, 3
          %v665 = vld [vmem:[%s664] sm:$0x1]
          %v667 = vperm.slane %v665, 0
          %v669 = vmul.f32 %v584, %v667
          %v670 = vmul.f32 %v589, %v667
          %v671 = vmul.f32 %v594, %v667
          %v672 = vmul.f32 %v610, %v667
          %vm677 = vcmask 1044480
          %v678 = vrot.slane %v669, 3
          %v679 = vrot.slane %v670, 3
          %v680 = vsel %vm677, %v678, %v679
          %v681 = vrot.slane %v671, 3
          %v682 = vsel %vm677, %v679, %v681
          %v683 = vrot.slane %v672, 3
          %v684 = vsel %vm677, %v681, %v683
          %v688 = vadd.f32 %v661, %v680
          %v689 = vadd.f32 %v662, %v682
          %v690 = vadd.f32 %v663, %v684
          %s691 = scalar_lea.vmem %s1, 4
          %v692 = vld [vmem:[%s691] sm:$0x1]
          %v694 = vperm.slane %v692, 0
          %v696 = vmul.f32 %v584, %v694
          %v697 = vmul.f32 %v589, %v694
          %v698 = vmul.f32 %v594, %v694
          %v699 = vmul.f32 %v610, %v694
          %vm704 = vcmask 1043456
          %v705 = vrot.slane %v696, 4
          %v706 = vrot.slane %v697, 4
          %v707 = vsel %vm704, %v705, %v706
          %v708 = vrot.slane %v698, 4
          %v709 = vsel %vm704, %v706, %v708
          %v710 = vrot.slane %v699, 4
          %v711 = vsel %vm704, %v708, %v710
          %v715 = vadd.f32 %v688, %v707
          %v716 = vadd.f32 %v689, %v709
          %v717 = vadd.f32 %v690, %v711
          %s718 = sadd.s32 %s565, 1
          %s719 = smul.u32 %s718, 32
          %s720 = scalar_lea.vmem %s491, %s719
          %v721 = vld [vmem:[%s720] sm:$0xff]
          %v722 = vld [vmem:[%s720 + $0x8] sm:$0xff]
          %v723 = vld [vmem:[%s720 + $0x10] sm:$0xff]
          %v724 = vld [vmem:[%s720 + $0x18] sm:$0xf]
          %s725 = scalar_lea.vmem %s1, 5
          %v726 = vld [vmem:[%s725] sm:$0x1]
          %728 = vset.pattern.permute.xlu0 0
          %729 = vperm.xlu0 %728, %v721
          %v730 = vpop.permute.xlu0 %729
          %733 = vset.pattern.permute.xlu0 0
          %734 = vperm.xlu0 %733, %v722
          %v735 = vpop.permute.xlu0 %734
          %738 = vset.pattern.permute.xlu0 0
          %739 = vperm.xlu0 %738, %v723
          %v740 = vpop.permute.xlu0 %739
          %v743 = vperm.slane %v726, 0
          %v745 = vmul.f32 %v730, %v743
          %v746 = vmul.f32 %v735, %v743
          %v747 = vmul.f32 %v740, %v743
          %v748 = vadd.f32 %v715, %v745
          %v749 = vadd.f32 %v716, %v746
          %v750 = vadd.f32 %v717, %v747
          %s751 = scalar_lea.vmem %s1, 6
          %v752 = vld [vmem:[%s751] sm:$0x1]
          %754 = vset.pattern.permute.xlu0 0
          %755 = vperm.xlu0 %754, %v724
          %v756 = vpop.permute.xlu0 %755
          %v759 = vperm.slane %v752, 0
          %v761 = vmul.f32 %v730, %v759
          %v762 = vmul.f32 %v735, %v759
          %v763 = vmul.f32 %v740, %v759
          %v764 = vmul.f32 %v756, %v759
          %v769 = vrot.slane %v761, 1
          %v770 = vrot.slane %v762, 1
          %v771 = vsel %vm623, %v769, %v770
          %v772 = vrot.slane %v763, 1
          %v773 = vsel %vm623, %v770, %v772
          %v774 = vrot.slane %v764, 1
          %v775 = vsel %vm623, %v772, %v774
          %v779 = vadd.f32 %v748, %v771
          %v780 = vadd.f32 %v749, %v773
          %v781 = vadd.f32 %v750, %v775
          %s782 = scalar_lea.vmem %s1, 7
          %v783 = vld [vmem:[%s782] sm:$0x1]
          %v785 = vperm.slane %v783, 0
          %v787 = vmul.f32 %v730, %v785
          %v788 = vmul.f32 %v735, %v785
          %v789 = vmul.f32 %v740, %v785
          %v790 = vmul.f32 %v756, %v785
          %v795 = vrot.slane %v787, 2
          %v796 = vrot.slane %v788, 2
          %v797 = vsel %vm650, %v795, %v796
          %v798 = vrot.slane %v789, 2
          %v799 = vsel %vm650, %v796, %v798
          %v800 = vrot.slane %v790, 2
          %v801 = vsel %vm650, %v798, %v800
          %v805 = vadd.f32 %v779, %v797
          %v806 = vadd.f32 %v780, %v799
          %v807 = vadd.f32 %v781, %v801
          %s808 = scalar_lea.vmem %s1, 8
          %v809 = vld [vmem:[%s808] sm:$0x1]
          %v811 = vperm.slane %v809, 0
          %v813 = vmul.f32 %v730, %v811
          %v814 = vmul.f32 %v735, %v811
          %v815 = vmul.f32 %v740, %v811
          %v816 = vmul.f32 %v756, %v811
          %v821 = vrot.slane %v813, 3
          %v822 = vrot.slane %v814, 3
          %v823 = vsel %vm677, %v821, %v822
          %v824 = vrot.slane %v815, 3
          %v825 = vsel %vm677, %v822, %v824
          %v826 = vrot.slane %v816, 3
          %v827 = vsel %vm677, %v824, %v826
          %v831 = vadd.f32 %v805, %v823
          %v832 = vadd.f32 %v806, %v825
          %v833 = vadd.f32 %v807, %v827
          %s834 = scalar_lea.vmem %s1, 9
          %v835 = vld [vmem:[%s834] sm:$0x1]
          %v837 = vperm.slane %v835, 0
          %v839 = vmul.f32 %v730, %v837
          %v840 = vmul.f32 %v735, %v837
          %v841 = vmul.f32 %v740, %v837
          %v842 = vmul.f32 %v756, %v837
          %v847 = vrot.slane %v839, 4
          %v848 = vrot.slane %v840, 4
          %v849 = vsel %vm704, %v847, %v848
          %v850 = vrot.slane %v841, 4
          %v851 = vsel %vm704, %v848, %v850
          %v852 = vrot.slane %v842, 4
          %v853 = vsel %vm704, %v850, %v852
          %v857 = vadd.f32 %v831, %v849
          %v858 = vadd.f32 %v832, %v851
          %v859 = vadd.f32 %v833, %v853
          %s860 = sadd.s32 %s565, 2
          %s861 = smul.u32 %s860, 32
          %s862 = scalar_lea.vmem %s491, %s861
          %v863 = vld [vmem:[%s862] sm:$0xff]
          %v864 = vld [vmem:[%s862 + $0x8] sm:$0xff]
          %v865 = vld [vmem:[%s862 + $0x10] sm:$0xff]
          %v866 = vld [vmem:[%s862 + $0x18] sm:$0xf]
          %s867 = scalar_lea.vmem %s1, 10
          %v868 = vld [vmem:[%s867] sm:$0x1]
          %870 = vset.pattern.permute.xlu0 0
          %871 = vperm.xlu0 %870, %v863
          %v872 = vpop.permute.xlu0 %871
          %875 = vset.pattern.permute.xlu0 0
          %876 = vperm.xlu0 %875, %v864
          %v877 = vpop.permute.xlu0 %876
          %880 = vset.pattern.permute.xlu0 0
          %881 = vperm.xlu0 %880, %v865
          %v882 = vpop.permute.xlu0 %881
          %v885 = vperm.slane %v868, 0
          %v887 = vmul.f32 %v872, %v885
          %v888 = vmul.f32 %v877, %v885
          %v889 = vmul.f32 %v882, %v885
          %v890 = vadd.f32 %v857, %v887
          %v891 = vadd.f32 %v858, %v888
          %v892 = vadd.f32 %v859, %v889
          %s893 = scalar_lea.vmem %s1, 11
          %v894 = vld [vmem:[%s893] sm:$0x1]
          %896 = vset.pattern.permute.xlu0 0
          %897 = vperm.xlu0 %896, %v866
          %v898 = vpop.permute.xlu0 %897
          %v901 = vperm.slane %v894, 0
          %v903 = vmul.f32 %v872, %v901
          %v904 = vmul.f32 %v877, %v901
          %v905 = vmul.f32 %v882, %v901
          %v906 = vmul.f32 %v898, %v901
          %v911 = vrot.slane %v903, 1
          %v912 = vrot.slane %v904, 1
          %v913 = vsel %vm623, %v911, %v912
          %v914 = vrot.slane %v905, 1
          %v915 = vsel %vm623, %v912, %v914
          %v916 = vrot.slane %v906, 1
          %v917 = vsel %vm623, %v914, %v916
          %v921 = vadd.f32 %v890, %v913
          %v922 = vadd.f32 %v891, %v915
          %v923 = vadd.f32 %v892, %v917
          %s924 = scalar_lea.vmem %s1, 12
          %v925 = vld [vmem:[%s924] sm:$0x1]
          %v927 = vperm.slane %v925, 0
          %v929 = vmul.f32 %v872, %v927
          %v930 = vmul.f32 %v877, %v927
          %v931 = vmul.f32 %v882, %v927
          %v932 = vmul.f32 %v898, %v927
          %v937 = vrot.slane %v929, 2
          %v938 = vrot.slane %v930, 2
          %v939 = vsel %vm650, %v937, %v938
          %v940 = vrot.slane %v931, 2
          %v941 = vsel %vm650, %v938, %v940
          %v942 = vrot.slane %v932, 2
          %v943 = vsel %vm650, %v940, %v942
          %v947 = vadd.f32 %v921, %v939
          %v948 = vadd.f32 %v922, %v941
          %v949 = vadd.f32 %v923, %v943
          %s950 = scalar_lea.vmem %s1, 13
          %v951 = vld [vmem:[%s950] sm:$0x1]
          %v953 = vperm.slane %v951, 0
          %v955 = vmul.f32 %v872, %v953
          %v956 = vmul.f32 %v877, %v953
          %v957 = vmul.f32 %v882, %v953
          %v958 = vmul.f32 %v898, %v953
          %v963 = vrot.slane %v955, 3
          %v964 = vrot.slane %v956, 3
          %v965 = vsel %vm677, %v963, %v964
          %v966 = vrot.slane %v957, 3
          %v967 = vsel %vm677, %v964, %v966
          %v968 = vrot.slane %v958, 3
          %v969 = vsel %vm677, %v966, %v968
          %v973 = vadd.f32 %v947, %v965
          %v974 = vadd.f32 %v948, %v967
          %v975 = vadd.f32 %v949, %v969
          %s976 = scalar_lea.vmem %s1, 14
          %v977 = vld [vmem:[%s976] sm:$0x1]
          %v979 = vperm.slane %v977, 0
          %v981 = vmul.f32 %v872, %v979
          %v982 = vmul.f32 %v877, %v979
          %v983 = vmul.f32 %v882, %v979
          %v984 = vmul.f32 %v898, %v979
          %v989 = vrot.slane %v981, 4
          %v990 = vrot.slane %v982, 4
          %v991 = vsel %vm704, %v989, %v990
          %v992 = vrot.slane %v983, 4
          %v993 = vsel %vm704, %v990, %v992
          %v994 = vrot.slane %v984, 4
          %v995 = vsel %vm704, %v992, %v994
          %v999 = vadd.f32 %v973, %v991
          %v1000 = vadd.f32 %v974, %v993
          %v1001 = vadd.f32 %v975, %v995
          %s1002 = sadd.s32 %s565, 3
          %s1003 = smul.u32 %s1002, 32
          %s1004 = scalar_lea.vmem %s491, %s1003
          %v1005 = vld [vmem:[%s1004] sm:$0xff]
          %v1006 = vld [vmem:[%s1004 + $0x8] sm:$0xff]
          %v1007 = vld [vmem:[%s1004 + $0x10] sm:$0xff]
          %v1008 = vld [vmem:[%s1004 + $0x18] sm:$0xf]
          %s1009 = scalar_lea.vmem %s1, 15
          %v1010 = vld [vmem:[%s1009] sm:$0x1]
          %1012 = vset.pattern.permute.xlu0 0
          %1013 = vperm.xlu0 %1012, %v1005
          %v1014 = vpop.permute.xlu0 %1013
          %1017 = vset.pattern.permute.xlu0 0
          %1018 = vperm.xlu0 %1017, %v1006
          %v1019 = vpop.permute.xlu0 %1018
          %1022 = vset.pattern.permute.xlu0 0
          %1023 = vperm.xlu0 %1022, %v1007
          %v1024 = vpop.permute.xlu0 %1023
          %v1027 = vperm.slane %v1010, 0
          %v1029 = vmul.f32 %v1014, %v1027
          %v1030 = vmul.f32 %v1019, %v1027
          %v1031 = vmul.f32 %v1024, %v1027
          %v1032 = vadd.f32 %v999, %v1029
          %v1033 = vadd.f32 %v1000, %v1030
          %v1034 = vadd.f32 %v1001, %v1031
          %s1035 = scalar_lea.vmem %s1, 16
          %v1036 = vld [vmem:[%s1035] sm:$0x1]
          %1038 = vset.pattern.permute.xlu0 0
          %1039 = vperm.xlu0 %1038, %v1008
          %v1040 = vpop.permute.xlu0 %1039
          %v1043 = vperm.slane %v1036, 0
          %v1045 = vmul.f32 %v1014, %v1043
          %v1046 = vmul.f32 %v1019, %v1043
          %v1047 = vmul.f32 %v1024, %v1043
          %v1048 = vmul.f32 %v1040, %v1043
          %v1053 = vrot.slane %v1045, 1
          %v1054 = vrot.slane %v1046, 1
          %v1055 = vsel %vm623, %v1053, %v1054
          %v1056 = vrot.slane %v1047, 1
          %v1057 = vsel %vm623, %v1054, %v1056
          %v1058 = vrot.slane %v1048, 1
          %v1059 = vsel %vm623, %v1056, %v1058
          %v1063 = vadd.f32 %v1032, %v1055
          %v1064 = vadd.f32 %v1033, %v1057
          %v1065 = vadd.f32 %v1034, %v1059
          %s1066 = scalar_lea.vmem %s1, 17
          %v1067 = vld [vmem:[%s1066] sm:$0x1]
          %v1069 = vperm.slane %v1067, 0
          %v1071 = vmul.f32 %v1014, %v1069
          %v1072 = vmul.f32 %v1019, %v1069
          %v1073 = vmul.f32 %v1024, %v1069
          %v1074 = vmul.f32 %v1040, %v1069
          %v1079 = vrot.slane %v1071, 2
          %v1080 = vrot.slane %v1072, 2
          %v1081 = vsel %vm650, %v1079, %v1080
          %v1082 = vrot.slane %v1073, 2
          %v1083 = vsel %vm650, %v1080, %v1082
          %v1084 = vrot.slane %v1074, 2
          %v1085 = vsel %vm650, %v1082, %v1084
          %v1089 = vadd.f32 %v1063, %v1081
          %v1090 = vadd.f32 %v1064, %v1083
          %v1091 = vadd.f32 %v1065, %v1085
          %s1092 = scalar_lea.vmem %s1, 18
          %v1093 = vld [vmem:[%s1092] sm:$0x1]
          %v1095 = vperm.slane %v1093, 0
          %v1097 = vmul.f32 %v1014, %v1095
          %v1098 = vmul.f32 %v1019, %v1095
          %v1099 = vmul.f32 %v1024, %v1095
          %v1100 = vmul.f32 %v1040, %v1095
          %v1105 = vrot.slane %v1097, 3
          %v1106 = vrot.slane %v1098, 3
          %v1107 = vsel %vm677, %v1105, %v1106
          %v1108 = vrot.slane %v1099, 3
          %v1109 = vsel %vm677, %v1106, %v1108
          %v1110 = vrot.slane %v1100, 3
          %v1111 = vsel %vm677, %v1108, %v1110
          %v1115 = vadd.f32 %v1089, %v1107
          %v1116 = vadd.f32 %v1090, %v1109
          %v1117 = vadd.f32 %v1091, %v1111
          %s1118 = scalar_lea.vmem %s1, 19
          %v1119 = vld [vmem:[%s1118] sm:$0x1]
          %v1121 = vperm.slane %v1119, 0
          %v1123 = vmul.f32 %v1014, %v1121
          %v1124 = vmul.f32 %v1019, %v1121
          %v1125 = vmul.f32 %v1024, %v1121
          %v1126 = vmul.f32 %v1040, %v1121
          %v1131 = vrot.slane %v1123, 4
          %v1132 = vrot.slane %v1124, 4
          %v1133 = vsel %vm704, %v1131, %v1132
          %v1134 = vrot.slane %v1125, 4
          %v1135 = vsel %vm704, %v1132, %v1134
          %v1136 = vrot.slane %v1126, 4
          %v1137 = vsel %vm704, %v1134, %v1136
          %v1141 = vadd.f32 %v1115, %v1133
          %v1142 = vadd.f32 %v1116, %v1135
          %v1143 = vadd.f32 %v1117, %v1137
          %s1144 = sadd.s32 %s565, 4
          %s1145 = smul.u32 %s1144, 32
          %s1146 = scalar_lea.vmem %s491, %s1145
          %v1147 = vld [vmem:[%s1146] sm:$0xff]
          %v1148 = vld [vmem:[%s1146 + $0x8] sm:$0xff]
          %v1149 = vld [vmem:[%s1146 + $0x10] sm:$0xff]
          %v1150 = vld [vmem:[%s1146 + $0x18] sm:$0xf]
          %s1151 = scalar_lea.vmem %s1, 20
          %v1152 = vld [vmem:[%s1151] sm:$0x1]
          %1154 = vset.pattern.permute.xlu0 0
          %1155 = vperm.xlu0 %1154, %v1147
          %v1156 = vpop.permute.xlu0 %1155
          %1159 = vset.pattern.permute.xlu0 0
          %1160 = vperm.xlu0 %1159, %v1148
          %v1161 = vpop.permute.xlu0 %1160
          %1164 = vset.pattern.permute.xlu0 0
          %1165 = vperm.xlu0 %1164, %v1149
          %v1166 = vpop.permute.xlu0 %1165
          %v1169 = vperm.slane %v1152, 0
          %v1171 = vmul.f32 %v1156, %v1169
          %v1172 = vmul.f32 %v1161, %v1169
          %v1173 = vmul.f32 %v1166, %v1169
          %v1174 = vadd.f32 %v1141, %v1171
          %v1175 = vadd.f32 %v1142, %v1172
          %v1176 = vadd.f32 %v1143, %v1173
          %s1177 = scalar_lea.vmem %s1, 21
          %v1178 = vld [vmem:[%s1177] sm:$0x1]
          %1180 = vset.pattern.permute.xlu0 0
          %1181 = vperm.xlu0 %1180, %v1150
          %v1182 = vpop.permute.xlu0 %1181
          %v1185 = vperm.slane %v1178, 0
          %v1187 = vmul.f32 %v1156, %v1185
          %v1188 = vmul.f32 %v1161, %v1185
          %v1189 = vmul.f32 %v1166, %v1185
          %v1190 = vmul.f32 %v1182, %v1185
          %v1195 = vrot.slane %v1187, 1
          %v1196 = vrot.slane %v1188, 1
          %v1197 = vsel %vm623, %v1195, %v1196
          %v1198 = vrot.slane %v1189, 1
          %v1199 = vsel %vm623, %v1196, %v1198
          %v1200 = vrot.slane %v1190, 1
          %v1201 = vsel %vm623, %v1198, %v1200
          %v1205 = vadd.f32 %v1174, %v1197
          %v1206 = vadd.f32 %v1175, %v1199
          %v1207 = vadd.f32 %v1176, %v1201
          %s1208 = scalar_lea.vmem %s1, 22
          %v1209 = vld [vmem:[%s1208] sm:$0x1]
          %v1211 = vperm.slane %v1209, 0
          %v1213 = vmul.f32 %v1156, %v1211
          %v1214 = vmul.f32 %v1161, %v1211
          %v1215 = vmul.f32 %v1166, %v1211
          %v1216 = vmul.f32 %v1182, %v1211
          %v1221 = vrot.slane %v1213, 2
          %v1222 = vrot.slane %v1214, 2
          %v1223 = vsel %vm650, %v1221, %v1222
          %v1224 = vrot.slane %v1215, 2
          %v1225 = vsel %vm650, %v1222, %v1224
          %v1226 = vrot.slane %v1216, 2
          %v1227 = vsel %vm650, %v1224, %v1226
          %v1231 = vadd.f32 %v1205, %v1223
          %v1232 = vadd.f32 %v1206, %v1225
          %v1233 = vadd.f32 %v1207, %v1227
          %s1234 = scalar_lea.vmem %s1, 23
          %v1235 = vld [vmem:[%s1234] sm:$0x1]
          %v1237 = vperm.slane %v1235, 0
          %v1239 = vmul.f32 %v1156, %v1237
          %v1240 = vmul.f32 %v1161, %v1237
          %v1241 = vmul.f32 %v1166, %v1237
          %v1242 = vmul.f32 %v1182, %v1237
          %v1247 = vrot.slane %v1239, 3
          %v1248 = vrot.slane %v1240, 3
          %v1249 = vsel %vm677, %v1247, %v1248
          %v1250 = vrot.slane %v1241, 3
          %v1251 = vsel %vm677, %v1248, %v1250
          %v1252 = vrot.slane %v1242, 3
          %v1253 = vsel %vm677, %v1250, %v1252
          %v1257 = vadd.f32 %v1231, %v1249
          %v1258 = vadd.f32 %v1232, %v1251
          %v1259 = vadd.f32 %v1233, %v1253
          %s1260 = scalar_lea.vmem %s1, 24
          %v1261 = vld [vmem:[%s1260] sm:$0x1]
          %v1263 = vperm.slane %v1261, 0
          %v1265 = vmul.f32 %v1156, %v1263
          %v1266 = vmul.f32 %v1161, %v1263
          %v1267 = vmul.f32 %v1166, %v1263
          %v1268 = vmul.f32 %v1182, %v1263
          %v1273 = vrot.slane %v1265, 4
          %v1274 = vrot.slane %v1266, 4
          %v1275 = vsel %vm704, %v1273, %v1274
          %v1276 = vrot.slane %v1267, 4
          %v1277 = vsel %vm704, %v1274, %v1276
          %v1278 = vrot.slane %v1268, 4
          %v1279 = vsel %vm704, %v1276, %v1278
          %v1283 = vadd.f32 %v1257, %v1275
          %v1284 = vadd.f32 %v1258, %v1277
          %v1285 = vadd.f32 %v1259, %v1279
          %s1286 = smul.u32 %s565, 24
          %s1287 = scalar_lea.vmem [#allocation2], %s1286
          %1288 = vst.msk [vmem:[%s1287] sm:$0xff] %vm492, %v1283
          %1289 = vst.msk [vmem:[%s1287 + $0x8] sm:$0xff] %vm492, %v1284
          %1290 = vst.msk [vmem:[%s1287 + $0x10] sm:$0xff] %vm492, %v1285
        $region85: #{net_forward.1} parent=79 // loop_footer
          %s569 = sadd.s32 1, %s565
        $region86: #{net_forward.1} parent=79 // loop_footer_branch
          %564 = sbr.rel target = $region82
        $region87: #{net_forward.1} parent=79 // loop_exit
          _
        %v1291 = vlaneseq
        %v1292 = vshrl.u32 %v1291, 7
        %v1293 = vadd.s32 %v1292, 8
        %v1294 = vlaneseq
        %v1295 = vand.u32 %v1294, 127
        %v1296 = vmul.u32 %v1292, 2
        %v1297 = vmul.u32 %v1293, 2
        %vm1298 = vcmp.eq.s32.totalorder %v1295, %v1296
        %vm1299 = vcmp.eq.s32.totalorder %v1295, %v1297
        %v1300 = vsel %vm1298, 1, 0
        %v1301 = vsel %vm1299, 1, 0
        %v1302 = vcvt.s32.f32 %v1300
        %v1303 = vcvt.s32.f32 %v1301
        %v1304 = vadd.s32 %v1296, 1
        %v1305 = vadd.s32 %v1297, 1
        %vm1306 = vcmp.eq.s32.totalorder %v1295, %v1304
        %vm1307 = vcmp.eq.s32.totalorder %v1295, %v1305
        %v1308 = vsel %vm1306, 1, 0
        %v1309 = vsel %vm1307, 1, 0
        %v1310 = vcvt.s32.f32 %v1308
        %v1311 = vcvt.s32.f32 %v1309
        loop: start=0, step=1, limit=12
        $region88: #{net_forward.1} parent=79 // loop_pre_header
          _
        $region89: #{net_forward.1} parent=79 // loop_header
          %s1313 = sphi 0, %s1317
          %p1314 = scmp.ge.s32.totalorder %s1313, 12
        $region90: #{net_forward.1} parent=79 // loop_header_branch
          %1316 = sbr.rel (%p1314) target = $region94
        $region91: #{net_forward.1} parent=79 // loop_body
          %s1318 = smul.u32 %s1313, 2
          %s1319 = smul.u32 %s1318, 24
          %s1320 = scalar_lea.vmem [#allocation2], %s1319
          %v1321 = vld [vmem:[%s1320] sm:$0xff]
          %v1322 = vld [vmem:[%s1320 + $0x8] sm:$0xff]
          %v1323 = vld [vmem:[%s1320 + $0x10] sm:$0xff]
          %s1324 = sadd.s32 %s1318, 1
          %s1325 = smul.u32 %s1324, 24
          %s1326 = scalar_lea.vmem [#allocation2], %s1325
          %v1327 = vld [vmem:[%s1326] sm:$0xff]
          %v1328 = vld [vmem:[%s1326 + $0x8] sm:$0xff]
          %v1329 = vld [vmem:[%s1326 + $0x10] sm:$0xff]
          %v1330 = vmax.f32 %v1321, %v1327
          %v1331 = vmax.f32 %v1322, %v1328
          %v1332 = vmax.f32 %v1323, %v1329
          %vm1333 = vcmask 195584
          %v1335 = vsel %vm1333, %v1302, 0
          %v1338 = vsel %vm1333, %v1303, 0
          %1340 = vmatpush.msra.mxu0 0.0
          %1341 = vmatpush.msra.mxu0 0.0
          %1342 = vmatpush.msra.mxu0 0.0
          %1343 = vmatpush.msra.mxu0 0.0
          %1344 = vmatpush.msra.mxu0 0.0
          %1345 = vmatpush.msra.mxu0 0.0
          %1346 = vmatpush.msra.mxu0 0.0
          %1347 = vmatpush.msra.mxu0 0.0
          %1348 = vmatpush.msra.mxu0 0.0
          %1349 = vmatpush.msra.mxu0 0.0
          %1350 = vmatpush.msra.mxu0 0.0
          %1351 = vmatpush.msra.mxu0 0.0
          %1352 = vmatpush.msra.mxu0 0.0
          %1353 = vmatpush.msra.mxu0 %v1332
          %1354 = vmatpush.msra.mxu0 %v1331
          %1355 = vmatpush.msra.mxu0 %v1330
          %1356 = vmatmul.f32.gmra.mxu0 %v1335
          %v1357 = vpop.f32.mrf.mxu0
          %v1358 = vadd.f32 0.0, %v1357
          %1359 = vmatmul.f32.gmra.mxu0 %v1338
          %v1360 = vpop.f32.mrf.mxu0
          %v1361 = vadd.f32 0.0, %v1360
          %1362 = vdwg.mxu0
          %v1364 = vsel %vm1333, %v1310, 0
          %v1367 = vsel %vm1333, %v1311, 0
          %1369 = vmatpush.msra.mxu0 0.0
          %1370 = vmatpush.msra.mxu0 0.0
          %1371 = vmatpush.msra.mxu0 0.0
          %1372 = vmatpush.msra.mxu0 0.0
          %1373 = vmatpush.msra.mxu0 0.0
          %1374 = vmatpush.msra.mxu0 0.0
          %1375 = vmatpush.msra.mxu0 0.0
          %1376 = vmatpush.msra.mxu0 0.0
          %1377 = vmatpush.msra.mxu0 0.0
          %1378 = vmatpush.msra.mxu0 0.0
          %1379 = vmatpush.msra.mxu0 0.0
          %1380 = vmatpush.msra.mxu0 0.0
          %1381 = vmatpush.msra.mxu0 0.0
          %1382 = vmatpush.msra.mxu0 %v1332
          %1383 = vmatpush.msra.mxu0 %v1331
          %1384 = vmatpush.msra.mxu0 %v1330
          %1385 = vmatmul.f32.gmra.mxu0 %v1364
          %v1386 = vpop.f32.mrf.mxu0
          %v1387 = vadd.f32 0.0, %v1386
          %1388 = vmatmul.f32.gmra.mxu0 %v1367
          %v1389 = vpop.f32.mrf.mxu0
          %v1390 = vadd.f32 0.0, %v1389
          %1391 = vdwg.mxu0
          %v1392 = vmax.f32 %v1358, %v1387
          %v1393 = vmax.f32 %v1361, %v1390
          %v1394 = vmax.f32 %v1392, 0.0
          %v1395 = vmax.f32 %v1393, 0.0
          %s1396 = sadd.s32 %s1313, 1
          %s1397 = smul.u32 %s1396, 16
          %s1398 = scalar_lea.vmem [#allocation3], %s1397
          %1399 = vst.msk [vmem:[%s1398 + $0x1] sm:$0xff] %vm492, %v1394
          %vm1400 = vcmask 125952
          %1401 = vst.msk [vmem:[%s1398 + $0x9] sm:$0xf] %vm1400, %v1395
        $region92: #{net_forward.1} parent=79 // loop_footer
          %s1317 = sadd.s32 1, %s1313
        $region93: #{net_forward.1} parent=79 // loop_footer_branch
          %1312 = sbr.rel target = $region89
        $region94: #{net_forward.1} parent=79 // loop_exit
          _
        %v1402 = vld [vmem:[%s4] sm:$0x1]
        loop: start=0, step=1, limit=12
        $region95: #{net_forward.1} parent=79 // loop_pre_header
          _
        $region96: #{net_forward.1} parent=79 // loop_header
          %s1404 = sphi 0, %s1408
          %p1405 = scmp.ge.s32.totalorder %s1404, 12
        $region97: #{net_forward.1} parent=79 // loop_header_branch
          %1407 = sbr.rel (%p1405) target = $region101
        $region98: #{net_forward.1} parent=79 // loop_body
          %v1410 = vperm.slane %v1402, 0
          %v1412 = vadd.f32 %v1410, 0.0
          %s1413 = smul.u32 %s1404, 16
          %s1414 = scalar_lea.vmem [#allocation3], %s1413
          %v1415 = vld [vmem:[%s1414] sm:$0xff]
          %v1416 = vld [vmem:[%s1414 + $0x8] sm:$0x3f]
          %v1417 = vld [vmem:[%s3] sm:$0xff]
          %v1418 = vld [vmem:[%s3 + $0x8] sm:$0xff]
          %v1420 = vsel %vm492, %v1415, 0
          %v1423 = vsel %vm492, %v1416, 0
          %1425 = vmatpush.msra.mxu0 0.0
          %1426 = vmatpush.msra.mxu0 0.0
          %1427 = vmatpush.msra.mxu0 0.0
          %1428 = vmatpush.msra.mxu0 0.0
          %1429 = vmatpush.msra.mxu0 0.0
          %1430 = vmatpush.msra.mxu0 0.0
          %1431 = vmatpush.msra.mxu0 0.0
          %1432 = vmatpush.msra.mxu0 0.0
          %1433 = vmatpush.msra.mxu0 0.0
          %1434 = vmatpush.msra.mxu0 0.0
          %1435 = vmatpush.msra.mxu0 0.0
          %1436 = vmatpush.msra.mxu0 0.0
          %1437 = vmatpush.msra.mxu0 0.0
          %1438 = vmatpush.msra.mxu0 0.0
          %1439 = vmatpush.msra.mxu0 %v1418
          %1440 = vmatpush.msra.mxu0 %v1417
          %1441 = vmatmul.f32.gmra.mxu0 %v1420
          %v1442 = vpop.f32.mrf.mxu0
          %v1443 = vadd.f32 0.0, %v1442
          %1444 = vmatmul.f32.gmra.mxu0 %v1423
          %v1445 = vpop.f32.mrf.mxu0
          %v1446 = vadd.f32 0.0, %v1445
          %1447 = vdwg.mxu0
          %v1448 = vadd.f32 %v1412, %v1443
          %v1449 = vadd.f32 %v1412, %v1446
          %s1450 = scalar_lea.vmem %s3, 16
          %v1451 = vld [vmem:[%s1450] sm:$0xff]
          %v1452 = vld [vmem:[%s1450 + $0x8] sm:$0xff]
          %vm1453 = vcmask 1046528
          %v1454 = vrot.slane %v1415, 1
          %v1455 = vrot.slane %v1416, 1
          %v1456 = vsel %vm1453, %v1454, %v1455
          %v1457 = vsel %vm492, %v1456, 0
          %v1459 = vsel %vm492, %v1455, 0
          %1461 = vmatpush.msra.mxu0 0.0
          %1462 = vmatpush.msra.mxu0 0.0
          %1463 = vmatpush.msra.mxu0 0.0
          %1464 = vmatpush.msra.mxu0 0.0
          %1465 = vmatpush.msra.mxu0 0.0
          %1466 = vmatpush.msra.mxu0 0.0
          %1467 = vmatpush.msra.mxu0 0.0
          %1468 = vmatpush.msra.mxu0 0.0
          %1469 = vmatpush.msra.mxu0 0.0
          %1470 = vmatpush.msra.mxu0 0.0
          %1471 = vmatpush.msra.mxu0 0.0
          %1472 = vmatpush.msra.mxu0 0.0
          %1473 = vmatpush.msra.mxu0 0.0
          %1474 = vmatpush.msra.mxu0 0.0
          %1475 = vmatpush.msra.mxu0 %v1452
          %1476 = vmatpush.msra.mxu0 %v1451
          %1477 = vmatmul.f32.gmra.mxu0 %v1457
          %v1478 = vpop.f32.mrf.mxu0
          %v1479 = vadd.f32 0.0, %v1478
          %1480 = vmatmul.f32.gmra.mxu0 %v1459
          %v1481 = vpop.f32.mrf.mxu0
          %v1482 = vadd.f32 0.0, %v1481
          %1483 = vdwg.mxu0
          %v1484 = vadd.f32 %v1448, %v1479
          %v1485 = vadd.f32 %v1449, %v1482
          %s1486 = scalar_lea.vmem %s3, 32
          %v1487 = vld [vmem:[%s1486] sm:$0xff]
          %v1488 = vld [vmem:[%s1486 + $0x8] sm:$0xff]
          %vm1489 = vcmask 1045504
          %v1490 = vrot.slane %v1415, 2
          %v1491 = vrot.slane %v1416, 2
          %v1492 = vsel %vm1489, %v1490, %v1491
          %v1493 = vsel %vm492, %v1492, 0
          %v1495 = vsel %vm492, %v1491, 0
          %1497 = vmatpush.msra.mxu0 0.0
          %1498 = vmatpush.msra.mxu0 0.0
          %1499 = vmatpush.msra.mxu0 0.0
          %1500 = vmatpush.msra.mxu0 0.0
          %1501 = vmatpush.msra.mxu0 0.0
          %1502 = vmatpush.msra.mxu0 0.0
          %1503 = vmatpush.msra.mxu0 0.0
          %1504 = vmatpush.msra.mxu0 0.0
          %1505 = vmatpush.msra.mxu0 0.0
          %1506 = vmatpush.msra.mxu0 0.0
          %1507 = vmatpush.msra.mxu0 0.0
          %1508 = vmatpush.msra.mxu0 0.0
          %1509 = vmatpush.msra.mxu0 0.0
          %1510 = vmatpush.msra.mxu0 0.0
          %1511 = vmatpush.msra.mxu0 %v1488
          %1512 = vmatpush.msra.mxu0 %v1487
          %1513 = vmatmul.f32.gmra.mxu0 %v1493
          %v1514 = vpop.f32.mrf.mxu0
          %v1515 = vadd.f32 0.0, %v1514
          %1516 = vmatmul.f32.gmra.mxu0 %v1495
          %v1517 = vpop.f32.mrf.mxu0
          %v1518 = vadd.f32 0.0, %v1517
          %1519 = vdwg.mxu0
          %v1520 = vadd.f32 %v1484, %v1515
          %v1521 = vadd.f32 %v1485, %v1518
          %s1522 = sadd.s32 %s1404, 1
          %s1523 = smul.u32 %s1522, 16
          %s1524 = scalar_lea.vmem [#allocation3], %s1523
          %v1525 = vld [vmem:[%s1524] sm:$0xff]
          %v1526 = vld [vmem:[%s1524 + $0x8] sm:$0x3f]
          %s1527 = scalar_lea.vmem %s3, 48
          %v1528 = vld [vmem:[%s1527] sm:$0xff]
          %v1529 = vld [vmem:[%s1527 + $0x8] sm:$0xff]
          %v1531 = vsel %vm492, %v1525, 0
          %v1534 = vsel %vm492, %v1526, 0
          %1536 = vmatpush.msra.mxu0 0.0
          %1537 = vmatpush.msra.mxu0 0.0
          %1538 = vmatpush.msra.mxu0 0.0
          %1539 = vmatpush.msra.mxu0 0.0
          %1540 = vmatpush.msra.mxu0 0.0
          %1541 = vmatpush.msra.mxu0 0.0
          %1542 = vmatpush.msra.mxu0 0.0
          %1543 = vmatpush.msra.mxu0 0.0
          %1544 = vmatpush.msra.mxu0 0.0
          %1545 = vmatpush.msra.mxu0 0.0
          %1546 = vmatpush.msra.mxu0 0.0
          %1547 = vmatpush.msra.mxu0 0.0
          %1548 = vmatpush.msra.mxu0 0.0
          %1549 = vmatpush.msra.mxu0 0.0
          %1550 = vmatpush.msra.mxu0 %v1529
          %1551 = vmatpush.msra.mxu0 %v1528
          %1552 = vmatmul.f32.gmra.mxu0 %v1531
          %v1553 = vpop.f32.mrf.mxu0
          %v1554 = vadd.f32 0.0, %v1553
          %1555 = vmatmul.f32.gmra.mxu0 %v1534
          %v1556 = vpop.f32.mrf.mxu0
          %v1557 = vadd.f32 0.0, %v1556
          %1558 = vdwg.mxu0
          %v1559 = vadd.f32 %v1520, %v1554
          %v1560 = vadd.f32 %v1521, %v1557
          %s1561 = scalar_lea.vmem %s3, 64
          %v1562 = vld [vmem:[%s1561] sm:$0xff]
          %v1563 = vld [vmem:[%s1561 + $0x8] sm:$0xff]
          %v1564 = vrot.slane %v1525, 1
          %v1565 = vrot.slane %v1526, 1
          %v1566 = vsel %vm1453, %v1564, %v1565
          %v1567 = vsel %vm492, %v1566, 0
          %v1569 = vsel %vm492, %v1565, 0
          %1571 = vmatpush.msra.mxu0 0.0
          %1572 = vmatpush.msra.mxu0 0.0
          %1573 = vmatpush.msra.mxu0 0.0
          %1574 = vmatpush.msra.mxu0 0.0
          %1575 = vmatpush.msra.mxu0 0.0
          %1576 = vmatpush.msra.mxu0 0.0
          %1577 = vmatpush.msra.mxu0 0.0
          %1578 = vmatpush.msra.mxu0 0.0
          %1579 = vmatpush.msra.mxu0 0.0
          %1580 = vmatpush.msra.mxu0 0.0
          %1581 = vmatpush.msra.mxu0 0.0
          %1582 = vmatpush.msra.mxu0 0.0
          %1583 = vmatpush.msra.mxu0 0.0
          %1584 = vmatpush.msra.mxu0 0.0
          %1585 = vmatpush.msra.mxu0 %v1563
          %1586 = vmatpush.msra.mxu0 %v1562
          %1587 = vmatmul.f32.gmra.mxu0 %v1567
          %v1588 = vpop.f32.mrf.mxu0
          %v1589 = vadd.f32 0.0, %v1588
          %1590 = vmatmul.f32.gmra.mxu0 %v1569
          %v1591 = vpop.f32.mrf.mxu0
          %v1592 = vadd.f32 0.0, %v1591
          %1593 = vdwg.mxu0
          %v1594 = vadd.f32 %v1559, %v1589
          %v1595 = vadd.f32 %v1560, %v1592
          %s1596 = scalar_lea.vmem %s3, 80
          %v1597 = vld [vmem:[%s1596] sm:$0xff]
          %v1598 = vld [vmem:[%s1596 + $0x8] sm:$0xff]
          %v1599 = vrot.slane %v1525, 2
          %v1600 = vrot.slane %v1526, 2
          %v1601 = vsel %vm1489, %v1599, %v1600
          %v1602 = vsel %vm492, %v1601, 0
          %v1604 = vsel %vm492, %v1600, 0
          %1606 = vmatpush.msra.mxu0 0.0
          %1607 = vmatpush.msra.mxu0 0.0
          %1608 = vmatpush.msra.mxu0 0.0
          %1609 = vmatpush.msra.mxu0 0.0
          %1610 = vmatpush.msra.mxu0 0.0
          %1611 = vmatpush.msra.mxu0 0.0
          %1612 = vmatpush.msra.mxu0 0.0
          %1613 = vmatpush.msra.mxu0 0.0
          %1614 = vmatpush.msra.mxu0 0.0
          %1615 = vmatpush.msra.mxu0 0.0
          %1616 = vmatpush.msra.mxu0 0.0
          %1617 = vmatpush.msra.mxu0 0.0
          %1618 = vmatpush.msra.mxu0 0.0
          %1619 = vmatpush.msra.mxu0 0.0
          %1620 = vmatpush.msra.mxu0 %v1598
          %1621 = vmatpush.msra.mxu0 %v1597
          %1622 = vmatmul.f32.gmra.mxu0 %v1602
          %v1623 = vpop.f32.mrf.mxu0
          %v1624 = vadd.f32 0.0, %v1623
          %1625 = vmatmul.f32.gmra.mxu0 %v1604
          %v1626 = vpop.f32.mrf.mxu0
          %v1627 = vadd.f32 0.0, %v1626
          %1628 = vdwg.mxu0
          %v1629 = vadd.f32 %v1594, %v1624
          %v1630 = vadd.f32 %v1595, %v1627
          %s1631 = sadd.s32 %s1404, 2
          %s1632 = smul.u32 %s1631, 16
          %s1633 = scalar_lea.vmem [#allocation3], %s1632
          %v1634 = vld [vmem:[%s1633] sm:$0xff]
          %v1635 = vld [vmem:[%s1633 + $0x8] sm:$0x3f]
          %s1636 = scalar_lea.vmem %s3, 96
          %v1637 = vld [vmem:[%s1636] sm:$0xff]
          %v1638 = vld [vmem:[%s1636 + $0x8] sm:$0xff]
          %v1640 = vsel %vm492, %v1634, 0
          %v1643 = vsel %vm492, %v1635, 0
          %1645 = vmatpush.msra.mxu0 0.0
          %1646 = vmatpush.msra.mxu0 0.0
          %1647 = vmatpush.msra.mxu0 0.0
          %1648 = vmatpush.msra.mxu0 0.0
          %1649 = vmatpush.msra.mxu0 0.0
          %1650 = vmatpush.msra.mxu0 0.0
          %1651 = vmatpush.msra.mxu0 0.0
          %1652 = vmatpush.msra.mxu0 0.0
          %1653 = vmatpush.msra.mxu0 0.0
          %1654 = vmatpush.msra.mxu0 0.0
          %1655 = vmatpush.msra.mxu0 0.0
          %1656 = vmatpush.msra.mxu0 0.0
          %1657 = vmatpush.msra.mxu0 0.0
          %1658 = vmatpush.msra.mxu0 0.0
          %1659 = vmatpush.msra.mxu0 %v1638
          %1660 = vmatpush.msra.mxu0 %v1637
          %1661 = vmatmul.f32.gmra.mxu0 %v1640
          %v1662 = vpop.f32.mrf.mxu0
          %v1663 = vadd.f32 0.0, %v1662
          %1664 = vmatmul.f32.gmra.mxu0 %v1643
          %v1665 = vpop.f32.mrf.mxu0
          %v1666 = vadd.f32 0.0, %v1665
          %1667 = vdwg.mxu0
          %v1668 = vadd.f32 %v1629, %v1663
          %v1669 = vadd.f32 %v1630, %v1666
          %s1670 = scalar_lea.vmem %s3, 112
          %v1671 = vld [vmem:[%s1670] sm:$0xff]
          %v1672 = vld [vmem:[%s1670 + $0x8] sm:$0xff]
          %v1673 = vrot.slane %v1634, 1
          %v1674 = vrot.slane %v1635, 1
          %v1675 = vsel %vm1453, %v1673, %v1674
          %v1676 = vsel %vm492, %v1675, 0
          %v1678 = vsel %vm492, %v1674, 0
          %1680 = vmatpush.msra.mxu0 0.0
          %1681 = vmatpush.msra.mxu0 0.0
          %1682 = vmatpush.msra.mxu0 0.0
          %1683 = vmatpush.msra.mxu0 0.0
          %1684 = vmatpush.msra.mxu0 0.0
          %1685 = vmatpush.msra.mxu0 0.0
          %1686 = vmatpush.msra.mxu0 0.0
          %1687 = vmatpush.msra.mxu0 0.0
          %1688 = vmatpush.msra.mxu0 0.0
          %1689 = vmatpush.msra.mxu0 0.0
          %1690 = vmatpush.msra.mxu0 0.0
          %1691 = vmatpush.msra.mxu0 0.0
          %1692 = vmatpush.msra.mxu0 0.0
          %1693 = vmatpush.msra.mxu0 0.0
          %1694 = vmatpush.msra.mxu0 %v1672
          %1695 = vmatpush.msra.mxu0 %v1671
          %1696 = vmatmul.f32.gmra.mxu0 %v1676
          %v1697 = vpop.f32.mrf.mxu0
          %v1698 = vadd.f32 0.0, %v1697
          %1699 = vmatmul.f32.gmra.mxu0 %v1678
          %v1700 = vpop.f32.mrf.mxu0
          %v1701 = vadd.f32 0.0, %v1700
          %1702 = vdwg.mxu0
          %v1703 = vadd.f32 %v1668, %v1698
          %v1704 = vadd.f32 %v1669, %v1701
          %s1705 = scalar_lea.vmem %s3, 128
          %v1706 = vld [vmem:[%s1705] sm:$0xff]
          %v1707 = vld [vmem:[%s1705 + $0x8] sm:$0xff]
          %v1708 = vrot.slane %v1634, 2
          %v1709 = vrot.slane %v1635, 2
          %v1710 = vsel %vm1489, %v1708, %v1709
          %v1711 = vsel %vm492, %v1710, 0
          %v1713 = vsel %vm492, %v1709, 0
          %1715 = vmatpush.msra.mxu0 0.0
          %1716 = vmatpush.msra.mxu0 0.0
          %1717 = vmatpush.msra.mxu0 0.0
          %1718 = vmatpush.msra.mxu0 0.0
          %1719 = vmatpush.msra.mxu0 0.0
          %1720 = vmatpush.msra.mxu0 0.0
          %1721 = vmatpush.msra.mxu0 0.0
          %1722 = vmatpush.msra.mxu0 0.0
          %1723 = vmatpush.msra.mxu0 0.0
          %1724 = vmatpush.msra.mxu0 0.0
          %1725 = vmatpush.msra.mxu0 0.0
          %1726 = vmatpush.msra.mxu0 0.0
          %1727 = vmatpush.msra.mxu0 0.0
          %1728 = vmatpush.msra.mxu0 0.0
          %1729 = vmatpush.msra.mxu0 %v1707
          %1730 = vmatpush.msra.mxu0 %v1706
          %1731 = vmatmul.f32.gmra.mxu0 %v1711
          %v1732 = vpop.f32.mrf.mxu0
          %v1733 = vadd.f32 0.0, %v1732
          %1734 = vmatmul.f32.gmra.mxu0 %v1713
          %v1735 = vpop.f32.mrf.mxu0
          %v1736 = vadd.f32 0.0, %v1735
          %1737 = vdwg.mxu0
          %v1738 = vadd.f32 %v1703, %v1733
          %v1739 = vadd.f32 %v1704, %v1736
          %v1740 = vmax.f32 %v1738, 0.0
          %v1741 = vmax.f32 %v1739, 0.0
          %s1742 = scalar_lea.vmem [#allocation4], %s1523
          %1743 = vst.msk [vmem:[%s1742 + $0x1] sm:$0xff] %vm492, %v1740
          %vm1744 = vcmask 125952
          %1745 = vst.msk [vmem:[%s1742 + $0x9] sm:$0xf] %vm1744, %v1741
        $region99: #{net_forward.1} parent=79 // loop_footer
          %s1408 = sadd.s32 1, %s1404
        $region100: #{net_forward.1} parent=79 // loop_footer_branch
          %1403 = sbr.rel target = $region96
        $region101: #{net_forward.1} parent=79 // loop_exit
          _
        %v1746 = vld [vmem:[%s6] sm:$0x1]
        loop: start=0, step=1, limit=12
        $region102: #{net_forward.1} parent=79 // loop_pre_header
          _
        $region103: #{net_forward.1} parent=79 // loop_header
          %s1748 = sphi 0, %s1752
          %p1749 = scmp.ge.s32.totalorder %s1748, 12
        $region104: #{net_forward.1} parent=79 // loop_header_branch
          %1751 = sbr.rel (%p1749) target = $region108
        $region105: #{net_forward.1} parent=79 // loop_body
          %v1754 = vperm.slane %v1746, 0
          %v1756 = vadd.f32 %v1754, 0.0
          %s1757 = smul.u32 %s1748, 16
          %s1758 = scalar_lea.vmem [#allocation4], %s1757
          %v1759 = vld [vmem:[%s1758] sm:$0xff]
          %v1760 = vld [vmem:[%s1758 + $0x8] sm:$0x3f]
          %v1761 = vld [vmem:[%s5] sm:$0xff]
          %v1762 = vld [vmem:[%s5 + $0x8] sm:$0xff]
          %v1764 = vsel %vm492, %v1759, 0
          %v1767 = vsel %vm492, %v1760, 0
          %1769 = vmatpush.msra.mxu0 0.0
          %1770 = vmatpush.msra.mxu0 0.0
          %1771 = vmatpush.msra.mxu0 0.0
          %1772 = vmatpush.msra.mxu0 0.0
          %1773 = vmatpush.msra.mxu0 0.0
          %1774 = vmatpush.msra.mxu0 0.0
          %1775 = vmatpush.msra.mxu0 0.0
          %1776 = vmatpush.msra.mxu0 0.0
          %1777 = vmatpush.msra.mxu0 0.0
          %1778 = vmatpush.msra.mxu0 0.0
          %1779 = vmatpush.msra.mxu0 0.0
          %1780 = vmatpush.msra.mxu0 0.0
          %1781 = vmatpush.msra.mxu0 0.0
          %1782 = vmatpush.msra.mxu0 0.0
          %1783 = vmatpush.msra.mxu0 %v1762
          %1784 = vmatpush.msra.mxu0 %v1761
          %1785 = vmatmul.f32.gmra.mxu0 %v1764
          %v1786 = vpop.f32.mrf.mxu0
          %v1787 = vadd.f32 0.0, %v1786
          %1788 = vmatmul.f32.gmra.mxu0 %v1767
          %v1789 = vpop.f32.mrf.mxu0
          %v1790 = vadd.f32 0.0, %v1789
          %1791 = vdwg.mxu0
          %v1792 = vadd.f32 %v1756, %v1787
          %v1793 = vadd.f32 %v1756, %v1790
          %s1794 = scalar_lea.vmem %s5, 16
          %v1795 = vld [vmem:[%s1794] sm:$0xff]
          %v1796 = vld [vmem:[%s1794 + $0x8] sm:$0xff]
          %vm1797 = vcmask 1046528
          %v1798 = vrot.slane %v1759, 1
          %v1799 = vrot.slane %v1760, 1
          %v1800 = vsel %vm1797, %v1798, %v1799
          %v1801 = vsel %vm492, %v1800, 0
          %v1803 = vsel %vm492, %v1799, 0
          %1805 = vmatpush.msra.mxu0 0.0
          %1806 = vmatpush.msra.mxu0 0.0
          %1807 = vmatpush.msra.mxu0 0.0
          %1808 = vmatpush.msra.mxu0 0.0
          %1809 = vmatpush.msra.mxu0 0.0
          %1810 = vmatpush.msra.mxu0 0.0
          %1811 = vmatpush.msra.mxu0 0.0
          %1812 = vmatpush.msra.mxu0 0.0
          %1813 = vmatpush.msra.mxu0 0.0
          %1814 = vmatpush.msra.mxu0 0.0
          %1815 = vmatpush.msra.mxu0 0.0
          %1816 = vmatpush.msra.mxu0 0.0
          %1817 = vmatpush.msra.mxu0 0.0
          %1818 = vmatpush.msra.mxu0 0.0
          %1819 = vmatpush.msra.mxu0 %v1796
          %1820 = vmatpush.msra.mxu0 %v1795
          %1821 = vmatmul.f32.gmra.mxu0 %v1801
          %v1822 = vpop.f32.mrf.mxu0
          %v1823 = vadd.f32 0.0, %v1822
          %1824 = vmatmul.f32.gmra.mxu0 %v1803
          %v1825 = vpop.f32.mrf.mxu0
          %v1826 = vadd.f32 0.0, %v1825
          %1827 = vdwg.mxu0
          %v1828 = vadd.f32 %v1792, %v1823
          %v1829 = vadd.f32 %v1793, %v1826
          %s1830 = scalar_lea.vmem %s5, 32
          %v1831 = vld [vmem:[%s1830] sm:$0xff]
          %v1832 = vld [vmem:[%s1830 + $0x8] sm:$0xff]
          %vm1833 = vcmask 1045504
          %v1834 = vrot.slane %v1759, 2
          %v1835 = vrot.slane %v1760, 2
          %v1836 = vsel %vm1833, %v1834, %v1835
          %v1837 = vsel %vm492, %v1836, 0
          %v1839 = vsel %vm492, %v1835, 0
          %1841 = vmatpush.msra.mxu0 0.0
          %1842 = vmatpush.msra.mxu0 0.0
          %1843 = vmatpush.msra.mxu0 0.0
          %1844 = vmatpush.msra.mxu0 0.0
          %1845 = vmatpush.msra.mxu0 0.0
          %1846 = vmatpush.msra.mxu0 0.0
          %1847 = vmatpush.msra.mxu0 0.0
          %1848 = vmatpush.msra.mxu0 0.0
          %1849 = vmatpush.msra.mxu0 0.0
          %1850 = vmatpush.msra.mxu0 0.0
          %1851 = vmatpush.msra.mxu0 0.0
          %1852 = vmatpush.msra.mxu0 0.0
          %1853 = vmatpush.msra.mxu0 0.0
          %1854 = vmatpush.msra.mxu0 0.0
          %1855 = vmatpush.msra.mxu0 %v1832
          %1856 = vmatpush.msra.mxu0 %v1831
          %1857 = vmatmul.f32.gmra.mxu0 %v1837
          %v1858 = vpop.f32.mrf.mxu0
          %v1859 = vadd.f32 0.0, %v1858
          %1860 = vmatmul.f32.gmra.mxu0 %v1839
          %v1861 = vpop.f32.mrf.mxu0
          %v1862 = vadd.f32 0.0, %v1861
          %1863 = vdwg.mxu0
          %v1864 = vadd.f32 %v1828, %v1859
          %v1865 = vadd.f32 %v1829, %v1862
          %s1866 = sadd.s32 %s1748, 1
          %s1867 = smul.u32 %s1866, 16
          %s1868 = scalar_lea.vmem [#allocation4], %s1867
          %v1869 = vld [vmem:[%s1868] sm:$0xff]
          %v1870 = vld [vmem:[%s1868 + $0x8] sm:$0x3f]
          %s1871 = scalar_lea.vmem %s5, 48
          %v1872 = vld [vmem:[%s1871] sm:$0xff]
          %v1873 = vld [vmem:[%s1871 + $0x8] sm:$0xff]
          %v1875 = vsel %vm492, %v1869, 0
          %v1878 = vsel %vm492, %v1870, 0
          %1880 = vmatpush.msra.mxu0 0.0
          %1881 = vmatpush.msra.mxu0 0.0
          %1882 = vmatpush.msra.mxu0 0.0
          %1883 = vmatpush.msra.mxu0 0.0
          %1884 = vmatpush.msra.mxu0 0.0
          %1885 = vmatpush.msra.mxu0 0.0
          %1886 = vmatpush.msra.mxu0 0.0
          %1887 = vmatpush.msra.mxu0 0.0
          %1888 = vmatpush.msra.mxu0 0.0
          %1889 = vmatpush.msra.mxu0 0.0
          %1890 = vmatpush.msra.mxu0 0.0
          %1891 = vmatpush.msra.mxu0 0.0
          %1892 = vmatpush.msra.mxu0 0.0
          %1893 = vmatpush.msra.mxu0 0.0
          %1894 = vmatpush.msra.mxu0 %v1873
          %1895 = vmatpush.msra.mxu0 %v1872
          %1896 = vmatmul.f32.gmra.mxu0 %v1875
          %v1897 = vpop.f32.mrf.mxu0
          %v1898 = vadd.f32 0.0, %v1897
          %1899 = vmatmul.f32.gmra.mxu0 %v1878
          %v1900 = vpop.f32.mrf.mxu0
          %v1901 = vadd.f32 0.0, %v1900
          %1902 = vdwg.mxu0
          %v1903 = vadd.f32 %v1864, %v1898
          %v1904 = vadd.f32 %v1865, %v1901
          %s1905 = scalar_lea.vmem %s5, 64
          %v1906 = vld [vmem:[%s1905] sm:$0xff]
          %v1907 = vld [vmem:[%s1905 + $0x8] sm:$0xff]
          %v1908 = vrot.slane %v1869, 1
          %v1909 = vrot.slane %v1870, 1
          %v1910 = vsel %vm1797, %v1908, %v1909
          %v1911 = vsel %vm492, %v1910, 0
          %v1913 = vsel %vm492, %v1909, 0
          %1915 = vmatpush.msra.mxu0 0.0
          %1916 = vmatpush.msra.mxu0 0.0
          %1917 = vmatpush.msra.mxu0 0.0
          %1918 = vmatpush.msra.mxu0 0.0
          %1919 = vmatpush.msra.mxu0 0.0
          %1920 = vmatpush.msra.mxu0 0.0
          %1921 = vmatpush.msra.mxu0 0.0
          %1922 = vmatpush.msra.mxu0 0.0
          %1923 = vmatpush.msra.mxu0 0.0
          %1924 = vmatpush.msra.mxu0 0.0
          %1925 = vmatpush.msra.mxu0 0.0
          %1926 = vmatpush.msra.mxu0 0.0
          %1927 = vmatpush.msra.mxu0 0.0
          %1928 = vmatpush.msra.mxu0 0.0
          %1929 = vmatpush.msra.mxu0 %v1907
          %1930 = vmatpush.msra.mxu0 %v1906
          %1931 = vmatmul.f32.gmra.mxu0 %v1911
          %v1932 = vpop.f32.mrf.mxu0
          %v1933 = vadd.f32 0.0, %v1932
          %1934 = vmatmul.f32.gmra.mxu0 %v1913
          %v1935 = vpop.f32.mrf.mxu0
          %v1936 = vadd.f32 0.0, %v1935
          %1937 = vdwg.mxu0
          %v1938 = vadd.f32 %v1903, %v1933
          %v1939 = vadd.f32 %v1904, %v1936
          %s1940 = scalar_lea.vmem %s5, 80
          %v1941 = vld [vmem:[%s1940] sm:$0xff]
          %v1942 = vld [vmem:[%s1940 + $0x8] sm:$0xff]
          %v1943 = vrot.slane %v1869, 2
          %v1944 = vrot.slane %v1870, 2
          %v1945 = vsel %vm1833, %v1943, %v1944
          %v1946 = vsel %vm492, %v1945, 0
          %v1948 = vsel %vm492, %v1944, 0
          %1950 = vmatpush.msra.mxu0 0.0
          %1951 = vmatpush.msra.mxu0 0.0
          %1952 = vmatpush.msra.mxu0 0.0
          %1953 = vmatpush.msra.mxu0 0.0
          %1954 = vmatpush.msra.mxu0 0.0
          %1955 = vmatpush.msra.mxu0 0.0
          %1956 = vmatpush.msra.mxu0 0.0
          %1957 = vmatpush.msra.mxu0 0.0
          %1958 = vmatpush.msra.mxu0 0.0
          %1959 = vmatpush.msra.mxu0 0.0
          %1960 = vmatpush.msra.mxu0 0.0
          %1961 = vmatpush.msra.mxu0 0.0
          %1962 = vmatpush.msra.mxu0 0.0
          %1963 = vmatpush.msra.mxu0 0.0
          %1964 = vmatpush.msra.mxu0 %v1942
          %1965 = vmatpush.msra.mxu0 %v1941
          %1966 = vmatmul.f32.gmra.mxu0 %v1946
          %v1967 = vpop.f32.mrf.mxu0
          %v1968 = vadd.f32 0.0, %v1967
          %1969 = vmatmul.f32.gmra.mxu0 %v1948
          %v1970 = vpop.f32.mrf.mxu0
          %v1971 = vadd.f32 0.0, %v1970
          %1972 = vdwg.mxu0
          %v1973 = vadd.f32 %v1938, %v1968
          %v1974 = vadd.f32 %v1939, %v1971
          %s1975 = sadd.s32 %s1748, 2
          %s1976 = smul.u32 %s1975, 16
          %s1977 = scalar_lea.vmem [#allocation4], %s1976
          %v1978 = vld [vmem:[%s1977] sm:$0xff]
          %v1979 = vld [vmem:[%s1977 + $0x8] sm:$0x3f]
          %s1980 = scalar_lea.vmem %s5, 96
          %v1981 = vld [vmem:[%s1980] sm:$0xff]
          %v1982 = vld [vmem:[%s1980 + $0x8] sm:$0xff]
          %v1984 = vsel %vm492, %v1978, 0
          %v1987 = vsel %vm492, %v1979, 0
          %1989 = vmatpush.msra.mxu0 0.0
          %1990 = vmatpush.msra.mxu0 0.0
          %1991 = vmatpush.msra.mxu0 0.0
          %1992 = vmatpush.msra.mxu0 0.0
          %1993 = vmatpush.msra.mxu0 0.0
          %1994 = vmatpush.msra.mxu0 0.0
          %1995 = vmatpush.msra.mxu0 0.0
          %1996 = vmatpush.msra.mxu0 0.0
          %1997 = vmatpush.msra.mxu0 0.0
          %1998 = vmatpush.msra.mxu0 0.0
          %1999 = vmatpush.msra.mxu0 0.0
          %2000 = vmatpush.msra.mxu0 0.0
          %2001 = vmatpush.msra.mxu0 0.0
          %2002 = vmatpush.msra.mxu0 0.0
          %2003 = vmatpush.msra.mxu0 %v1982
          %2004 = vmatpush.msra.mxu0 %v1981
          %2005 = vmatmul.f32.gmra.mxu0 %v1984
          %v2006 = vpop.f32.mrf.mxu0
          %v2007 = vadd.f32 0.0, %v2006
          %2008 = vmatmul.f32.gmra.mxu0 %v1987
          %v2009 = vpop.f32.mrf.mxu0
          %v2010 = vadd.f32 0.0, %v2009
          %2011 = vdwg.mxu0
          %v2012 = vadd.f32 %v1973, %v2007
          %v2013 = vadd.f32 %v1974, %v2010
          %s2014 = scalar_lea.vmem %s5, 112
          %v2015 = vld [vmem:[%s2014] sm:$0xff]
          %v2016 = vld [vmem:[%s2014 + $0x8] sm:$0xff]
          %v2017 = vrot.slane %v1978, 1
          %v2018 = vrot.slane %v1979, 1
          %v2019 = vsel %vm1797, %v2017, %v2018
          %v2020 = vsel %vm492, %v2019, 0
          %v2022 = vsel %vm492, %v2018, 0
          %2024 = vmatpush.msra.mxu0 0.0
          %2025 = vmatpush.msra.mxu0 0.0
          %2026 = vmatpush.msra.mxu0 0.0
          %2027 = vmatpush.msra.mxu0 0.0
          %2028 = vmatpush.msra.mxu0 0.0
          %2029 = vmatpush.msra.mxu0 0.0
          %2030 = vmatpush.msra.mxu0 0.0
          %2031 = vmatpush.msra.mxu0 0.0
          %2032 = vmatpush.msra.mxu0 0.0
          %2033 = vmatpush.msra.mxu0 0.0
          %2034 = vmatpush.msra.mxu0 0.0
          %2035 = vmatpush.msra.mxu0 0.0
          %2036 = vmatpush.msra.mxu0 0.0
          %2037 = vmatpush.msra.mxu0 0.0
          %2038 = vmatpush.msra.mxu0 %v2016
          %2039 = vmatpush.msra.mxu0 %v2015
          %2040 = vmatmul.f32.gmra.mxu0 %v2020
          %v2041 = vpop.f32.mrf.mxu0
          %v2042 = vadd.f32 0.0, %v2041
          %2043 = vmatmul.f32.gmra.mxu0 %v2022
          %v2044 = vpop.f32.mrf.mxu0
          %v2045 = vadd.f32 0.0, %v2044
          %2046 = vdwg.mxu0
          %v2047 = vadd.f32 %v2012, %v2042
          %v2048 = vadd.f32 %v2013, %v2045
          %s2049 = scalar_lea.vmem %s5, 128
          %v2050 = vld [vmem:[%s2049] sm:$0xff]
          %v2051 = vld [vmem:[%s2049 + $0x8] sm:$0xff]
          %v2052 = vrot.slane %v1978, 2
          %v2053 = vrot.slane %v1979, 2
          %v2054 = vsel %vm1833, %v2052, %v2053
          %v2055 = vsel %vm492, %v2054, 0
          %v2057 = vsel %vm492, %v2053, 0
          %2059 = vmatpush.msra.mxu0 0.0
          %2060 = vmatpush.msra.mxu0 0.0
          %2061 = vmatpush.msra.mxu0 0.0
          %2062 = vmatpush.msra.mxu0 0.0
          %2063 = vmatpush.msra.mxu0 0.0
          %2064 = vmatpush.msra.mxu0 0.0
          %2065 = vmatpush.msra.mxu0 0.0
          %2066 = vmatpush.msra.mxu0 0.0
          %2067 = vmatpush.msra.mxu0 0.0
          %2068 = vmatpush.msra.mxu0 0.0
          %2069 = vmatpush.msra.mxu0 0.0
          %2070 = vmatpush.msra.mxu0 0.0
          %2071 = vmatpush.msra.mxu0 0.0
          %2072 = vmatpush.msra.mxu0 0.0
          %2073 = vmatpush.msra.mxu0 %v2051
          %2074 = vmatpush.msra.mxu0 %v2050
          %2075 = vmatmul.f32.gmra.mxu0 %v2055
          %v2076 = vpop.f32.mrf.mxu0
          %v2077 = vadd.f32 0.0, %v2076
          %2078 = vmatmul.f32.gmra.mxu0 %v2057
          %v2079 = vpop.f32.mrf.mxu0
          %v2080 = vadd.f32 0.0, %v2079
          %2081 = vdwg.mxu0
          %v2082 = vadd.f32 %v2047, %v2077
          %v2083 = vadd.f32 %v2048, %v2080
          %s2084 = scalar_lea.vmem [#allocation3], %s1867
          %v2085 = vld [vmem:[%s2084 + $0x1] sm:$0xff]
          %v2086 = vld [vmem:[%s2084 + $0x9] sm:$0xf]
          %v2087 = vadd.f32 %v2082, %v2085
          %v2088 = vadd.f32 %v2083, %v2086
          %v2089 = vmax.f32 %v2087, 0.0
          %v2090 = vmax.f32 %v2088, 0.0
          %s2091 = scalar_lea.vmem [#allocation5], %s1757
          %2092 = vst.msk [vmem:[%s2091] sm:$0xff] %vm492, %v2089
          %vm2093 = vcmask 125952
          %2094 = vst.msk [vmem:[%s2091 + $0x8] sm:$0xf] %vm2093, %v2090
        $region106: #{net_forward.1} parent=79 // loop_footer
          %s1752 = sadd.s32 1, %s1748
        $region107: #{net_forward.1} parent=79 // loop_footer_branch
          %1747 = sbr.rel target = $region103
        $region108: #{net_forward.1} parent=79 // loop_exit
          _
        %v2095 = vld [vmem:[%s8] sm:$0x1]
        loop: start=0, step=1, limit=8
        $region109: #{net_forward.1} parent=79 // loop_pre_header
          _
        $region110: #{net_forward.1} parent=79 // loop_header
          %s2097 = sphi 0, %s2101
          %p2098 = scmp.ge.s32.totalorder %s2097, 8
        $region111: #{net_forward.1} parent=79 // loop_header_branch
          %2100 = sbr.rel (%p2098) target = $region115
        $region112: #{net_forward.1} parent=79 // loop_body
          %v2103 = vperm.slane %v2095, 0
          %v2105 = vadd.f32 %v2103, 0.0
          %s2106 = smul.u32 %s2097, 16
          %s2107 = scalar_lea.vmem [#allocation5], %s2106
          %v2108 = vld [vmem:[%s2107] sm:$0xff]
          %v2109 = vld [vmem:[%s2107 + $0x8] sm:$0xf]
          %v2110 = vld [vmem:[%s7] sm:$0xff]
          %v2111 = vld [vmem:[%s7 + $0x8] sm:$0xff]
          %v2113 = vsel %vm492, %v2108, 0
          %2115 = vmatpush.msra.mxu0 0.0
          %2116 = vmatpush.msra.mxu0 0.0
          %2117 = vmatpush.msra.mxu0 0.0
          %2118 = vmatpush.msra.mxu0 0.0
          %2119 = vmatpush.msra.mxu0 0.0
          %2120 = vmatpush.msra.mxu0 0.0
          %2121 = vmatpush.msra.mxu0 0.0
          %2122 = vmatpush.msra.mxu0 0.0
          %2123 = vmatpush.msra.mxu0 0.0
          %2124 = vmatpush.msra.mxu0 0.0
          %2125 = vmatpush.msra.mxu0 0.0
          %2126 = vmatpush.msra.mxu0 0.0
          %2127 = vmatpush.msra.mxu0 0.0
          %2128 = vmatpush.msra.mxu0 0.0
          %2129 = vmatpush.msra.mxu0 %v2111
          %2130 = vmatpush.msra.mxu0 %v2110
          %2131 = vmatmul.f32.gmra.mxu0 %v2113
          %v2132 = vpop.f32.mrf.mxu0
          %v2133 = vadd.f32 0.0, %v2132
          %2134 = vdwg.mxu0
          %v2135 = vadd.f32 %v2105, %v2133
          %s2136 = scalar_lea.vmem %s7, 16
          %v2137 = vld [vmem:[%s2136] sm:$0xff]
          %v2138 = vld [vmem:[%s2136 + $0x8] sm:$0xff]
          %vm2140 = vcmask 1046528
          %v2141 = vrot.slane %v2108, 1
          %v2142 = vrot.slane %v2109, 1
          %v2143 = vsel %vm2140, %v2141, %v2142
          %v2144 = vsel %vm492, %v2143, 0
          %2146 = vmatpush.msra.mxu0 0.0
          %2147 = vmatpush.msra.mxu0 0.0
          %2148 = vmatpush.msra.mxu0 0.0
          %2149 = vmatpush.msra.mxu0 0.0
          %2150 = vmatpush.msra.mxu0 0.0
          %2151 = vmatpush.msra.mxu0 0.0
          %2152 = vmatpush.msra.mxu0 0.0
          %2153 = vmatpush.msra.mxu0 0.0
          %2154 = vmatpush.msra.mxu0 0.0
          %2155 = vmatpush.msra.mxu0 0.0
          %2156 = vmatpush.msra.mxu0 0.0
          %2157 = vmatpush.msra.mxu0 0.0
          %2158 = vmatpush.msra.mxu0 0.0
          %2159 = vmatpush.msra.mxu0 0.0
          %2160 = vmatpush.msra.mxu0 %v2138
          %2161 = vmatpush.msra.mxu0 %v2137
          %2162 = vmatmul.f32.gmra.mxu0 %v2144
          %v2163 = vpop.f32.mrf.mxu0
          %v2164 = vadd.f32 0.0, %v2163
          %2165 = vdwg.mxu0
          %v2166 = vadd.f32 %v2135, %v2164
          %s2167 = scalar_lea.vmem %s7, 32
          %v2168 = vld [vmem:[%s2167] sm:$0xff]
          %v2169 = vld [vmem:[%s2167 + $0x8] sm:$0xff]
          %vm2170 = vcmask 1045504
          %v2171 = vrot.slane %v2108, 2
          %v2172 = vrot.slane %v2109, 2
          %v2173 = vsel %vm2170, %v2171, %v2172
          %v2174 = vsel %vm492, %v2173, 0
          %2176 = vmatpush.msra.mxu0 0.0
          %2177 = vmatpush.msra.mxu0 0.0
          %2178 = vmatpush.msra.mxu0 0.0
          %2179 = vmatpush.msra.mxu0 0.0
          %2180 = vmatpush.msra.mxu0 0.0
          %2181 = vmatpush.msra.mxu0 0.0
          %2182 = vmatpush.msra.mxu0 0.0
          %2183 = vmatpush.msra.mxu0 0.0
          %2184 = vmatpush.msra.mxu0 0.0
          %2185 = vmatpush.msra.mxu0 0.0
          %2186 = vmatpush.msra.mxu0 0.0
          %2187 = vmatpush.msra.mxu0 0.0
          %2188 = vmatpush.msra.mxu0 0.0
          %2189 = vmatpush.msra.mxu0 0.0
          %2190 = vmatpush.msra.mxu0 %v2169
          %2191 = vmatpush.msra.mxu0 %v2168
          %2192 = vmatmul.f32.gmra.mxu0 %v2174
          %v2193 = vpop.f32.mrf.mxu0
          %v2194 = vadd.f32 0.0, %v2193
          %2195 = vdwg.mxu0
          %v2196 = vadd.f32 %v2166, %v2194
          %s2197 = scalar_lea.vmem %s7, 48
          %v2198 = vld [vmem:[%s2197] sm:$0xff]
          %v2199 = vld [vmem:[%s2197 + $0x8] sm:$0xff]
          %vm2200 = vcmask 1044480
          %v2201 = vrot.slane %v2108, 3
          %v2202 = vrot.slane %v2109, 3
          %v2203 = vsel %vm2200, %v2201, %v2202
          %v2204 = vsel %vm492, %v2203, 0
          %2206 = vmatpush.msra.mxu0 0.0
          %2207 = vmatpush.msra.mxu0 0.0
          %2208 = vmatpush.msra.mxu0 0.0
          %2209 = vmatpush.msra.mxu0 0.0
          %2210 = vmatpush.msra.mxu0 0.0
          %2211 = vmatpush.msra.mxu0 0.0
          %2212 = vmatpush.msra.mxu0 0.0
          %2213 = vmatpush.msra.mxu0 0.0
          %2214 = vmatpush.msra.mxu0 0.0
          %2215 = vmatpush.msra.mxu0 0.0
          %2216 = vmatpush.msra.mxu0 0.0
          %2217 = vmatpush.msra.mxu0 0.0
          %2218 = vmatpush.msra.mxu0 0.0
          %2219 = vmatpush.msra.mxu0 0.0
          %2220 = vmatpush.msra.mxu0 %v2199
          %2221 = vmatpush.msra.mxu0 %v2198
          %2222 = vmatmul.f32.gmra.mxu0 %v2204
          %v2223 = vpop.f32.mrf.mxu0
          %v2224 = vadd.f32 0.0, %v2223
          %2225 = vdwg.mxu0
          %v2226 = vadd.f32 %v2196, %v2224
          %s2227 = scalar_lea.vmem %s7, 64
          %v2228 = vld [vmem:[%s2227] sm:$0xff]
          %v2229 = vld [vmem:[%s2227 + $0x8] sm:$0xff]
          %vm2230 = vcmask 1043456
          %v2231 = vrot.slane %v2108, 4
          %v2232 = vrot.slane %v2109, 4
          %v2233 = vsel %vm2230, %v2231, %v2232
          %v2234 = vsel %vm492, %v2233, 0
          %2236 = vmatpush.msra.mxu0 0.0
          %2237 = vmatpush.msra.mxu0 0.0
          %2238 = vmatpush.msra.mxu0 0.0
          %2239 = vmatpush.msra.mxu0 0.0
          %2240 = vmatpush.msra.mxu0 0.0
          %2241 = vmatpush.msra.mxu0 0.0
          %2242 = vmatpush.msra.mxu0 0.0
          %2243 = vmatpush.msra.mxu0 0.0
          %2244 = vmatpush.msra.mxu0 0.0
          %2245 = vmatpush.msra.mxu0 0.0
          %2246 = vmatpush.msra.mxu0 0.0
          %2247 = vmatpush.msra.mxu0 0.0
          %2248 = vmatpush.msra.mxu0 0.0
          %2249 = vmatpush.msra.mxu0 0.0
          %2250 = vmatpush.msra.mxu0 %v2229
          %2251 = vmatpush.msra.mxu0 %v2228
          %2252 = vmatmul.f32.gmra.mxu0 %v2234
          %v2253 = vpop.f32.mrf.mxu0
          %v2254 = vadd.f32 0.0, %v2253
          %2255 = vdwg.mxu0
          %v2256 = vadd.f32 %v2226, %v2254
          %s2257 = sadd.s32 %s2097, 1
          %s2258 = smul.u32 %s2257, 16
          %s2259 = scalar_lea.vmem [#allocation5], %s2258
          %v2260 = vld [vmem:[%s2259] sm:$0xff]
          %v2261 = vld [vmem:[%s2259 + $0x8] sm:$0xf]
          %s2262 = scalar_lea.vmem %s7, 80
          %v2263 = vld [vmem:[%s2262] sm:$0xff]
          %v2264 = vld [vmem:[%s2262 + $0x8] sm:$0xff]
          %v2266 = vsel %vm492, %v2260, 0
          %2268 = vmatpush.msra.mxu0 0.0
          %2269 = vmatpush.msra.mxu0 0.0
          %2270 = vmatpush.msra.mxu0 0.0
          %2271 = vmatpush.msra.mxu0 0.0
          %2272 = vmatpush.msra.mxu0 0.0
          %2273 = vmatpush.msra.mxu0 0.0
          %2274 = vmatpush.msra.mxu0 0.0
          %2275 = vmatpush.msra.mxu0 0.0
          %2276 = vmatpush.msra.mxu0 0.0
          %2277 = vmatpush.msra.mxu0 0.0
          %2278 = vmatpush.msra.mxu0 0.0
          %2279 = vmatpush.msra.mxu0 0.0
          %2280 = vmatpush.msra.mxu0 0.0
          %2281 = vmatpush.msra.mxu0 0.0
          %2282 = vmatpush.msra.mxu0 %v2264
          %2283 = vmatpush.msra.mxu0 %v2263
          %2284 = vmatmul.f32.gmra.mxu0 %v2266
          %v2285 = vpop.f32.mrf.mxu0
          %v2286 = vadd.f32 0.0, %v2285
          %2287 = vdwg.mxu0
          %v2288 = vadd.f32 %v2256, %v2286
          %s2289 = scalar_lea.vmem %s7, 96
          %v2290 = vld [vmem:[%s2289] sm:$0xff]
          %v2291 = vld [vmem:[%s2289 + $0x8] sm:$0xff]
          %v2293 = vrot.slane %v2260, 1
          %v2294 = vrot.slane %v2261, 1
          %v2295 = vsel %vm2140, %v2293, %v2294
          %v2296 = vsel %vm492, %v2295, 0
          %2298 = vmatpush.msra.mxu0 0.0
          %2299 = vmatpush.msra.mxu0 0.0
          %2300 = vmatpush.msra.mxu0 0.0
          %2301 = vmatpush.msra.mxu0 0.0
          %2302 = vmatpush.msra.mxu0 0.0
          %2303 = vmatpush.msra.mxu0 0.0
          %2304 = vmatpush.msra.mxu0 0.0
          %2305 = vmatpush.msra.mxu0 0.0
          %2306 = vmatpush.msra.mxu0 0.0
          %2307 = vmatpush.msra.mxu0 0.0
          %2308 = vmatpush.msra.mxu0 0.0
          %2309 = vmatpush.msra.mxu0 0.0
          %2310 = vmatpush.msra.mxu0 0.0
          %2311 = vmatpush.msra.mxu0 0.0
          %2312 = vmatpush.msra.mxu0 %v2291
          %2313 = vmatpush.msra.mxu0 %v2290
          %2314 = vmatmul.f32.gmra.mxu0 %v2296
          %v2315 = vpop.f32.mrf.mxu0
          %v2316 = vadd.f32 0.0, %v2315
          %2317 = vdwg.mxu0
          %v2318 = vadd.f32 %v2288, %v2316
          %s2319 = scalar_lea.vmem %s7, 112
          %v2320 = vld [vmem:[%s2319] sm:$0xff]
          %v2321 = vld [vmem:[%s2319 + $0x8] sm:$0xff]
          %v2322 = vrot.slane %v2260, 2
          %v2323 = vrot.slane %v2261, 2
          %v2324 = vsel %vm2170, %v2322, %v2323
          %v2325 = vsel %vm492, %v2324, 0
          %2327 = vmatpush.msra.mxu0 0.0
          %2328 = vmatpush.msra.mxu0 0.0
          %2329 = vmatpush.msra.mxu0 0.0
          %2330 = vmatpush.msra.mxu0 0.0
          %2331 = vmatpush.msra.mxu0 0.0
          %2332 = vmatpush.msra.mxu0 0.0
          %2333 = vmatpush.msra.mxu0 0.0
          %2334 = vmatpush.msra.mxu0 0.0
          %2335 = vmatpush.msra.mxu0 0.0
          %2336 = vmatpush.msra.mxu0 0.0
          %2337 = vmatpush.msra.mxu0 0.0
          %2338 = vmatpush.msra.mxu0 0.0
          %2339 = vmatpush.msra.mxu0 0.0
          %2340 = vmatpush.msra.mxu0 0.0
          %2341 = vmatpush.msra.mxu0 %v2321
          %2342 = vmatpush.msra.mxu0 %v2320
          %2343 = vmatmul.f32.gmra.mxu0 %v2325
          %v2344 = vpop.f32.mrf.mxu0
          %v2345 = vadd.f32 0.0, %v2344
          %2346 = vdwg.mxu0
          %v2347 = vadd.f32 %v2318, %v2345
          %s2348 = scalar_lea.vmem %s7, 128
          %v2349 = vld [vmem:[%s2348] sm:$0xff]
          %v2350 = vld [vmem:[%s2348 + $0x8] sm:$0xff]
          %v2351 = vrot.slane %v2260, 3
          %v2352 = vrot.slane %v2261, 3
          %v2353 = vsel %vm2200, %v2351, %v2352
          %v2354 = vsel %vm492, %v2353, 0
          %2356 = vmatpush.msra.mxu0 0.0
          %2357 = vmatpush.msra.mxu0 0.0
          %2358 = vmatpush.msra.mxu0 0.0
          %2359 = vmatpush.msra.mxu0 0.0
          %2360 = vmatpush.msra.mxu0 0.0
          %2361 = vmatpush.msra.mxu0 0.0
          %2362 = vmatpush.msra.mxu0 0.0
          %2363 = vmatpush.msra.mxu0 0.0
          %2364 = vmatpush.msra.mxu0 0.0
          %2365 = vmatpush.msra.mxu0 0.0
          %2366 = vmatpush.msra.mxu0 0.0
          %2367 = vmatpush.msra.mxu0 0.0
          %2368 = vmatpush.msra.mxu0 0.0
          %2369 = vmatpush.msra.mxu0 0.0
          %2370 = vmatpush.msra.mxu0 %v2350
          %2371 = vmatpush.msra.mxu0 %v2349
          %2372 = vmatmul.f32.gmra.mxu0 %v2354
          %v2373 = vpop.f32.mrf.mxu0
          %v2374 = vadd.f32 0.0, %v2373
          %2375 = vdwg.mxu0
          %v2376 = vadd.f32 %v2347, %v2374
          %s2377 = scalar_lea.vmem %s7, 144
          %v2378 = vld [vmem:[%s2377] sm:$0xff]
          %v2379 = vld [vmem:[%s2377 + $0x8] sm:$0xff]
          %v2380 = vrot.slane %v2260, 4
          %v2381 = vrot.slane %v2261, 4
          %v2382 = vsel %vm2230, %v2380, %v2381
          %v2383 = vsel %vm492, %v2382, 0
          %2385 = vmatpush.msra.mxu0 0.0
          %2386 = vmatpush.msra.mxu0 0.0
          %2387 = vmatpush.msra.mxu0 0.0
          %2388 = vmatpush.msra.mxu0 0.0
          %2389 = vmatpush.msra.mxu0 0.0
          %2390 = vmatpush.msra.mxu0 0.0
          %2391 = vmatpush.msra.mxu0 0.0
          %2392 = vmatpush.msra.mxu0 0.0
          %2393 = vmatpush.msra.mxu0 0.0
          %2394 = vmatpush.msra.mxu0 0.0
          %2395 = vmatpush.msra.mxu0 0.0
          %2396 = vmatpush.msra.mxu0 0.0
          %2397 = vmatpush.msra.mxu0 0.0
          %2398 = vmatpush.msra.mxu0 0.0
          %2399 = vmatpush.msra.mxu0 %v2379
          %2400 = vmatpush.msra.mxu0 %v2378
          %2401 = vmatmul.f32.gmra.mxu0 %v2383
          %v2402 = vpop.f32.mrf.mxu0
          %v2403 = vadd.f32 0.0, %v2402
          %2404 = vdwg.mxu0
          %v2405 = vadd.f32 %v2376, %v2403
          %s2406 = sadd.s32 %s2097, 2
          %s2407 = smul.u32 %s2406, 16
          %s2408 = scalar_lea.vmem [#allocation5], %s2407
          %v2409 = vld [vmem:[%s2408] sm:$0xff]
          %v2410 = vld [vmem:[%s2408 + $0x8] sm:$0xf]
          %s2411 = scalar_lea.vmem %s7, 160
          %v2412 = vld [vmem:[%s2411] sm:$0xff]
          %v2413 = vld [vmem:[%s2411 + $0x8] sm:$0xff]
          %v2415 = vsel %vm492, %v2409, 0
          %2417 = vmatpush.msra.mxu0 0.0
          %2418 = vmatpush.msra.mxu0 0.0
          %2419 = vmatpush.msra.mxu0 0.0
          %2420 = vmatpush.msra.mxu0 0.0
          %2421 = vmatpush.msra.mxu0 0.0
          %2422 = vmatpush.msra.mxu0 0.0
          %2423 = vmatpush.msra.mxu0 0.0
          %2424 = vmatpush.msra.mxu0 0.0
          %2425 = vmatpush.msra.mxu0 0.0
          %2426 = vmatpush.msra.mxu0 0.0
          %2427 = vmatpush.msra.mxu0 0.0
          %2428 = vmatpush.msra.mxu0 0.0
          %2429 = vmatpush.msra.mxu0 0.0
          %2430 = vmatpush.msra.mxu0 0.0
          %2431 = vmatpush.msra.mxu0 %v2413
          %2432 = vmatpush.msra.mxu0 %v2412
          %2433 = vmatmul.f32.gmra.mxu0 %v2415
          %v2434 = vpop.f32.mrf.mxu0
          %v2435 = vadd.f32 0.0, %v2434
          %2436 = vdwg.mxu0
          %v2437 = vadd.f32 %v2405, %v2435
          %s2438 = scalar_lea.vmem %s7, 176
          %v2439 = vld [vmem:[%s2438] sm:$0xff]
          %v2440 = vld [vmem:[%s2438 + $0x8] sm:$0xff]
          %v2442 = vrot.slane %v2409, 1
          %v2443 = vrot.slane %v2410, 1
          %v2444 = vsel %vm2140, %v2442, %v2443
          %v2445 = vsel %vm492, %v2444, 0
          %2447 = vmatpush.msra.mxu0 0.0
          %2448 = vmatpush.msra.mxu0 0.0
          %2449 = vmatpush.msra.mxu0 0.0
          %2450 = vmatpush.msra.mxu0 0.0
          %2451 = vmatpush.msra.mxu0 0.0
          %2452 = vmatpush.msra.mxu0 0.0
          %2453 = vmatpush.msra.mxu0 0.0
          %2454 = vmatpush.msra.mxu0 0.0
          %2455 = vmatpush.msra.mxu0 0.0
          %2456 = vmatpush.msra.mxu0 0.0
          %2457 = vmatpush.msra.mxu0 0.0
          %2458 = vmatpush.msra.mxu0 0.0
          %2459 = vmatpush.msra.mxu0 0.0
          %2460 = vmatpush.msra.mxu0 0.0
          %2461 = vmatpush.msra.mxu0 %v2440
          %2462 = vmatpush.msra.mxu0 %v2439
          %2463 = vmatmul.f32.gmra.mxu0 %v2445
          %v2464 = vpop.f32.mrf.mxu0
          %v2465 = vadd.f32 0.0, %v2464
          %2466 = vdwg.mxu0
          %v2467 = vadd.f32 %v2437, %v2465
          %s2468 = scalar_lea.vmem %s7, 192
          %v2469 = vld [vmem:[%s2468] sm:$0xff]
          %v2470 = vld [vmem:[%s2468 + $0x8] sm:$0xff]
          %v2471 = vrot.slane %v2409, 2
          %v2472 = vrot.slane %v2410, 2
          %v2473 = vsel %vm2170, %v2471, %v2472
          %v2474 = vsel %vm492, %v2473, 0
          %2476 = vmatpush.msra.mxu0 0.0
          %2477 = vmatpush.msra.mxu0 0.0
          %2478 = vmatpush.msra.mxu0 0.0
          %2479 = vmatpush.msra.mxu0 0.0
          %2480 = vmatpush.msra.mxu0 0.0
          %2481 = vmatpush.msra.mxu0 0.0
          %2482 = vmatpush.msra.mxu0 0.0
          %2483 = vmatpush.msra.mxu0 0.0
          %2484 = vmatpush.msra.mxu0 0.0
          %2485 = vmatpush.msra.mxu0 0.0
          %2486 = vmatpush.msra.mxu0 0.0
          %2487 = vmatpush.msra.mxu0 0.0
          %2488 = vmatpush.msra.mxu0 0.0
          %2489 = vmatpush.msra.mxu0 0.0
          %2490 = vmatpush.msra.mxu0 %v2470
          %2491 = vmatpush.msra.mxu0 %v2469
          %2492 = vmatmul.f32.gmra.mxu0 %v2474
          %v2493 = vpop.f32.mrf.mxu0
          %v2494 = vadd.f32 0.0, %v2493
          %2495 = vdwg.mxu0
          %v2496 = vadd.f32 %v2467, %v2494
          %s2497 = scalar_lea.vmem %s7, 208
          %v2498 = vld [vmem:[%s2497] sm:$0xff]
          %v2499 = vld [vmem:[%s2497 + $0x8] sm:$0xff]
          %v2500 = vrot.slane %v2409, 3
          %v2501 = vrot.slane %v2410, 3
          %v2502 = vsel %vm2200, %v2500, %v2501
          %v2503 = vsel %vm492, %v2502, 0
          %2505 = vmatpush.msra.mxu0 0.0
          %2506 = vmatpush.msra.mxu0 0.0
          %2507 = vmatpush.msra.mxu0 0.0
          %2508 = vmatpush.msra.mxu0 0.0
          %2509 = vmatpush.msra.mxu0 0.0
          %2510 = vmatpush.msra.mxu0 0.0
          %2511 = vmatpush.msra.mxu0 0.0
          %2512 = vmatpush.msra.mxu0 0.0
          %2513 = vmatpush.msra.mxu0 0.0
          %2514 = vmatpush.msra.mxu0 0.0
          %2515 = vmatpush.msra.mxu0 0.0
          %2516 = vmatpush.msra.mxu0 0.0
          %2517 = vmatpush.msra.mxu0 0.0
          %2518 = vmatpush.msra.mxu0 0.0
          %2519 = vmatpush.msra.mxu0 %v2499
          %2520 = vmatpush.msra.mxu0 %v2498
          %2521 = vmatmul.f32.gmra.mxu0 %v2503
          %v2522 = vpop.f32.mrf.mxu0
          %v2523 = vadd.f32 0.0, %v2522
          %2524 = vdwg.mxu0
          %v2525 = vadd.f32 %v2496, %v2523
          %s2526 = scalar_lea.vmem %s7, 224
          %v2527 = vld [vmem:[%s2526] sm:$0xff]
          %v2528 = vld [vmem:[%s2526 + $0x8] sm:$0xff]
          %v2529 = vrot.slane %v2409, 4
          %v2530 = vrot.slane %v2410, 4
          %v2531 = vsel %vm2230, %v2529, %v2530
          %v2532 = vsel %vm492, %v2531, 0
          %2534 = vmatpush.msra.mxu0 0.0
          %2535 = vmatpush.msra.mxu0 0.0
          %2536 = vmatpush.msra.mxu0 0.0
          %2537 = vmatpush.msra.mxu0 0.0
          %2538 = vmatpush.msra.mxu0 0.0
          %2539 = vmatpush.msra.mxu0 0.0
          %2540 = vmatpush.msra.mxu0 0.0
          %2541 = vmatpush.msra.mxu0 0.0
          %2542 = vmatpush.msra.mxu0 0.0
          %2543 = vmatpush.msra.mxu0 0.0
          %2544 = vmatpush.msra.mxu0 0.0
          %2545 = vmatpush.msra.mxu0 0.0
          %2546 = vmatpush.msra.mxu0 0.0
          %2547 = vmatpush.msra.mxu0 0.0
          %2548 = vmatpush.msra.mxu0 %v2528
          %2549 = vmatpush.msra.mxu0 %v2527
          %2550 = vmatmul.f32.gmra.mxu0 %v2532
          %v2551 = vpop.f32.mrf.mxu0
          %v2552 = vadd.f32 0.0, %v2551
          %2553 = vdwg.mxu0
          %v2554 = vadd.f32 %v2525, %v2552
          %s2555 = sadd.s32 %s2097, 3
          %s2556 = smul.u32 %s2555, 16
          %s2557 = scalar_lea.vmem [#allocation5], %s2556
          %v2558 = vld [vmem:[%s2557] sm:$0xff]
          %v2559 = vld [vmem:[%s2557 + $0x8] sm:$0xf]
          %s2560 = scalar_lea.vmem %s7, 240
          %v2561 = vld [vmem:[%s2560] sm:$0xff]
          %v2562 = vld [vmem:[%s2560 + $0x8] sm:$0xff]
          %v2564 = vsel %vm492, %v2558, 0
          %2566 = vmatpush.msra.mxu0 0.0
          %2567 = vmatpush.msra.mxu0 0.0
          %2568 = vmatpush.msra.mxu0 0.0
          %2569 = vmatpush.msra.mxu0 0.0
          %2570 = vmatpush.msra.mxu0 0.0
          %2571 = vmatpush.msra.mxu0 0.0
          %2572 = vmatpush.msra.mxu0 0.0
          %2573 = vmatpush.msra.mxu0 0.0
          %2574 = vmatpush.msra.mxu0 0.0
          %2575 = vmatpush.msra.mxu0 0.0
          %2576 = vmatpush.msra.mxu0 0.0
          %2577 = vmatpush.msra.mxu0 0.0
          %2578 = vmatpush.msra.mxu0 0.0
          %2579 = vmatpush.msra.mxu0 0.0
          %2580 = vmatpush.msra.mxu0 %v2562
          %2581 = vmatpush.msra.mxu0 %v2561
          %2582 = vmatmul.f32.gmra.mxu0 %v2564
          %v2583 = vpop.f32.mrf.mxu0
          %v2584 = vadd.f32 0.0, %v2583
          %2585 = vdwg.mxu0
          %v2586 = vadd.f32 %v2554, %v2584
          %s2587 = scalar_lea.vmem %s7, 256
          %v2588 = vld [vmem:[%s2587] sm:$0xff]
          %v2589 = vld [vmem:[%s2587 + $0x8] sm:$0xff]
          %v2591 = vrot.slane %v2558, 1
          %v2592 = vrot.slane %v2559, 1
          %v2593 = vsel %vm2140, %v2591, %v2592
          %v2594 = vsel %vm492, %v2593, 0
          %2596 = vmatpush.msra.mxu0 0.0
          %2597 = vmatpush.msra.mxu0 0.0
          %2598 = vmatpush.msra.mxu0 0.0
          %2599 = vmatpush.msra.mxu0 0.0
          %2600 = vmatpush.msra.mxu0 0.0
          %2601 = vmatpush.msra.mxu0 0.0
          %2602 = vmatpush.msra.mxu0 0.0
          %2603 = vmatpush.msra.mxu0 0.0
          %2604 = vmatpush.msra.mxu0 0.0
          %2605 = vmatpush.msra.mxu0 0.0
          %2606 = vmatpush.msra.mxu0 0.0
          %2607 = vmatpush.msra.mxu0 0.0
          %2608 = vmatpush.msra.mxu0 0.0
          %2609 = vmatpush.msra.mxu0 0.0
          %2610 = vmatpush.msra.mxu0 %v2589
          %2611 = vmatpush.msra.mxu0 %v2588
          %2612 = vmatmul.f32.gmra.mxu0 %v2594
          %v2613 = vpop.f32.mrf.mxu0
          %v2614 = vadd.f32 0.0, %v2613
          %2615 = vdwg.mxu0
          %v2616 = vadd.f32 %v2586, %v2614
          %s2617 = scalar_lea.vmem %s7, 272
          %v2618 = vld [vmem:[%s2617] sm:$0xff]
          %v2619 = vld [vmem:[%s2617 + $0x8] sm:$0xff]
          %v2620 = vrot.slane %v2558, 2
          %v2621 = vrot.slane %v2559, 2
          %v2622 = vsel %vm2170, %v2620, %v2621
          %v2623 = vsel %vm492, %v2622, 0
          %2625 = vmatpush.msra.mxu0 0.0
          %2626 = vmatpush.msra.mxu0 0.0
          %2627 = vmatpush.msra.mxu0 0.0
          %2628 = vmatpush.msra.mxu0 0.0
          %2629 = vmatpush.msra.mxu0 0.0
          %2630 = vmatpush.msra.mxu0 0.0
          %2631 = vmatpush.msra.mxu0 0.0
          %2632 = vmatpush.msra.mxu0 0.0
          %2633 = vmatpush.msra.mxu0 0.0
          %2634 = vmatpush.msra.mxu0 0.0
          %2635 = vmatpush.msra.mxu0 0.0
          %2636 = vmatpush.msra.mxu0 0.0
          %2637 = vmatpush.msra.mxu0 0.0
          %2638 = vmatpush.msra.mxu0 0.0
          %2639 = vmatpush.msra.mxu0 %v2619
          %2640 = vmatpush.msra.mxu0 %v2618
          %2641 = vmatmul.f32.gmra.mxu0 %v2623
          %v2642 = vpop.f32.mrf.mxu0
          %v2643 = vadd.f32 0.0, %v2642
          %2644 = vdwg.mxu0
          %v2645 = vadd.f32 %v2616, %v2643
          %s2646 = scalar_lea.vmem %s7, 288
          %v2647 = vld [vmem:[%s2646] sm:$0xff]
          %v2648 = vld [vmem:[%s2646 + $0x8] sm:$0xff]
          %v2649 = vrot.slane %v2558, 3
          %v2650 = vrot.slane %v2559, 3
          %v2651 = vsel %vm2200, %v2649, %v2650
          %v2652 = vsel %vm492, %v2651, 0
          %2654 = vmatpush.msra.mxu0 0.0
          %2655 = vmatpush.msra.mxu0 0.0
          %2656 = vmatpush.msra.mxu0 0.0
          %2657 = vmatpush.msra.mxu0 0.0
          %2658 = vmatpush.msra.mxu0 0.0
          %2659 = vmatpush.msra.mxu0 0.0
          %2660 = vmatpush.msra.mxu0 0.0
          %2661 = vmatpush.msra.mxu0 0.0
          %2662 = vmatpush.msra.mxu0 0.0
          %2663 = vmatpush.msra.mxu0 0.0
          %2664 = vmatpush.msra.mxu0 0.0
          %2665 = vmatpush.msra.mxu0 0.0
          %2666 = vmatpush.msra.mxu0 0.0
          %2667 = vmatpush.msra.mxu0 0.0
          %2668 = vmatpush.msra.mxu0 %v2648
          %2669 = vmatpush.msra.mxu0 %v2647
          %2670 = vmatmul.f32.gmra.mxu0 %v2652
          %v2671 = vpop.f32.mrf.mxu0
          %v2672 = vadd.f32 0.0, %v2671
          %2673 = vdwg.mxu0
          %v2674 = vadd.f32 %v2645, %v2672
          %s2675 = scalar_lea.vmem %s7, 304
          %v2676 = vld [vmem:[%s2675] sm:$0xff]
          %v2677 = vld [vmem:[%s2675 + $0x8] sm:$0xff]
          %v2678 = vrot.slane %v2558, 4
          %v2679 = vrot.slane %v2559, 4
          %v2680 = vsel %vm2230, %v2678, %v2679
          %v2681 = vsel %vm492, %v2680, 0
          %2683 = vmatpush.msra.mxu0 0.0
          %2684 = vmatpush.msra.mxu0 0.0
          %2685 = vmatpush.msra.mxu0 0.0
          %2686 = vmatpush.msra.mxu0 0.0
          %2687 = vmatpush.msra.mxu0 0.0
          %2688 = vmatpush.msra.mxu0 0.0
          %2689 = vmatpush.msra.mxu0 0.0
          %2690 = vmatpush.msra.mxu0 0.0
          %2691 = vmatpush.msra.mxu0 0.0
          %2692 = vmatpush.msra.mxu0 0.0
          %2693 = vmatpush.msra.mxu0 0.0
          %2694 = vmatpush.msra.mxu0 0.0
          %2695 = vmatpush.msra.mxu0 0.0
          %2696 = vmatpush.msra.mxu0 0.0
          %2697 = vmatpush.msra.mxu0 %v2677
          %2698 = vmatpush.msra.mxu0 %v2676
          %2699 = vmatmul.f32.gmra.mxu0 %v2681
          %v2700 = vpop.f32.mrf.mxu0
          %v2701 = vadd.f32 0.0, %v2700
          %2702 = vdwg.mxu0
          %v2703 = vadd.f32 %v2674, %v2701
          %s2704 = sadd.s32 %s2097, 4
          %s2705 = smul.u32 %s2704, 16
          %s2706 = scalar_lea.vmem [#allocation5], %s2705
          %v2707 = vld [vmem:[%s2706] sm:$0xff]
          %v2708 = vld [vmem:[%s2706 + $0x8] sm:$0xf]
          %s2709 = scalar_lea.vmem %s7, 320
          %v2710 = vld [vmem:[%s2709] sm:$0xff]
          %v2711 = vld [vmem:[%s2709 + $0x8] sm:$0xff]
          %v2713 = vsel %vm492, %v2707, 0
          %2715 = vmatpush.msra.mxu0 0.0
          %2716 = vmatpush.msra.mxu0 0.0
          %2717 = vmatpush.msra.mxu0 0.0
          %2718 = vmatpush.msra.mxu0 0.0
          %2719 = vmatpush.msra.mxu0 0.0
          %2720 = vmatpush.msra.mxu0 0.0
          %2721 = vmatpush.msra.mxu0 0.0
          %2722 = vmatpush.msra.mxu0 0.0
          %2723 = vmatpush.msra.mxu0 0.0
          %2724 = vmatpush.msra.mxu0 0.0
          %2725 = vmatpush.msra.mxu0 0.0
          %2726 = vmatpush.msra.mxu0 0.0
          %2727 = vmatpush.msra.mxu0 0.0
          %2728 = vmatpush.msra.mxu0 0.0
          %2729 = vmatpush.msra.mxu0 %v2711
          %2730 = vmatpush.msra.mxu0 %v2710
          %2731 = vmatmul.f32.gmra.mxu0 %v2713
          %v2732 = vpop.f32.mrf.mxu0
          %v2733 = vadd.f32 0.0, %v2732
          %2734 = vdwg.mxu0
          %v2735 = vadd.f32 %v2703, %v2733
          %s2736 = scalar_lea.vmem %s7, 336
          %v2737 = vld [vmem:[%s2736] sm:$0xff]
          %v2738 = vld [vmem:[%s2736 + $0x8] sm:$0xff]
          %v2740 = vrot.slane %v2707, 1
          %v2741 = vrot.slane %v2708, 1
          %v2742 = vsel %vm2140, %v2740, %v2741
          %v2743 = vsel %vm492, %v2742, 0
          %2745 = vmatpush.msra.mxu0 0.0
          %2746 = vmatpush.msra.mxu0 0.0
          %2747 = vmatpush.msra.mxu0 0.0
          %2748 = vmatpush.msra.mxu0 0.0
          %2749 = vmatpush.msra.mxu0 0.0
          %2750 = vmatpush.msra.mxu0 0.0
          %2751 = vmatpush.msra.mxu0 0.0
          %2752 = vmatpush.msra.mxu0 0.0
          %2753 = vmatpush.msra.mxu0 0.0
          %2754 = vmatpush.msra.mxu0 0.0
          %2755 = vmatpush.msra.mxu0 0.0
          %2756 = vmatpush.msra.mxu0 0.0
          %2757 = vmatpush.msra.mxu0 0.0
          %2758 = vmatpush.msra.mxu0 0.0
          %2759 = vmatpush.msra.mxu0 %v2738
          %2760 = vmatpush.msra.mxu0 %v2737
          %2761 = vmatmul.f32.gmra.mxu0 %v2743
          %v2762 = vpop.f32.mrf.mxu0
          %v2763 = vadd.f32 0.0, %v2762
          %2764 = vdwg.mxu0
          %v2765 = vadd.f32 %v2735, %v2763
          %s2766 = scalar_lea.vmem %s7, 352
          %v2767 = vld [vmem:[%s2766] sm:$0xff]
          %v2768 = vld [vmem:[%s2766 + $0x8] sm:$0xff]
          %v2769 = vrot.slane %v2707, 2
          %v2770 = vrot.slane %v2708, 2
          %v2771 = vsel %vm2170, %v2769, %v2770
          %v2772 = vsel %vm492, %v2771, 0
          %2774 = vmatpush.msra.mxu0 0.0
          %2775 = vmatpush.msra.mxu0 0.0
          %2776 = vmatpush.msra.mxu0 0.0
          %2777 = vmatpush.msra.mxu0 0.0
          %2778 = vmatpush.msra.mxu0 0.0
          %2779 = vmatpush.msra.mxu0 0.0
          %2780 = vmatpush.msra.mxu0 0.0
          %2781 = vmatpush.msra.mxu0 0.0
          %2782 = vmatpush.msra.mxu0 0.0
          %2783 = vmatpush.msra.mxu0 0.0
          %2784 = vmatpush.msra.mxu0 0.0
          %2785 = vmatpush.msra.mxu0 0.0
          %2786 = vmatpush.msra.mxu0 0.0
          %2787 = vmatpush.msra.mxu0 0.0
          %2788 = vmatpush.msra.mxu0 %v2768
          %2789 = vmatpush.msra.mxu0 %v2767
          %2790 = vmatmul.f32.gmra.mxu0 %v2772
          %v2791 = vpop.f32.mrf.mxu0
          %v2792 = vadd.f32 0.0, %v2791
          %2793 = vdwg.mxu0
          %v2794 = vadd.f32 %v2765, %v2792
          %s2795 = scalar_lea.vmem %s7, 368
          %v2796 = vld [vmem:[%s2795] sm:$0xff]
          %v2797 = vld [vmem:[%s2795 + $0x8] sm:$0xff]
          %v2798 = vrot.slane %v2707, 3
          %v2799 = vrot.slane %v2708, 3
          %v2800 = vsel %vm2200, %v2798, %v2799
          %v2801 = vsel %vm492, %v2800, 0
          %2803 = vmatpush.msra.mxu0 0.0
          %2804 = vmatpush.msra.mxu0 0.0
          %2805 = vmatpush.msra.mxu0 0.0
          %2806 = vmatpush.msra.mxu0 0.0
          %2807 = vmatpush.msra.mxu0 0.0
          %2808 = vmatpush.msra.mxu0 0.0
          %2809 = vmatpush.msra.mxu0 0.0
          %2810 = vmatpush.msra.mxu0 0.0
          %2811 = vmatpush.msra.mxu0 0.0
          %2812 = vmatpush.msra.mxu0 0.0
          %2813 = vmatpush.msra.mxu0 0.0
          %2814 = vmatpush.msra.mxu0 0.0
          %2815 = vmatpush.msra.mxu0 0.0
          %2816 = vmatpush.msra.mxu0 0.0
          %2817 = vmatpush.msra.mxu0 %v2797
          %2818 = vmatpush.msra.mxu0 %v2796
          %2819 = vmatmul.f32.gmra.mxu0 %v2801
          %v2820 = vpop.f32.mrf.mxu0
          %v2821 = vadd.f32 0.0, %v2820
          %2822 = vdwg.mxu0
          %v2823 = vadd.f32 %v2794, %v2821
          %s2824 = scalar_lea.vmem %s7, 384
          %v2825 = vld [vmem:[%s2824] sm:$0xff]
          %v2826 = vld [vmem:[%s2824 + $0x8] sm:$0xff]
          %v2827 = vrot.slane %v2707, 4
          %v2828 = vrot.slane %v2708, 4
          %v2829 = vsel %vm2230, %v2827, %v2828
          %v2830 = vsel %vm492, %v2829, 0
          %2832 = vmatpush.msra.mxu0 0.0
          %2833 = vmatpush.msra.mxu0 0.0
          %2834 = vmatpush.msra.mxu0 0.0
          %2835 = vmatpush.msra.mxu0 0.0
          %2836 = vmatpush.msra.mxu0 0.0
          %2837 = vmatpush.msra.mxu0 0.0
          %2838 = vmatpush.msra.mxu0 0.0
          %2839 = vmatpush.msra.mxu0 0.0
          %2840 = vmatpush.msra.mxu0 0.0
          %2841 = vmatpush.msra.mxu0 0.0
          %2842 = vmatpush.msra.mxu0 0.0
          %2843 = vmatpush.msra.mxu0 0.0
          %2844 = vmatpush.msra.mxu0 0.0
          %2845 = vmatpush.msra.mxu0 0.0
          %2846 = vmatpush.msra.mxu0 %v2826
          %2847 = vmatpush.msra.mxu0 %v2825
          %2848 = vmatmul.f32.gmra.mxu0 %v2830
          %v2849 = vpop.f32.mrf.mxu0
          %v2850 = vadd.f32 0.0, %v2849
          %2851 = vdwg.mxu0
          %v2852 = vadd.f32 %v2823, %v2850
          %s2853 = smul.u32 %s2097, 8
          %s2854 = scalar_lea.vmem [#allocation6], %s2853
          %vm2855 = vcmask 261120
          %2856 = vst.msk [vmem:[%s2854] sm:$0xff] %vm2855, %v2852
        $region113: #{net_forward.1} parent=79 // loop_footer
          %s2101 = sadd.s32 1, %s2097
        $region114: #{net_forward.1} parent=79 // loop_footer_branch
          %2096 = sbr.rel target = $region110
        $region115: #{net_forward.1} parent=79 // loop_exit
          _
        loop: start=0, step=1, limit=4
        $region116: #{net_forward.1} parent=79 // loop_pre_header
          _
        $region117: #{net_forward.1} parent=79 // loop_header
          %s2858 = sphi 0, %s2862
          %p2859 = scmp.ge.s32.totalorder %s2858, 4
        $region118: #{net_forward.1} parent=79 // loop_header_branch
          %2861 = sbr.rel (%p2859) target = $region122
        $region119: #{net_forward.1} parent=79 // loop_body
          %s2863 = smul.u32 %s2858, 2
          %s2864 = smul.u32 %s2863, 8
          %s2865 = scalar_lea.vmem [#allocation6], %s2864
          %v2866 = vld [vmem:[%s2865] sm:$0xff]
          %s2867 = sadd.s32 %s2863, 1
          %s2868 = smul.u32 %s2867, 8
          %s2869 = scalar_lea.vmem [#allocation6], %s2868
          %v2870 = vld [vmem:[%s2869] sm:$0xff]
          %v2871 = vmax.f32 %v2866, %v2870
          %vm2872 = vcmask 64512
          %v2874 = vsel %vm2872, %v1302, 0
          %2876 = vmatpush.msra.mxu0 0.0
          %2877 = vmatpush.msra.mxu0 0.0
          %2878 = vmatpush.msra.mxu0 0.0
          %2879 = vmatpush.msra.mxu0 0.0
          %2880 = vmatpush.msra.mxu0 0.0
          %2881 = vmatpush.msra.mxu0 0.0
          %2882 = vmatpush.msra.mxu0 0.0
          %2883 = vmatpush.msra.mxu0 0.0
          %2884 = vmatpush.msra.mxu0 0.0
          %2885 = vmatpush.msra.mxu0 0.0
          %2886 = vmatpush.msra.mxu0 0.0
          %2887 = vmatpush.msra.mxu0 0.0
          %2888 = vmatpush.msra.mxu0 0.0
          %2889 = vmatpush.msra.mxu0 0.0
          %2890 = vmatpush.msra.mxu0 0.0
          %2891 = vmatpush.msra.mxu0 %v2871
          %2892 = vmatmul.f32.gmra.mxu0 %v2874
          %v2893 = vpop.f32.mrf.mxu0
          %v2894 = vadd.f32 0.0, %v2893
          %2895 = vdwg.mxu0
          %v2897 = vsel %vm2872, %v1310, 0
          %2899 = vmatpush.msra.mxu0 0.0
          %2900 = vmatpush.msra.mxu0 0.0
          %2901 = vmatpush.msra.mxu0 0.0
          %2902 = vmatpush.msra.mxu0 0.0
          %2903 = vmatpush.msra.mxu0 0.0
          %2904 = vmatpush.msra.mxu0 0.0
          %2905 = vmatpush.msra.mxu0 0.0
          %2906 = vmatpush.msra.mxu0 0.0
          %2907 = vmatpush.msra.mxu0 0.0
          %2908 = vmatpush.msra.mxu0 0.0
          %2909 = vmatpush.msra.mxu0 0.0
          %2910 = vmatpush.msra.mxu0 0.0
          %2911 = vmatpush.msra.mxu0 0.0
          %2912 = vmatpush.msra.mxu0 0.0
          %2913 = vmatpush.msra.mxu0 0.0
          %2914 = vmatpush.msra.mxu0 %v2871
          %2915 = vmatmul.f32.gmra.mxu0 %v2897
          %v2916 = vpop.f32.mrf.mxu0
          %v2917 = vadd.f32 0.0, %v2916
          %2918 = vdwg.mxu0
          %v2919 = vmax.f32 %v2894, %v2917
          %v2920 = vmax.f32 %v2919, 0.0
          %s2921 = sadd.s32 %s2858, 1
          %s2922 = smul.u32 %s2921, 8
          %s2923 = scalar_lea.vmem [#allocation7], %s2922
          %vm2924 = vcmask 257024
          %2925 = vst.msk [vmem:[%s2923 + $0x1] sm:$0xf] %vm2924, %v2920
        $region120: #{net_forward.1} parent=79 // loop_footer
          %s2862 = sadd.s32 1, %s2858
        $region121: #{net_forward.1} parent=79 // loop_footer_branch
          %2857 = sbr.rel target = $region117
        $region122: #{net_forward.1} parent=79 // loop_exit
          _
        %v2926 = vld [vmem:[%s10] sm:$0x1]
        loop: start=0, step=1, limit=4
        $region123: #{net_forward.1} parent=79 // loop_pre_header
          _
        $region124: #{net_forward.1} parent=79 // loop_header
          %s2928 = sphi 0, %s2932
          %p2929 = scmp.ge.s32.totalorder %s2928, 4
        $region125: #{net_forward.1} parent=79 // loop_header_branch
          %2931 = sbr.rel (%p2929) target = $region129
        $region126: #{net_forward.1} parent=79 // loop_body
          %v2934 = vperm.slane %v2926, 0
          %v2936 = vadd.f32 %v2934, 0.0
          %s2937 = smul.u32 %s2928, 8
          %s2938 = scalar_lea.vmem [#allocation7], %s2937
          %v2939 = vld [vmem:[%s2938] sm:$0x3f]
          %v2940 = vld [vmem:[%s9] sm:$0xff]
          %v2941 = vld [vmem:[%s9 + $0x8] sm:$0xff]
          %v2942 = vld [vmem:[%s9 + $0x10] sm:$0xff]
          %v2943 = vld [vmem:[%s9 + $0x18] sm:$0xff]
          %vm2944 = vcmask 261120
          %v2946 = vsel %vm2944, %v2939, 0
          %2948 = vmatpush.msra.mxu0 0.0
          %2949 = vmatpush.msra.mxu0 0.0
          %2950 = vmatpush.msra.mxu0 0.0
          %2951 = vmatpush.msra.mxu0 0.0
          %2952 = vmatpush.msra.mxu0 0.0
          %2953 = vmatpush.msra.mxu0 0.0
          %2954 = vmatpush.msra.mxu0 0.0
          %2955 = vmatpush.msra.mxu0 0.0
          %2956 = vmatpush.msra.mxu0 0.0
          %2957 = vmatpush.msra.mxu0 0.0
          %2958 = vmatpush.msra.mxu0 0.0
          %2959 = vmatpush.msra.mxu0 0.0
          %2960 = vmatpush.msra.mxu0 %v2943
          %2961 = vmatpush.msra.mxu0 %v2942
          %2962 = vmatpush.msra.mxu0 %v2941
          %2963 = vmatpush.msra.mxu0 %v2940
          %2964 = vmatmul.f32.gmra.mxu0 %v2946
          %v2965 = vpop.f32.mrf.mxu0
          %v2966 = vadd.f32 0.0, %v2965
          %2967 = vdwg.mxu0
          %v2968 = vadd.f32 %v2936, %v2966
          %s2969 = scalar_lea.vmem %s9, 32
          %v2970 = vld [vmem:[%s2969] sm:$0xff]
          %v2971 = vld [vmem:[%s2969 + $0x8] sm:$0xff]
          %v2972 = vld [vmem:[%s2969 + $0x10] sm:$0xff]
          %v2973 = vld [vmem:[%s2969 + $0x18] sm:$0xff]
          %v2974 = vrot.slane %v2939, 1
          %v2975 = vsel %vm2944, %v2974, 0
          %2977 = vmatpush.msra.mxu0 0.0
          %2978 = vmatpush.msra.mxu0 0.0
          %2979 = vmatpush.msra.mxu0 0.0
          %2980 = vmatpush.msra.mxu0 0.0
          %2981 = vmatpush.msra.mxu0 0.0
          %2982 = vmatpush.msra.mxu0 0.0
          %2983 = vmatpush.msra.mxu0 0.0
          %2984 = vmatpush.msra.mxu0 0.0
          %2985 = vmatpush.msra.mxu0 0.0
          %2986 = vmatpush.msra.mxu0 0.0
          %2987 = vmatpush.msra.mxu0 0.0
          %2988 = vmatpush.msra.mxu0 0.0
          %2989 = vmatpush.msra.mxu0 %v2973
          %2990 = vmatpush.msra.mxu0 %v2972
          %2991 = vmatpush.msra.mxu0 %v2971
          %2992 = vmatpush.msra.mxu0 %v2970
          %2993 = vmatmul.f32.gmra.mxu0 %v2975
          %v2994 = vpop.f32.mrf.mxu0
          %v2995 = vadd.f32 0.0, %v2994
          %2996 = vdwg.mxu0
          %v2997 = vadd.f32 %v2968, %v2995
          %s2998 = scalar_lea.vmem %s9, 64
          %v2999 = vld [vmem:[%s2998] sm:$0xff]
          %v3000 = vld [vmem:[%s2998 + $0x8] sm:$0xff]
          %v3001 = vld [vmem:[%s2998 + $0x10] sm:$0xff]
          %v3002 = vld [vmem:[%s2998 + $0x18] sm:$0xff]
          %v3003 = vrot.slane %v2939, 2
          %v3004 = vsel %vm2944, %v3003, 0
          %3006 = vmatpush.msra.mxu0 0.0
          %3007 = vmatpush.msra.mxu0 0.0
          %3008 = vmatpush.msra.mxu0 0.0
          %3009 = vmatpush.msra.mxu0 0.0
          %3010 = vmatpush.msra.mxu0 0.0
          %3011 = vmatpush.msra.mxu0 0.0
          %3012 = vmatpush.msra.mxu0 0.0
          %3013 = vmatpush.msra.mxu0 0.0
          %3014 = vmatpush.msra.mxu0 0.0
          %3015 = vmatpush.msra.mxu0 0.0
          %3016 = vmatpush.msra.mxu0 0.0
          %3017 = vmatpush.msra.mxu0 0.0
          %3018 = vmatpush.msra.mxu0 %v3002
          %3019 = vmatpush.msra.mxu0 %v3001
          %3020 = vmatpush.msra.mxu0 %v3000
          %3021 = vmatpush.msra.mxu0 %v2999
          %3022 = vmatmul.f32.gmra.mxu0 %v3004
          %v3023 = vpop.f32.mrf.mxu0
          %v3024 = vadd.f32 0.0, %v3023
          %3025 = vdwg.mxu0
          %v3026 = vadd.f32 %v2997, %v3024
          %s3027 = sadd.s32 %s2928, 1
          %s3028 = smul.u32 %s3027, 8
          %s3029 = scalar_lea.vmem [#allocation7], %s3028
          %v3030 = vld [vmem:[%s3029] sm:$0x3f]
          %s3031 = scalar_lea.vmem %s9, 96
          %v3032 = vld [vmem:[%s3031] sm:$0xff]
          %v3033 = vld [vmem:[%s3031 + $0x8] sm:$0xff]
          %v3034 = vld [vmem:[%s3031 + $0x10] sm:$0xff]
          %v3035 = vld [vmem:[%s3031 + $0x18] sm:$0xff]
          %v3037 = vsel %vm2944, %v3030, 0
          %3039 = vmatpush.msra.mxu0 0.0
          %3040 = vmatpush.msra.mxu0 0.0
          %3041 = vmatpush.msra.mxu0 0.0
          %3042 = vmatpush.msra.mxu0 0.0
          %3043 = vmatpush.msra.mxu0 0.0
          %3044 = vmatpush.msra.mxu0 0.0
          %3045 = vmatpush.msra.mxu0 0.0
          %3046 = vmatpush.msra.mxu0 0.0
          %3047 = vmatpush.msra.mxu0 0.0
          %3048 = vmatpush.msra.mxu0 0.0
          %3049 = vmatpush.msra.mxu0 0.0
          %3050 = vmatpush.msra.mxu0 0.0
          %3051 = vmatpush.msra.mxu0 %v3035
          %3052 = vmatpush.msra.mxu0 %v3034
          %3053 = vmatpush.msra.mxu0 %v3033
          %3054 = vmatpush.msra.mxu0 %v3032
          %3055 = vmatmul.f32.gmra.mxu0 %v3037
          %v3056 = vpop.f32.mrf.mxu0
          %v3057 = vadd.f32 0.0, %v3056
          %3058 = vdwg.mxu0
          %v3059 = vadd.f32 %v3026, %v3057
          %s3060 = scalar_lea.vmem %s9, 128
          %v3061 = vld [vmem:[%s3060] sm:$0xff]
          %v3062 = vld [vmem:[%s3060 + $0x8] sm:$0xff]
          %v3063 = vld [vmem:[%s3060 + $0x10] sm:$0xff]
          %v3064 = vld [vmem:[%s3060 + $0x18] sm:$0xff]
          %v3065 = vrot.slane %v3030, 1
          %v3066 = vsel %vm2944, %v3065, 0
          %3068 = vmatpush.msra.mxu0 0.0
          %3069 = vmatpush.msra.mxu0 0.0
          %3070 = vmatpush.msra.mxu0 0.0
          %3071 = vmatpush.msra.mxu0 0.0
          %3072 = vmatpush.msra.mxu0 0.0
          %3073 = vmatpush.msra.mxu0 0.0
          %3074 = vmatpush.msra.mxu0 0.0
          %3075 = vmatpush.msra.mxu0 0.0
          %3076 = vmatpush.msra.mxu0 0.0
          %3077 = vmatpush.msra.mxu0 0.0
          %3078 = vmatpush.msra.mxu0 0.0
          %3079 = vmatpush.msra.mxu0 0.0
          %3080 = vmatpush.msra.mxu0 %v3064
          %3081 = vmatpush.msra.mxu0 %v3063
          %3082 = vmatpush.msra.mxu0 %v3062
          %3083 = vmatpush.msra.mxu0 %v3061
          %3084 = vmatmul.f32.gmra.mxu0 %v3066
          %v3085 = vpop.f32.mrf.mxu0
          %v3086 = vadd.f32 0.0, %v3085
          %3087 = vdwg.mxu0
          %v3088 = vadd.f32 %v3059, %v3086
          %s3089 = scalar_lea.vmem %s9, 160
          %v3090 = vld [vmem:[%s3089] sm:$0xff]
          %v3091 = vld [vmem:[%s3089 + $0x8] sm:$0xff]
          %v3092 = vld [vmem:[%s3089 + $0x10] sm:$0xff]
          %v3093 = vld [vmem:[%s3089 + $0x18] sm:$0xff]
          %v3094 = vrot.slane %v3030, 2
          %v3095 = vsel %vm2944, %v3094, 0
          %3097 = vmatpush.msra.mxu0 0.0
          %3098 = vmatpush.msra.mxu0 0.0
          %3099 = vmatpush.msra.mxu0 0.0
          %3100 = vmatpush.msra.mxu0 0.0
          %3101 = vmatpush.msra.mxu0 0.0
          %3102 = vmatpush.msra.mxu0 0.0
          %3103 = vmatpush.msra.mxu0 0.0
          %3104 = vmatpush.msra.mxu0 0.0
          %3105 = vmatpush.msra.mxu0 0.0
          %3106 = vmatpush.msra.mxu0 0.0
          %3107 = vmatpush.msra.mxu0 0.0
          %3108 = vmatpush.msra.mxu0 0.0
          %3109 = vmatpush.msra.mxu0 %v3093
          %3110 = vmatpush.msra.mxu0 %v3092
          %3111 = vmatpush.msra.mxu0 %v3091
          %3112 = vmatpush.msra.mxu0 %v3090
          %3113 = vmatmul.f32.gmra.mxu0 %v3095
          %v3114 = vpop.f32.mrf.mxu0
          %v3115 = vadd.f32 0.0, %v3114
          %3116 = vdwg.mxu0
          %v3117 = vadd.f32 %v3088, %v3115
          %s3118 = sadd.s32 %s2928, 2
          %s3119 = smul.u32 %s3118, 8
          %s3120 = scalar_lea.vmem [#allocation7], %s3119
          %v3121 = vld [vmem:[%s3120] sm:$0x3f]
          %s3122 = scalar_lea.vmem %s9, 192
          %v3123 = vld [vmem:[%s3122] sm:$0xff]
          %v3124 = vld [vmem:[%s3122 + $0x8] sm:$0xff]
          %v3125 = vld [vmem:[%s3122 + $0x10] sm:$0xff]
          %v3126 = vld [vmem:[%s3122 + $0x18] sm:$0xff]
          %v3128 = vsel %vm2944, %v3121, 0
          %3130 = vmatpush.msra.mxu0 0.0
          %3131 = vmatpush.msra.mxu0 0.0
          %3132 = vmatpush.msra.mxu0 0.0
          %3133 = vmatpush.msra.mxu0 0.0
          %3134 = vmatpush.msra.mxu0 0.0
          %3135 = vmatpush.msra.mxu0 0.0
          %3136 = vmatpush.msra.mxu0 0.0
          %3137 = vmatpush.msra.mxu0 0.0
          %3138 = vmatpush.msra.mxu0 0.0
          %3139 = vmatpush.msra.mxu0 0.0
          %3140 = vmatpush.msra.mxu0 0.0
          %3141 = vmatpush.msra.mxu0 0.0
          %3142 = vmatpush.msra.mxu0 %v3126
          %3143 = vmatpush.msra.mxu0 %v3125
          %3144 = vmatpush.msra.mxu0 %v3124
          %3145 = vmatpush.msra.mxu0 %v3123
          %3146 = vmatmul.f32.gmra.mxu0 %v3128
          %v3147 = vpop.f32.mrf.mxu0
          %v3148 = vadd.f32 0.0, %v3147
          %3149 = vdwg.mxu0
          %v3150 = vadd.f32 %v3117, %v3148
          %s3151 = scalar_lea.vmem %s9, 224
          %v3152 = vld [vmem:[%s3151] sm:$0xff]
          %v3153 = vld [vmem:[%s3151 + $0x8] sm:$0xff]
          %v3154 = vld [vmem:[%s3151 + $0x10] sm:$0xff]
          %v3155 = vld [vmem:[%s3151 + $0x18] sm:$0xff]
          %v3156 = vrot.slane %v3121, 1
          %v3157 = vsel %vm2944, %v3156, 0
          %3159 = vmatpush.msra.mxu0 0.0
          %3160 = vmatpush.msra.mxu0 0.0
          %3161 = vmatpush.msra.mxu0 0.0
          %3162 = vmatpush.msra.mxu0 0.0
          %3163 = vmatpush.msra.mxu0 0.0
          %3164 = vmatpush.msra.mxu0 0.0
          %3165 = vmatpush.msra.mxu0 0.0
          %3166 = vmatpush.msra.mxu0 0.0
          %3167 = vmatpush.msra.mxu0 0.0
          %3168 = vmatpush.msra.mxu0 0.0
          %3169 = vmatpush.msra.mxu0 0.0
          %3170 = vmatpush.msra.mxu0 0.0
          %3171 = vmatpush.msra.mxu0 %v3155
          %3172 = vmatpush.msra.mxu0 %v3154
          %3173 = vmatpush.msra.mxu0 %v3153
          %3174 = vmatpush.msra.mxu0 %v3152
          %3175 = vmatmul.f32.gmra.mxu0 %v3157
          %v3176 = vpop.f32.mrf.mxu0
          %v3177 = vadd.f32 0.0, %v3176
          %3178 = vdwg.mxu0
          %v3179 = vadd.f32 %v3150, %v3177
          %s3180 = scalar_lea.vmem %s9, 256
          %v3181 = vld [vmem:[%s3180] sm:$0xff]
          %v3182 = vld [vmem:[%s3180 + $0x8] sm:$0xff]
          %v3183 = vld [vmem:[%s3180 + $0x10] sm:$0xff]
          %v3184 = vld [vmem:[%s3180 + $0x18] sm:$0xff]
          %v3185 = vrot.slane %v3121, 2
          %v3186 = vsel %vm2944, %v3185, 0
          %3188 = vmatpush.msra.mxu0 0.0
          %3189 = vmatpush.msra.mxu0 0.0
          %3190 = vmatpush.msra.mxu0 0.0
          %3191 = vmatpush.msra.mxu0 0.0
          %3192 = vmatpush.msra.mxu0 0.0
          %3193 = vmatpush.msra.mxu0 0.0
          %3194 = vmatpush.msra.mxu0 0.0
          %3195 = vmatpush.msra.mxu0 0.0
          %3196 = vmatpush.msra.mxu0 0.0
          %3197 = vmatpush.msra.mxu0 0.0
          %3198 = vmatpush.msra.mxu0 0.0
          %3199 = vmatpush.msra.mxu0 0.0
          %3200 = vmatpush.msra.mxu0 %v3184
          %3201 = vmatpush.msra.mxu0 %v3183
          %3202 = vmatpush.msra.mxu0 %v3182
          %3203 = vmatpush.msra.mxu0 %v3181
          %3204 = vmatmul.f32.gmra.mxu0 %v3186
          %v3205 = vpop.f32.mrf.mxu0
          %v3206 = vadd.f32 0.0, %v3205
          %3207 = vdwg.mxu0
          %v3208 = vadd.f32 %v3179, %v3206
          %v3209 = vmax.f32 %v3208, 0.0
          %s3210 = scalar_lea.vmem [#allocation8], %s3028
          %vm3211 = vcmask 257024
          %3212 = vst.msk [vmem:[%s3210 + $0x1] sm:$0xf] %vm3211, %v3209
        $region127: #{net_forward.1} parent=79 // loop_footer
          %s2932 = sadd.s32 1, %s2928
        $region128: #{net_forward.1} parent=79 // loop_footer_branch
          %2927 = sbr.rel target = $region124
        $region129: #{net_forward.1} parent=79 // loop_exit
          _
        %v3213 = vld [vmem:[%s12] sm:$0x1]
        loop: start=0, step=1, limit=4
        $region130: #{net_forward.1} parent=79 // loop_pre_header
          _
        $region131: #{net_forward.1} parent=79 // loop_header
          %s3215 = sphi 0, %s3219
          %p3216 = scmp.ge.s32.totalorder %s3215, 4
        $region132: #{net_forward.1} parent=79 // loop_header_branch
          %3218 = sbr.rel (%p3216) target = $region136
        $region133: #{net_forward.1} parent=79 // loop_body
          %v3221 = vperm.slane %v3213, 0
          %v3223 = vadd.f32 %v3221, 0.0
          %s3224 = smul.u32 %s3215, 8
          %s3225 = scalar_lea.vmem [#allocation8], %s3224
          %v3226 = vld [vmem:[%s3225] sm:$0x3f]
          %v3227 = vld [vmem:[%s11] sm:$0xff]
          %v3228 = vld [vmem:[%s11 + $0x8] sm:$0xff]
          %v3229 = vld [vmem:[%s11 + $0x10] sm:$0xff]
          %v3230 = vld [vmem:[%s11 + $0x18] sm:$0xff]
          %vm3231 = vcmask 261120
          %v3233 = vsel %vm3231, %v3226, 0
          %3235 = vmatpush.msra.mxu0 0.0
          %3236 = vmatpush.msra.mxu0 0.0
          %3237 = vmatpush.msra.mxu0 0.0
          %3238 = vmatpush.msra.mxu0 0.0
          %3239 = vmatpush.msra.mxu0 0.0
          %3240 = vmatpush.msra.mxu0 0.0
          %3241 = vmatpush.msra.mxu0 0.0
          %3242 = vmatpush.msra.mxu0 0.0
          %3243 = vmatpush.msra.mxu0 0.0
          %3244 = vmatpush.msra.mxu0 0.0
          %3245 = vmatpush.msra.mxu0 0.0
          %3246 = vmatpush.msra.mxu0 0.0
          %3247 = vmatpush.msra.mxu0 %v3230
          %3248 = vmatpush.msra.mxu0 %v3229
          %3249 = vmatpush.msra.mxu0 %v3228
          %3250 = vmatpush.msra.mxu0 %v3227
          %3251 = vmatmul.f32.gmra.mxu0 %v3233
          %v3252 = vpop.f32.mrf.mxu0
          %v3253 = vadd.f32 0.0, %v3252
          %3254 = vdwg.mxu0
          %v3255 = vadd.f32 %v3223, %v3253
          %s3256 = scalar_lea.vmem %s11, 32
          %v3257 = vld [vmem:[%s3256] sm:$0xff]
          %v3258 = vld [vmem:[%s3256 + $0x8] sm:$0xff]
          %v3259 = vld [vmem:[%s3256 + $0x10] sm:$0xff]
          %v3260 = vld [vmem:[%s3256 + $0x18] sm:$0xff]
          %v3261 = vrot.slane %v3226, 1
          %v3262 = vsel %vm3231, %v3261, 0
          %3264 = vmatpush.msra.mxu0 0.0
          %3265 = vmatpush.msra.mxu0 0.0
          %3266 = vmatpush.msra.mxu0 0.0
          %3267 = vmatpush.msra.mxu0 0.0
          %3268 = vmatpush.msra.mxu0 0.0
          %3269 = vmatpush.msra.mxu0 0.0
          %3270 = vmatpush.msra.mxu0 0.0
          %3271 = vmatpush.msra.mxu0 0.0
          %3272 = vmatpush.msra.mxu0 0.0
          %3273 = vmatpush.msra.mxu0 0.0
          %3274 = vmatpush.msra.mxu0 0.0
          %3275 = vmatpush.msra.mxu0 0.0
          %3276 = vmatpush.msra.mxu0 %v3260
          %3277 = vmatpush.msra.mxu0 %v3259
          %3278 = vmatpush.msra.mxu0 %v3258
          %3279 = vmatpush.msra.mxu0 %v3257
          %3280 = vmatmul.f32.gmra.mxu0 %v3262
          %v3281 = vpop.f32.mrf.mxu0
          %v3282 = vadd.f32 0.0, %v3281
          %3283 = vdwg.mxu0
          %v3284 = vadd.f32 %v3255, %v3282
          %s3285 = scalar_lea.vmem %s11, 64
          %v3286 = vld [vmem:[%s3285] sm:$0xff]
          %v3287 = vld [vmem:[%s3285 + $0x8] sm:$0xff]
          %v3288 = vld [vmem:[%s3285 + $0x10] sm:$0xff]
          %v3289 = vld [vmem:[%s3285 + $0x18] sm:$0xff]
          %v3290 = vrot.slane %v3226, 2
          %v3291 = vsel %vm3231, %v3290, 0
          %3293 = vmatpush.msra.mxu0 0.0
          %3294 = vmatpush.msra.mxu0 0.0
          %3295 = vmatpush.msra.mxu0 0.0
          %3296 = vmatpush.msra.mxu0 0.0
          %3297 = vmatpush.msra.mxu0 0.0
          %3298 = vmatpush.msra.mxu0 0.0
          %3299 = vmatpush.msra.mxu0 0.0
          %3300 = vmatpush.msra.mxu0 0.0
          %3301 = vmatpush.msra.mxu0 0.0
          %3302 = vmatpush.msra.mxu0 0.0
          %3303 = vmatpush.msra.mxu0 0.0
          %3304 = vmatpush.msra.mxu0 0.0
          %3305 = vmatpush.msra.mxu0 %v3289
          %3306 = vmatpush.msra.mxu0 %v3288
          %3307 = vmatpush.msra.mxu0 %v3287
          %3308 = vmatpush.msra.mxu0 %v3286
          %3309 = vmatmul.f32.gmra.mxu0 %v3291
          %v3310 = vpop.f32.mrf.mxu0
          %v3311 = vadd.f32 0.0, %v3310
          %3312 = vdwg.mxu0
          %v3313 = vadd.f32 %v3284, %v3311
          %s3314 = sadd.s32 %s3215, 1
          %s3315 = smul.u32 %s3314, 8
          %s3316 = scalar_lea.vmem [#allocation8], %s3315
          %v3317 = vld [vmem:[%s3316] sm:$0x3f]
          %s3318 = scalar_lea.vmem %s11, 96
          %v3319 = vld [vmem:[%s3318] sm:$0xff]
          %v3320 = vld [vmem:[%s3318 + $0x8] sm:$0xff]
          %v3321 = vld [vmem:[%s3318 + $0x10] sm:$0xff]
          %v3322 = vld [vmem:[%s3318 + $0x18] sm:$0xff]
          %v3324 = vsel %vm3231, %v3317, 0
          %3326 = vmatpush.msra.mxu0 0.0
          %3327 = vmatpush.msra.mxu0 0.0
          %3328 = vmatpush.msra.mxu0 0.0
          %3329 = vmatpush.msra.mxu0 0.0
          %3330 = vmatpush.msra.mxu0 0.0
          %3331 = vmatpush.msra.mxu0 0.0
          %3332 = vmatpush.msra.mxu0 0.0
          %3333 = vmatpush.msra.mxu0 0.0
          %3334 = vmatpush.msra.mxu0 0.0
          %3335 = vmatpush.msra.mxu0 0.0
          %3336 = vmatpush.msra.mxu0 0.0
          %3337 = vmatpush.msra.mxu0 0.0
          %3338 = vmatpush.msra.mxu0 %v3322
          %3339 = vmatpush.msra.mxu0 %v3321
          %3340 = vmatpush.msra.mxu0 %v3320
          %3341 = vmatpush.msra.mxu0 %v3319
          %3342 = vmatmul.f32.gmra.mxu0 %v3324
          %v3343 = vpop.f32.mrf.mxu0
          %v3344 = vadd.f32 0.0, %v3343
          %3345 = vdwg.mxu0
          %v3346 = vadd.f32 %v3313, %v3344
          %s3347 = scalar_lea.vmem %s11, 128
          %v3348 = vld [vmem:[%s3347] sm:$0xff]
          %v3349 = vld [vmem:[%s3347 + $0x8] sm:$0xff]
          %v3350 = vld [vmem:[%s3347 + $0x10] sm:$0xff]
          %v3351 = vld [vmem:[%s3347 + $0x18] sm:$0xff]
          %v3352 = vrot.slane %v3317, 1
          %v3353 = vsel %vm3231, %v3352, 0
          %3355 = vmatpush.msra.mxu0 0.0
          %3356 = vmatpush.msra.mxu0 0.0
          %3357 = vmatpush.msra.mxu0 0.0
          %3358 = vmatpush.msra.mxu0 0.0
          %3359 = vmatpush.msra.mxu0 0.0
          %3360 = vmatpush.msra.mxu0 0.0
          %3361 = vmatpush.msra.mxu0 0.0
          %3362 = vmatpush.msra.mxu0 0.0
          %3363 = vmatpush.msra.mxu0 0.0
          %3364 = vmatpush.msra.mxu0 0.0
          %3365 = vmatpush.msra.mxu0 0.0
          %3366 = vmatpush.msra.mxu0 0.0
          %3367 = vmatpush.msra.mxu0 %v3351
          %3368 = vmatpush.msra.mxu0 %v3350
          %3369 = vmatpush.msra.mxu0 %v3349
          %3370 = vmatpush.msra.mxu0 %v3348
          %3371 = vmatmul.f32.gmra.mxu0 %v3353
          %v3372 = vpop.f32.mrf.mxu0
          %v3373 = vadd.f32 0.0, %v3372
          %3374 = vdwg.mxu0
          %v3375 = vadd.f32 %v3346, %v3373
          %s3376 = scalar_lea.vmem %s11, 160
          %v3377 = vld [vmem:[%s3376] sm:$0xff]
          %v3378 = vld [vmem:[%s3376 + $0x8] sm:$0xff]
          %v3379 = vld [vmem:[%s3376 + $0x10] sm:$0xff]
          %v3380 = vld [vmem:[%s3376 + $0x18] sm:$0xff]
          %v3381 = vrot.slane %v3317, 2
          %v3382 = vsel %vm3231, %v3381, 0
          %3384 = vmatpush.msra.mxu0 0.0
          %3385 = vmatpush.msra.mxu0 0.0
          %3386 = vmatpush.msra.mxu0 0.0
          %3387 = vmatpush.msra.mxu0 0.0
          %3388 = vmatpush.msra.mxu0 0.0
          %3389 = vmatpush.msra.mxu0 0.0
          %3390 = vmatpush.msra.mxu0 0.0
          %3391 = vmatpush.msra.mxu0 0.0
          %3392 = vmatpush.msra.mxu0 0.0
          %3393 = vmatpush.msra.mxu0 0.0
          %3394 = vmatpush.msra.mxu0 0.0
          %3395 = vmatpush.msra.mxu0 0.0
          %3396 = vmatpush.msra.mxu0 %v3380
          %3397 = vmatpush.msra.mxu0 %v3379
          %3398 = vmatpush.msra.mxu0 %v3378
          %3399 = vmatpush.msra.mxu0 %v3377
          %3400 = vmatmul.f32.gmra.mxu0 %v3382
          %v3401 = vpop.f32.mrf.mxu0
          %v3402 = vadd.f32 0.0, %v3401
          %3403 = vdwg.mxu0
          %v3404 = vadd.f32 %v3375, %v3402
          %s3405 = sadd.s32 %s3215, 2
          %s3406 = smul.u32 %s3405, 8
          %s3407 = scalar_lea.vmem [#allocation8], %s3406
          %v3408 = vld [vmem:[%s3407] sm:$0x3f]
          %s3409 = scalar_lea.vmem %s11, 192
          %v3410 = vld [vmem:[%s3409] sm:$0xff]
          %v3411 = vld [vmem:[%s3409 + $0x8] sm:$0xff]
          %v3412 = vld [vmem:[%s3409 + $0x10] sm:$0xff]
          %v3413 = vld [vmem:[%s3409 + $0x18] sm:$0xff]
          %v3415 = vsel %vm3231, %v3408, 0
          %3417 = vmatpush.msra.mxu0 0.0
          %3418 = vmatpush.msra.mxu0 0.0
          %3419 = vmatpush.msra.mxu0 0.0
          %3420 = vmatpush.msra.mxu0 0.0
          %3421 = vmatpush.msra.mxu0 0.0
          %3422 = vmatpush.msra.mxu0 0.0
          %3423 = vmatpush.msra.mxu0 0.0
          %3424 = vmatpush.msra.mxu0 0.0
          %3425 = vmatpush.msra.mxu0 0.0
          %3426 = vmatpush.msra.mxu0 0.0
          %3427 = vmatpush.msra.mxu0 0.0
          %3428 = vmatpush.msra.mxu0 0.0
          %3429 = vmatpush.msra.mxu0 %v3413
          %3430 = vmatpush.msra.mxu0 %v3412
          %3431 = vmatpush.msra.mxu0 %v3411
          %3432 = vmatpush.msra.mxu0 %v3410
          %3433 = vmatmul.f32.gmra.mxu0 %v3415
          %v3434 = vpop.f32.mrf.mxu0
          %v3435 = vadd.f32 0.0, %v3434
          %3436 = vdwg.mxu0
          %v3437 = vadd.f32 %v3404, %v3435
          %s3438 = scalar_lea.vmem %s11, 224
          %v3439 = vld [vmem:[%s3438] sm:$0xff]
          %v3440 = vld [vmem:[%s3438 + $0x8] sm:$0xff]
          %v3441 = vld [vmem:[%s3438 + $0x10] sm:$0xff]
          %v3442 = vld [vmem:[%s3438 + $0x18] sm:$0xff]
          %v3443 = vrot.slane %v3408, 1
          %v3444 = vsel %vm3231, %v3443, 0
          %3446 = vmatpush.msra.mxu0 0.0
          %3447 = vmatpush.msra.mxu0 0.0
          %3448 = vmatpush.msra.mxu0 0.0
          %3449 = vmatpush.msra.mxu0 0.0
          %3450 = vmatpush.msra.mxu0 0.0
          %3451 = vmatpush.msra.mxu0 0.0
          %3452 = vmatpush.msra.mxu0 0.0
          %3453 = vmatpush.msra.mxu0 0.0
          %3454 = vmatpush.msra.mxu0 0.0
          %3455 = vmatpush.msra.mxu0 0.0
          %3456 = vmatpush.msra.mxu0 0.0
          %3457 = vmatpush.msra.mxu0 0.0
          %3458 = vmatpush.msra.mxu0 %v3442
          %3459 = vmatpush.msra.mxu0 %v3441
          %3460 = vmatpush.msra.mxu0 %v3440
          %3461 = vmatpush.msra.mxu0 %v3439
          %3462 = vmatmul.f32.gmra.mxu0 %v3444
          %v3463 = vpop.f32.mrf.mxu0
          %v3464 = vadd.f32 0.0, %v3463
          %3465 = vdwg.mxu0
          %v3466 = vadd.f32 %v3437, %v3464
          %s3467 = scalar_lea.vmem %s11, 256
          %v3468 = vld [vmem:[%s3467] sm:$0xff]
          %v3469 = vld [vmem:[%s3467 + $0x8] sm:$0xff]
          %v3470 = vld [vmem:[%s3467 + $0x10] sm:$0xff]
          %v3471 = vld [vmem:[%s3467 + $0x18] sm:$0xff]
          %v3472 = vrot.slane %v3408, 2
          %v3473 = vsel %vm3231, %v3472, 0
          %3475 = vmatpush.msra.mxu0 0.0
          %3476 = vmatpush.msra.mxu0 0.0
          %3477 = vmatpush.msra.mxu0 0.0
          %3478 = vmatpush.msra.mxu0 0.0
          %3479 = vmatpush.msra.mxu0 0.0
          %3480 = vmatpush.msra.mxu0 0.0
          %3481 = vmatpush.msra.mxu0 0.0
          %3482 = vmatpush.msra.mxu0 0.0
          %3483 = vmatpush.msra.mxu0 0.0
          %3484 = vmatpush.msra.mxu0 0.0
          %3485 = vmatpush.msra.mxu0 0.0
          %3486 = vmatpush.msra.mxu0 0.0
          %3487 = vmatpush.msra.mxu0 %v3471
          %3488 = vmatpush.msra.mxu0 %v3470
          %3489 = vmatpush.msra.mxu0 %v3469
          %3490 = vmatpush.msra.mxu0 %v3468
          %3491 = vmatmul.f32.gmra.mxu0 %v3473
          %v3492 = vpop.f32.mrf.mxu0
          %v3493 = vadd.f32 0.0, %v3492
          %3494 = vdwg.mxu0
          %v3495 = vadd.f32 %v3466, %v3493
          %s3496 = scalar_lea.vmem [#allocation7], %s3315
          %v3497 = vld [vmem:[%s3496 + $0x1] sm:$0xf]
          %v3498 = vadd.f32 %v3495, %v3497
          %v3499 = vmax.f32 %v3498, 0.0
          %s3500 = smul.u32 %s3215, 4
          %s3501 = scalar_lea.vmem [#allocation9], %s3500
          %vm3502 = vcmask 257024
          %3503 = vst.msk [vmem:[%s3501] sm:$0xf] %vm3502, %v3499
        $region134: #{net_forward.1} parent=79 // loop_footer
          %s3219 = sadd.s32 1, %s3215
        $region135: #{net_forward.1} parent=79 // loop_footer_branch
          %3214 = sbr.rel target = $region131
        $region136: #{net_forward.1} parent=79 // loop_exit
          _
        %v3504 = vld [vmem:[%s14] sm:$0x1]
        %v3505 = vadd.f32 %v3504, 0.0
        %v3506 = vld [vmem:[#allocation9] sm:$0xf]
        %v3507 = vld [vmem:[%s13] sm:$0xff]
        %v3508 = vld [vmem:[%s13 + $0x8] sm:$0xff]
        %v3509 = vld [vmem:[%s13 + $0x10] sm:$0xff]
        %v3510 = vld [vmem:[%s13 + $0x18] sm:$0xff]
        %vm3511 = vcmask 261120
        %v3513 = vsel %vm3511, %v3506, 0
        %3515 = vmatpush.msra.mxu0 0.0
        %3516 = vmatpush.msra.mxu0 0.0
        %3517 = vmatpush.msra.mxu0 0.0
        %3518 = vmatpush.msra.mxu0 0.0
        %3519 = vmatpush.msra.mxu0 0.0
        %3520 = vmatpush.msra.mxu0 0.0
        %3521 = vmatpush.msra.mxu0 0.0
        %3522 = vmatpush.msra.mxu0 0.0
        %3523 = vmatpush.msra.mxu0 0.0
        %3524 = vmatpush.msra.mxu0 0.0
        %3525 = vmatpush.msra.mxu0 0.0
        %3526 = vmatpush.msra.mxu0 0.0
        %3527 = vmatpush.msra.mxu0 %v3510
        %3528 = vmatpush.msra.mxu0 %v3509
        %3529 = vmatpush.msra.mxu0 %v3508
        %3530 = vmatpush.msra.mxu0 %v3507
        %3531 = vmatmul.f32.gmra.mxu0 %v3513
        %v3532 = vpop.f32.mrf.mxu0
        %v3533 = vadd.f32 0.0, %v3532
        %3534 = vdwg.mxu0
        %v3535 = vadd.f32 %v3505, %v3533
        %s3536 = scalar_lea.vmem %s13, 32
        %v3537 = vld [vmem:[%s3536] sm:$0xff]
        %v3538 = vld [vmem:[%s3536 + $0x8] sm:$0xff]
        %v3539 = vld [vmem:[%s3536 + $0x10] sm:$0xff]
        %v3540 = vld [vmem:[%s3536 + $0x18] sm:$0xff]
        %v3541 = vrot.slane %v3506, 1
        %v3542 = vsel %vm3511, %v3541, 0
        %3544 = vmatpush.msra.mxu0 0.0
        %3545 = vmatpush.msra.mxu0 0.0
        %3546 = vmatpush.msra.mxu0 0.0
        %3547 = vmatpush.msra.mxu0 0.0
        %3548 = vmatpush.msra.mxu0 0.0
        %3549 = vmatpush.msra.mxu0 0.0
        %3550 = vmatpush.msra.mxu0 0.0
        %3551 = vmatpush.msra.mxu0 0.0
        %3552 = vmatpush.msra.mxu0 0.0
        %3553 = vmatpush.msra.mxu0 0.0
        %3554 = vmatpush.msra.mxu0 0.0
        %3555 = vmatpush.msra.mxu0 0.0
        %3556 = vmatpush.msra.mxu0 %v3540
        %3557 = vmatpush.msra.mxu0 %v3539
        %3558 = vmatpush.msra.mxu0 %v3538
        %3559 = vmatpush.msra.mxu0 %v3537
        %3560 = vmatmul.f32.gmra.mxu0 %v3542
        %v3561 = vpop.f32.mrf.mxu0
        %v3562 = vadd.f32 0.0, %v3561
        %3563 = vdwg.mxu0
        %v3564 = vadd.f32 %v3535, %v3562
        %s3565 = scalar_lea.vmem %s13, 64
        %v3566 = vld [vmem:[%s3565] sm:$0xff]
        %v3567 = vld [vmem:[%s3565 + $0x8] sm:$0xff]
        %v3568 = vld [vmem:[%s3565 + $0x10] sm:$0xff]
        %v3569 = vld [vmem:[%s3565 + $0x18] sm:$0xff]
        %v3570 = vrot.slane %v3506, 2
        %v3571 = vsel %vm3511, %v3570, 0
        %3573 = vmatpush.msra.mxu0 0.0
        %3574 = vmatpush.msra.mxu0 0.0
        %3575 = vmatpush.msra.mxu0 0.0
        %3576 = vmatpush.msra.mxu0 0.0
        %3577 = vmatpush.msra.mxu0 0.0
        %3578 = vmatpush.msra.mxu0 0.0
        %3579 = vmatpush.msra.mxu0 0.0
        %3580 = vmatpush.msra.mxu0 0.0
        %3581 = vmatpush.msra.mxu0 0.0
        %3582 = vmatpush.msra.mxu0 0.0
        %3583 = vmatpush.msra.mxu0 0.0
        %3584 = vmatpush.msra.mxu0 0.0
        %3585 = vmatpush.msra.mxu0 %v3569
        %3586 = vmatpush.msra.mxu0 %v3568
        %3587 = vmatpush.msra.mxu0 %v3567
        %3588 = vmatpush.msra.mxu0 %v3566
        %3589 = vmatmul.f32.gmra.mxu0 %v3571
        %v3590 = vpop.f32.mrf.mxu0
        %v3591 = vadd.f32 0.0, %v3590
        %3592 = vdwg.mxu0
        %v3593 = vadd.f32 %v3564, %v3591
        %s3594 = scalar_lea.vmem %s13, 96
        %v3595 = vld [vmem:[%s3594] sm:$0xff]
        %v3596 = vld [vmem:[%s3594 + $0x8] sm:$0xff]
        %v3597 = vld [vmem:[%s3594 + $0x10] sm:$0xff]
        %v3598 = vld [vmem:[%s3594 + $0x18] sm:$0xff]
        %v3599 = vrot.slane %v3506, 3
        %v3600 = vsel %vm3511, %v3599, 0
        %3602 = vmatpush.msra.mxu0 0.0
        %3603 = vmatpush.msra.mxu0 0.0
        %3604 = vmatpush.msra.mxu0 0.0
        %3605 = vmatpush.msra.mxu0 0.0
        %3606 = vmatpush.msra.mxu0 0.0
        %3607 = vmatpush.msra.mxu0 0.0
        %3608 = vmatpush.msra.mxu0 0.0
        %3609 = vmatpush.msra.mxu0 0.0
        %3610 = vmatpush.msra.mxu0 0.0
        %3611 = vmatpush.msra.mxu0 0.0
        %3612 = vmatpush.msra.mxu0 0.0
        %3613 = vmatpush.msra.mxu0 0.0
        %3614 = vmatpush.msra.mxu0 %v3598
        %3615 = vmatpush.msra.mxu0 %v3597
        %3616 = vmatpush.msra.mxu0 %v3596
        %3617 = vmatpush.msra.mxu0 %v3595
        %3618 = vmatmul.f32.gmra.mxu0 %v3600
        %v3619 = vpop.f32.mrf.mxu0
        %v3620 = vadd.f32 0.0, %v3619
        %3621 = vdwg.mxu0
        %v3622 = vadd.f32 %v3593, %v3620
        %s3623 = scalar_lea.vmem [#allocation9], 4
        %v3624 = vld [vmem:[%s3623] sm:$0xf]
        %s3625 = scalar_lea.vmem %s13, 128
        %v3626 = vld [vmem:[%s3625] sm:$0xff]
        %v3627 = vld [vmem:[%s3625 + $0x8] sm:$0xff]
        %v3628 = vld [vmem:[%s3625 + $0x10] sm:$0xff]
        %v3629 = vld [vmem:[%s3625 + $0x18] sm:$0xff]
        %v3631 = vsel %vm3511, %v3624, 0
        %3633 = vmatpush.msra.mxu0 0.0
        %3634 = vmatpush.msra.mxu0 0.0
        %3635 = vmatpush.msra.mxu0 0.0
        %3636 = vmatpush.msra.mxu0 0.0
        %3637 = vmatpush.msra.mxu0 0.0
        %3638 = vmatpush.msra.mxu0 0.0
        %3639 = vmatpush.msra.mxu0 0.0
        %3640 = vmatpush.msra.mxu0 0.0
        %3641 = vmatpush.msra.mxu0 0.0
        %3642 = vmatpush.msra.mxu0 0.0
        %3643 = vmatpush.msra.mxu0 0.0
        %3644 = vmatpush.msra.mxu0 0.0
        %3645 = vmatpush.msra.mxu0 %v3629
        %3646 = vmatpush.msra.mxu0 %v3628
        %3647 = vmatpush.msra.mxu0 %v3627
        %3648 = vmatpush.msra.mxu0 %v3626
        %3649 = vmatmul.f32.gmra.mxu0 %v3631
        %v3650 = vpop.f32.mrf.mxu0
        %v3651 = vadd.f32 0.0, %v3650
        %3652 = vdwg.mxu0
        %v3653 = vadd.f32 %v3622, %v3651
        %s3654 = scalar_lea.vmem %s13, 160
        %v3655 = vld [vmem:[%s3654] sm:$0xff]
        %v3656 = vld [vmem:[%s3654 + $0x8] sm:$0xff]
        %v3657 = vld [vmem:[%s3654 + $0x10] sm:$0xff]
        %v3658 = vld [vmem:[%s3654 + $0x18] sm:$0xff]
        %v3659 = vrot.slane %v3624, 1
        %v3660 = vsel %vm3511, %v3659, 0
        %3662 = vmatpush.msra.mxu0 0.0
        %3663 = vmatpush.msra.mxu0 0.0
        %3664 = vmatpush.msra.mxu0 0.0
        %3665 = vmatpush.msra.mxu0 0.0
        %3666 = vmatpush.msra.mxu0 0.0
        %3667 = vmatpush.msra.mxu0 0.0
        %3668 = vmatpush.msra.mxu0 0.0
        %3669 = vmatpush.msra.mxu0 0.0
        %3670 = vmatpush.msra.mxu0 0.0
        %3671 = vmatpush.msra.mxu0 0.0
        %3672 = vmatpush.msra.mxu0 0.0
        %3673 = vmatpush.msra.mxu0 0.0
        %3674 = vmatpush.msra.mxu0 %v3658
        %3675 = vmatpush.msra.mxu0 %v3657
        %3676 = vmatpush.msra.mxu0 %v3656
        %3677 = vmatpush.msra.mxu0 %v3655
        %3678 = vmatmul.f32.gmra.mxu0 %v3660
        %v3679 = vpop.f32.mrf.mxu0
        %v3680 = vadd.f32 0.0, %v3679
        %3681 = vdwg.mxu0
        %v3682 = vadd.f32 %v3653, %v3680
        %s3683 = scalar_lea.vmem %s13, 192
        %v3684 = vld [vmem:[%s3683] sm:$0xff]
        %v3685 = vld [vmem:[%s3683 + $0x8] sm:$0xff]
        %v3686 = vld [vmem:[%s3683 + $0x10] sm:$0xff]
        %v3687 = vld [vmem:[%s3683 + $0x18] sm:$0xff]
        %v3688 = vrot.slane %v3624, 2
        %v3689 = vsel %vm3511, %v3688, 0
        %3691 = vmatpush.msra.mxu0 0.0
        %3692 = vmatpush.msra.mxu0 0.0
        %3693 = vmatpush.msra.mxu0 0.0
        %3694 = vmatpush.msra.mxu0 0.0
        %3695 = vmatpush.msra.mxu0 0.0
        %3696 = vmatpush.msra.mxu0 0.0
        %3697 = vmatpush.msra.mxu0 0.0
        %3698 = vmatpush.msra.mxu0 0.0
        %3699 = vmatpush.msra.mxu0 0.0
        %3700 = vmatpush.msra.mxu0 0.0
        %3701 = vmatpush.msra.mxu0 0.0
        %3702 = vmatpush.msra.mxu0 0.0
        %3703 = vmatpush.msra.mxu0 %v3687
        %3704 = vmatpush.msra.mxu0 %v3686
        %3705 = vmatpush.msra.mxu0 %v3685
        %3706 = vmatpush.msra.mxu0 %v3684
        %3707 = vmatmul.f32.gmra.mxu0 %v3689
        %v3708 = vpop.f32.mrf.mxu0
        %v3709 = vadd.f32 0.0, %v3708
        %3710 = vdwg.mxu0
        %v3711 = vadd.f32 %v3682, %v3709
        %s3712 = scalar_lea.vmem %s13, 224
        %v3713 = vld [vmem:[%s3712] sm:$0xff]
        %v3714 = vld [vmem:[%s3712 + $0x8] sm:$0xff]
        %v3715 = vld [vmem:[%s3712 + $0x10] sm:$0xff]
        %v3716 = vld [vmem:[%s3712 + $0x18] sm:$0xff]
        %v3717 = vrot.slane %v3624, 3
        %v3718 = vsel %vm3511, %v3717, 0
        %3720 = vmatpush.msra.mxu0 0.0
        %3721 = vmatpush.msra.mxu0 0.0
        %3722 = vmatpush.msra.mxu0 0.0
        %3723 = vmatpush.msra.mxu0 0.0
        %3724 = vmatpush.msra.mxu0 0.0
        %3725 = vmatpush.msra.mxu0 0.0
        %3726 = vmatpush.msra.mxu0 0.0
        %3727 = vmatpush.msra.mxu0 0.0
        %3728 = vmatpush.msra.mxu0 0.0
        %3729 = vmatpush.msra.mxu0 0.0
        %3730 = vmatpush.msra.mxu0 0.0
        %3731 = vmatpush.msra.mxu0 0.0
        %3732 = vmatpush.msra.mxu0 %v3716
        %3733 = vmatpush.msra.mxu0 %v3715
        %3734 = vmatpush.msra.mxu0 %v3714
        %3735 = vmatpush.msra.mxu0 %v3713
        %3736 = vmatmul.f32.gmra.mxu0 %v3718
        %v3737 = vpop.f32.mrf.mxu0
        %v3738 = vadd.f32 0.0, %v3737
        %3739 = vdwg.mxu0
        %v3740 = vadd.f32 %v3711, %v3738
        %s3741 = scalar_lea.vmem [#allocation9], 8
        %v3742 = vld [vmem:[%s3741] sm:$0xf]
        %s3743 = scalar_lea.vmem %s13, 256
        %v3744 = vld [vmem:[%s3743] sm:$0xff]
        %v3745 = vld [vmem:[%s3743 + $0x8] sm:$0xff]
        %v3746 = vld [vmem:[%s3743 + $0x10] sm:$0xff]
        %v3747 = vld [vmem:[%s3743 + $0x18] sm:$0xff]
        %v3749 = vsel %vm3511, %v3742, 0
        %3751 = vmatpush.msra.mxu0 0.0
        %3752 = vmatpush.msra.mxu0 0.0
        %3753 = vmatpush.msra.mxu0 0.0
        %3754 = vmatpush.msra.mxu0 0.0
        %3755 = vmatpush.msra.mxu0 0.0
        %3756 = vmatpush.msra.mxu0 0.0
        %3757 = vmatpush.msra.mxu0 0.0
        %3758 = vmatpush.msra.mxu0 0.0
        %3759 = vmatpush.msra.mxu0 0.0
        %3760 = vmatpush.msra.mxu0 0.0
        %3761 = vmatpush.msra.mxu0 0.0
        %3762 = vmatpush.msra.mxu0 0.0
        %3763 = vmatpush.msra.mxu0 %v3747
        %3764 = vmatpush.msra.mxu0 %v3746
        %3765 = vmatpush.msra.mxu0 %v3745
        %3766 = vmatpush.msra.mxu0 %v3744
        %3767 = vmatmul.f32.gmra.mxu0 %v3749
        %v3768 = vpop.f32.mrf.mxu0
        %v3769 = vadd.f32 0.0, %v3768
        %3770 = vdwg.mxu0
        %v3771 = vadd.f32 %v3740, %v3769
        %s3772 = scalar_lea.vmem %s13, 288
        %v3773 = vld [vmem:[%s3772] sm:$0xff]
        %v3774 = vld [vmem:[%s3772 + $0x8] sm:$0xff]
        %v3775 = vld [vmem:[%s3772 + $0x10] sm:$0xff]
        %v3776 = vld [vmem:[%s3772 + $0x18] sm:$0xff]
        %v3777 = vrot.slane %v3742, 1
        %v3778 = vsel %vm3511, %v3777, 0
        %3780 = vmatpush.msra.mxu0 0.0
        %3781 = vmatpush.msra.mxu0 0.0
        %3782 = vmatpush.msra.mxu0 0.0
        %3783 = vmatpush.msra.mxu0 0.0
        %3784 = vmatpush.msra.mxu0 0.0
        %3785 = vmatpush.msra.mxu0 0.0
        %3786 = vmatpush.msra.mxu0 0.0
        %3787 = vmatpush.msra.mxu0 0.0
        %3788 = vmatpush.msra.mxu0 0.0
        %3789 = vmatpush.msra.mxu0 0.0
        %3790 = vmatpush.msra.mxu0 0.0
        %3791 = vmatpush.msra.mxu0 0.0
        %3792 = vmatpush.msra.mxu0 %v3776
        %3793 = vmatpush.msra.mxu0 %v3775
        %3794 = vmatpush.msra.mxu0 %v3774
        %3795 = vmatpush.msra.mxu0 %v3773
        %3796 = vmatmul.f32.gmra.mxu0 %v3778
        %v3797 = vpop.f32.mrf.mxu0
        %v3798 = vadd.f32 0.0, %v3797
        %3799 = vdwg.mxu0
        %v3800 = vadd.f32 %v3771, %v3798
        %s3801 = scalar_lea.vmem %s13, 320
        %v3802 = vld [vmem:[%s3801] sm:$0xff]
        %v3803 = vld [vmem:[%s3801 + $0x8] sm:$0xff]
        %v3804 = vld [vmem:[%s3801 + $0x10] sm:$0xff]
        %v3805 = vld [vmem:[%s3801 + $0x18] sm:$0xff]
        %v3806 = vrot.slane %v3742, 2
        %v3807 = vsel %vm3511, %v3806, 0
        %3809 = vmatpush.msra.mxu0 0.0
        %3810 = vmatpush.msra.mxu0 0.0
        %3811 = vmatpush.msra.mxu0 0.0
        %3812 = vmatpush.msra.mxu0 0.0
        %3813 = vmatpush.msra.mxu0 0.0
        %3814 = vmatpush.msra.mxu0 0.0
        %3815 = vmatpush.msra.mxu0 0.0
        %3816 = vmatpush.msra.mxu0 0.0
        %3817 = vmatpush.msra.mxu0 0.0
        %3818 = vmatpush.msra.mxu0 0.0
        %3819 = vmatpush.msra.mxu0 0.0
        %3820 = vmatpush.msra.mxu0 0.0
        %3821 = vmatpush.msra.mxu0 %v3805
        %3822 = vmatpush.msra.mxu0 %v3804
        %3823 = vmatpush.msra.mxu0 %v3803
        %3824 = vmatpush.msra.mxu0 %v3802
        %3825 = vmatmul.f32.gmra.mxu0 %v3807
        %v3826 = vpop.f32.mrf.mxu0
        %v3827 = vadd.f32 0.0, %v3826
        %3828 = vdwg.mxu0
        %v3829 = vadd.f32 %v3800, %v3827
        %s3830 = scalar_lea.vmem %s13, 352
        %v3831 = vld [vmem:[%s3830] sm:$0xff]
        %v3832 = vld [vmem:[%s3830 + $0x8] sm:$0xff]
        %v3833 = vld [vmem:[%s3830 + $0x10] sm:$0xff]
        %v3834 = vld [vmem:[%s3830 + $0x18] sm:$0xff]
        %v3835 = vrot.slane %v3742, 3
        %v3836 = vsel %vm3511, %v3835, 0
        %3838 = vmatpush.msra.mxu0 0.0
        %3839 = vmatpush.msra.mxu0 0.0
        %3840 = vmatpush.msra.mxu0 0.0
        %3841 = vmatpush.msra.mxu0 0.0
        %3842 = vmatpush.msra.mxu0 0.0
        %3843 = vmatpush.msra.mxu0 0.0
        %3844 = vmatpush.msra.mxu0 0.0
        %3845 = vmatpush.msra.mxu0 0.0
        %3846 = vmatpush.msra.mxu0 0.0
        %3847 = vmatpush.msra.mxu0 0.0
        %3848 = vmatpush.msra.mxu0 0.0
        %3849 = vmatpush.msra.mxu0 0.0
        %3850 = vmatpush.msra.mxu0 %v3834
        %3851 = vmatpush.msra.mxu0 %v3833
        %3852 = vmatpush.msra.mxu0 %v3832
        %3853 = vmatpush.msra.mxu0 %v3831
        %3854 = vmatmul.f32.gmra.mxu0 %v3836
        %v3855 = vpop.f32.mrf.mxu0
        %v3856 = vadd.f32 0.0, %v3855
        %3857 = vdwg.mxu0
        %v3858 = vadd.f32 %v3829, %v3856
        %s3859 = scalar_lea.vmem [#allocation9], 12
        %v3860 = vld [vmem:[%s3859] sm:$0xf]
        %s3861 = scalar_lea.vmem %s13, 384
        %v3862 = vld [vmem:[%s3861] sm:$0xff]
        %v3863 = vld [vmem:[%s3861 + $0x8] sm:$0xff]
        %v3864 = vld [vmem:[%s3861 + $0x10] sm:$0xff]
        %v3865 = vld [vmem:[%s3861 + $0x18] sm:$0xff]
        %v3867 = vsel %vm3511, %v3860, 0
        %3869 = vmatpush.msra.mxu0 0.0
        %3870 = vmatpush.msra.mxu0 0.0
        %3871 = vmatpush.msra.mxu0 0.0
        %3872 = vmatpush.msra.mxu0 0.0
        %3873 = vmatpush.msra.mxu0 0.0
        %3874 = vmatpush.msra.mxu0 0.0
        %3875 = vmatpush.msra.mxu0 0.0
        %3876 = vmatpush.msra.mxu0 0.0
        %3877 = vmatpush.msra.mxu0 0.0
        %3878 = vmatpush.msra.mxu0 0.0
        %3879 = vmatpush.msra.mxu0 0.0
        %3880 = vmatpush.msra.mxu0 0.0
        %3881 = vmatpush.msra.mxu0 %v3865
        %3882 = vmatpush.msra.mxu0 %v3864
        %3883 = vmatpush.msra.mxu0 %v3863
        %3884 = vmatpush.msra.mxu0 %v3862
        %3885 = vmatmul.f32.gmra.mxu0 %v3867
        %v3886 = vpop.f32.mrf.mxu0
        %v3887 = vadd.f32 0.0, %v3886
        %3888 = vdwg.mxu0
        %v3889 = vadd.f32 %v3858, %v3887
        %s3890 = scalar_lea.vmem %s13, 416
        %v3891 = vld [vmem:[%s3890] sm:$0xff]
        %v3892 = vld [vmem:[%s3890 + $0x8] sm:$0xff]
        %v3893 = vld [vmem:[%s3890 + $0x10] sm:$0xff]
        %v3894 = vld [vmem:[%s3890 + $0x18] sm:$0xff]
        %v3895 = vrot.slane %v3860, 1
        %v3896 = vsel %vm3511, %v3895, 0
        %3898 = vmatpush.msra.mxu0 0.0
        %3899 = vmatpush.msra.mxu0 0.0
        %3900 = vmatpush.msra.mxu0 0.0
        %3901 = vmatpush.msra.mxu0 0.0
        %3902 = vmatpush.msra.mxu0 0.0
        %3903 = vmatpush.msra.mxu0 0.0
        %3904 = vmatpush.msra.mxu0 0.0
        %3905 = vmatpush.msra.mxu0 0.0
        %3906 = vmatpush.msra.mxu0 0.0
        %3907 = vmatpush.msra.mxu0 0.0
        %3908 = vmatpush.msra.mxu0 0.0
        %3909 = vmatpush.msra.mxu0 0.0
        %3910 = vmatpush.msra.mxu0 %v3894
        %3911 = vmatpush.msra.mxu0 %v3893
        %3912 = vmatpush.msra.mxu0 %v3892
        %3913 = vmatpush.msra.mxu0 %v3891
        %3914 = vmatmul.f32.gmra.mxu0 %v3896
        %v3915 = vpop.f32.mrf.mxu0
        %v3916 = vadd.f32 0.0, %v3915
        %3917 = vdwg.mxu0
        %v3918 = vadd.f32 %v3889, %v3916
        %s3919 = scalar_lea.vmem %s13, 448
        %v3920 = vld [vmem:[%s3919] sm:$0xff]
        %v3921 = vld [vmem:[%s3919 + $0x8] sm:$0xff]
        %v3922 = vld [vmem:[%s3919 + $0x10] sm:$0xff]
        %v3923 = vld [vmem:[%s3919 + $0x18] sm:$0xff]
        %v3924 = vrot.slane %v3860, 2
        %v3925 = vsel %vm3511, %v3924, 0
        %3927 = vmatpush.msra.mxu0 0.0
        %3928 = vmatpush.msra.mxu0 0.0
        %3929 = vmatpush.msra.mxu0 0.0
        %3930 = vmatpush.msra.mxu0 0.0
        %3931 = vmatpush.msra.mxu0 0.0
        %3932 = vmatpush.msra.mxu0 0.0
        %3933 = vmatpush.msra.mxu0 0.0
        %3934 = vmatpush.msra.mxu0 0.0
        %3935 = vmatpush.msra.mxu0 0.0
        %3936 = vmatpush.msra.mxu0 0.0
        %3937 = vmatpush.msra.mxu0 0.0
        %3938 = vmatpush.msra.mxu0 0.0
        %3939 = vmatpush.msra.mxu0 %v3923
        %3940 = vmatpush.msra.mxu0 %v3922
        %3941 = vmatpush.msra.mxu0 %v3921
        %3942 = vmatpush.msra.mxu0 %v3920
        %3943 = vmatmul.f32.gmra.mxu0 %v3925
        %v3944 = vpop.f32.mrf.mxu0
        %v3945 = vadd.f32 0.0, %v3944
        %3946 = vdwg.mxu0
        %v3947 = vadd.f32 %v3918, %v3945
        %s3948 = scalar_lea.vmem %s13, 480
        %v3949 = vld [vmem:[%s3948] sm:$0xff]
        %v3950 = vld [vmem:[%s3948 + $0x8] sm:$0xff]
        %v3951 = vld [vmem:[%s3948 + $0x10] sm:$0xff]
        %v3952 = vld [vmem:[%s3948 + $0x18] sm:$0xff]
        %v3953 = vrot.slane %v3860, 3
        %v3954 = vsel %vm3511, %v3953, 0
        %3956 = vmatpush.msra.mxu0 0.0
        %3957 = vmatpush.msra.mxu0 0.0
        %3958 = vmatpush.msra.mxu0 0.0
        %3959 = vmatpush.msra.mxu0 0.0
        %3960 = vmatpush.msra.mxu0 0.0
        %3961 = vmatpush.msra.mxu0 0.0
        %3962 = vmatpush.msra.mxu0 0.0
        %3963 = vmatpush.msra.mxu0 0.0
        %3964 = vmatpush.msra.mxu0 0.0
        %3965 = vmatpush.msra.mxu0 0.0
        %3966 = vmatpush.msra.mxu0 0.0
        %3967 = vmatpush.msra.mxu0 0.0
        %3968 = vmatpush.msra.mxu0 %v3952
        %3969 = vmatpush.msra.mxu0 %v3951
        %3970 = vmatpush.msra.mxu0 %v3950
        %3971 = vmatpush.msra.mxu0 %v3949
        %3972 = vmatmul.f32.gmra.mxu0 %v3954
        %v3973 = vpop.f32.mrf.mxu0
        %v3974 = vadd.f32 0.0, %v3973
        %3975 = vdwg.mxu0
        %v3976 = vadd.f32 %v3947, %v3974
        %vm3977 = vcmask 73728
        %3978 = vst.msk [vmem:[%s486] sm:$0x1] %vm3977, %v3976
        %s3979 = sand.u32 %s357, 1
        %s3980 = scalar_lea.sflag [#allocation11], %s3979
        %s3981 = sand.u32 %s357, 1
        %s3982 = scalar_lea.vmem [#allocation10], %s3981
        // Predicated region
        $region137: #{net_forward.1} parent=79 // pred_check
          %p3983 = pneg %p367
        $region138: #{net_forward.1} parent=79 // pred_check_branch
          %3985 = sbr.rel (%p3983) target = $region140
        $region139: #{net_forward.1} parent=79 // pred_region
          %3987 = vsyncadd %s3980, 0
          %s3988 = scalar_lea.hbm %s15, %s29
          %s3990 = sshll.u32 %s3982, 4
          %s3991 = int_to_ptr.vmem [resolvable:$true] %s3990
          %s3992 = sshll.u32 %s3988, 4
          %s3993 = int_to_ptr.hbm [resolvable:$true] %s3992
          %3995 = dma.vmem_to_hbm [thread:$0]  %s3991, 16, %s3993, %s3980
        $region140: #{net_forward.1} parent=79 // pred_fallthru
          _
      $region80: #{net_forward.1} parent=5 // pred_fallthru
        _
      %p3996 = scmp.le.s32.totalorder 2, %s24
      // Predicated region
      $region141: #{net_forward.1} parent=5 // pred_check
        %p3997 = pneg %p3996
      $region142: #{net_forward.1} parent=5 // pred_check_branch
        %3999 = sbr.rel (%p3997) target = $region144
      $region143: #{net_forward.1} parent=5 // pred_region
        %s4000 = ssub.s32 %s24, 2
        // Predicated region
        $region145: #{net_forward.1} parent=143 // pred_check
          %p4001 = pneg %p373
        $region146: #{net_forward.1} parent=143 // pred_check_branch
          %4003 = sbr.rel (%p4001) target = $region148
        $region147: #{net_forward.1} parent=143 // pred_region
          %s4004 = sand.u32 %s358, 1
          %s4005 = scalar_lea.sflag [#allocation11], %s4004
          %s4006 = sand.u32 %s358, 1
          %s4007 = scalar_lea.vmem [#allocation10], %s4006
          %4009 = dma.done %s4005, 16
        $region148: #{net_forward.1} parent=143 // pred_fallthru
          _
      $region144: #{net_forward.1} parent=5 // pred_fallthru
        _
    $region6: #{net_forward.1} parent=1 // loop_footer
      %s28 = sadd.s32 1, %s24
    $region7: #{net_forward.1} parent=1 // loop_footer_branch
      %23 = sbr.rel target = $region3
    $region8: #{net_forward.1} parent=1 // loop_exit
      _
    %4010 = vsyncpa [#allocation11], 1
    %s4011 = scalar_lea.sflag [#allocation11], 1
    %4012 = vsyncpa %s4011, 1

</llo_original>
